<compile_context>
chip_gen: v7x
topology: tpu7x:2x2x1
jax: 0.10.0
libtpu: 0.0.40
codegen_flags: <defaults>
</compile_context>

<pallas_src>
import functools
from typing import NamedTuple

import numpy as np
import jax
import jax.numpy as jnp
from jax.experimental import pallas as pl
from jax.experimental.pallas import tpu as pltpu


# ---------------------------------------------------------------------------
# Host-side exact linear operators (torch AdaptiveAvgPool2d / bilinear
# interpolate with align_corners=True), built once per (H, W).
# ---------------------------------------------------------------------------
def adaptive_avg_pool_matrix(out_size: int, in_size: int) -> np.ndarray:
    P = np.zeros((out_size, in_size), dtype=np.float64)
    for i in range(out_size):
        start = (i * in_size) // out_size
        end = -((-(i + 1) * in_size) // out_size)  # ceil((i+1)*in/out)
        P[i, start:end] = 1.0 / (end - start)
    return P


def bilinear_upsample_matrix(out_size: int, in_size: int) -> np.ndarray:
    U = np.zeros((out_size, in_size), dtype=np.float64)
    if in_size == 1:
        U[:, 0] = 1.0
        return U
    if out_size == 1:
        U[0, 0] = 1.0
        return U
    scale = (in_size - 1) / (out_size - 1)
    for i in range(out_size):
        src = i * scale
        k0 = min(int(np.floor(src)), in_size - 1)
        k1 = min(k0 + 1, in_size - 1)
        frac = src - k0
        U[i, k0] += 1.0 - frac
        U[i, k1] += frac
    return U


# ---------------------------------------------------------------------------
# Pallas kernel.  grid = (N, C // Ct); the channel axis is a reduction:
#   out^T  = Gx^T @ x                                   (identity branch)
#          + sum_s (G_s^T @ (x @ P_s^T)) @ U_s^T        (pyramid branches)
#          + bias (folded into the stage-0 upsample block)
# ---------------------------------------------------------------------------
def _psp_head_kernel(x_ref, pall_ref, uall_ref, gxt_ref, gst_ref, bias_ref,
                     out_ref, *small_refs, col_splits, compute_dtype):
    # x_ref:    (1, Ct, HW)  current image, current channel chunk (any dtype)
    # pall_ref: (HW, P2)     stacked adaptive-avg-pool operator   (bf16)
    # uall_ref: (P2, HW)     stacked bilinear-upsample operator   (bf16)
    # gxt_ref:  (Kp, Ct)     classifier slice for the identity branch
    # gst_ref:  (S, Kp, Ct)  fused (classifier_slice @ stage_conv) per stage
    # bias_ref: (Kp, b0)     bias column paired with the ones-row of uall
    # out_ref:  (1, Kp, HW)  f32, lane-dense, resident across the channel axis
    # small_refs: S scratches (Kp, b_s) f32 accumulating the fused stage mix
    c = pl.program_id(1)
    num_c = pl.num_programs(1)
    n_stages = len(col_splits) - 1

    x = x_ref[0].astype(compute_dtype)                       # (Ct, HW)

    # ---- per-image init (first channel chunk) -----------------------------
    @pl.when(c == 0)
    def _init():
        small_refs[0][...] = bias_ref[...]                   # bias fold
        for s in range(1, n_stages):
            small_refs[s][...] = jnp.zeros_like(small_refs[s])

    # ---- identity branch: accumulate straight into the output block -------
    ident = jnp.dot(gxt_ref[...], x, preferred_element_type=jnp.float32)

    @pl.when(c == 0)
    def _first():
        out_ref[0] = ident

    @pl.when(c != 0)
    def _accum():
        out_ref[0] += ident

    # ---- pyramid pooling: every bin of every stage in one MXU pass --------
    pooled = jnp.dot(x, pall_ref[...], preferred_element_type=jnp.float32)
    pooled = pooled.astype(compute_dtype)                    # (Ct, P2)

    # ---- fused (1x1 stage conv o classifier slice), summed over chunks ----
    for s in range(n_stages):
        r0, r1 = col_splits[s], col_splits[s + 1]
        small_refs[s][...] += jnp.dot(gst_ref[s], pooled[:, r0:r1],
                                      preferred_element_type=jnp.float32)

    # ---- last chunk: bilinear upsample of every branch into the output ----
    @pl.when(c == num_c - 1)
    def _finish():
        for s in range(n_stages):
            r0, r1 = col_splits[s], col_splits[s + 1]
            out_ref[0] += jnp.dot(small_refs[s][...].astype(compute_dtype),
                                  uall_ref[r0:r1, :],
                                  preferred_element_type=jnp.float32)


class _Cfg(NamedTuple):
    C: int
    Ct: int
    Kp: int
    K: int
    S: int
    P2: int
    col_splits: tuple


def _pick_channel_tile(C: int) -> int:
    # Channel chunks must be a multiple of 128 (lane dim of the weight blocks)
    # or the full channel count.
    if C % 128 == 0:
        for ct in (512, 384, 256, 128):
            if C % ct == 0:
                return ct
    return C


def _vmem_limit_bytes(need: int) -> int:
    try:
        kind = jax.devices()[0].device_kind.lower()
    except Exception:  # pragma: no cover
        kind = ""
    cap = (48 << 20) if ("v7" in kind or "7x" in kind) else (100 << 20)
    return int(min(max(need, 32 << 20), cap))


def _psp_forward(x3, pall, uall, gxt, gst, bias, *, cfg):
    N, C, HW = x3.shape
    Ct, Kp, S, P2 = cfg.Ct, cfg.Kp, cfg.S, cfg.P2
    nC = C // Ct
    cdt = gxt.dtype
    blk = [cfg.col_splits[s + 1] - cfg.col_splits[s] for s in range(S)]

    itm_x = jnp.dtype(x3.dtype).itemsize
    itm_c = jnp.dtype(cdt).itemsize
    need = (2 * Ct * HW * itm_x                 # streamed x blocks
            + 2 * Kp * HW * 4                   # resident/double-buffered out
            + 2 * (Kp * Ct + S * Kp * Ct) * itm_c
            + 2 * (2 * HW * P2) * itm_c + 2 * bias.size * 4
            + sum(Kp * b * 4 for b in blk)      # stage scratches
            + Ct * HW * itm_c + Kp * HW * 4 + Ct * P2 * 4)   # in-kernel temps

    kernel = functools.partial(_psp_head_kernel,
                               col_splits=cfg.col_splits,
                               compute_dtype=cdt)
    out = pl.pallas_call(
        kernel,
        out_shape=jax.ShapeDtypeStruct((N, Kp, HW), jnp.float32),
        grid=(N, nC),
        in_specs=[
            pl.BlockSpec((1, Ct, HW), lambda n, c: (n, c, 0)),      # x chunk
            pl.BlockSpec((HW, P2), lambda n, c: (0, 0)),            # pool op
            pl.BlockSpec((P2, HW), lambda n, c: (0, 0)),            # upsample op
            pl.BlockSpec((Kp, Ct), lambda n, c: (0, c)),            # identity W
            pl.BlockSpec((S, Kp, Ct), lambda n, c: (0, 0, c)),      # stage W
            pl.BlockSpec(bias.shape, lambda n, c: (0, 0)),          # bias col
        ],
        out_specs=pl.BlockSpec((1, Kp, HW), lambda n, c: (n, 0, 0)),
        scratch_shapes=[pltpu.VMEM((Kp, b), jnp.float32) for b in blk],
        compiler_params=pltpu.CompilerParams(
            dimension_semantics=("parallel", "arbitrary"),
            vmem_limit_bytes=_vmem_limit_bytes(need),
        ),
    )(x3, pall, uall, gxt, gst, bias)
    return out[:, :cfg.K, :]                                        # (N, K, HW)


class PSPHeadPallas:
    """PSPHead forward.  Weight fusion is done once; per-(H, W) operators and
    the jitted steady-state path are cached across calls."""

    def __init__(self, stage_weights, fc_w, fc_b, pool_sizes=(1, 2, 3, 6),
                 compute_dtype=jnp.bfloat16):
        fc_w = np.asarray(fc_w, np.float32)                  # (K, 2C)
        fc_b = np.asarray(fc_b, np.float32)                  # (K,)
        self.pool_sizes = tuple(int(p) for p in pool_sizes)
        S = len(self.pool_sizes)
        K, twoC = fc_w.shape
        C = twoC // 2
        if C % S != 0:
            raise ValueError("in_channels must be divisible by len(pool_sizes)")
        OC = C // S
        Kp = ((K + 127) // 128) * 128                        # minimal lane pad

        # Per-stage 8-padded bin blocks; reserve one free row in stage 0's
        # block so it can carry the classifier bias through the upsample.
        blk = [((p * p + 7) // 8) * 8 for p in self.pool_sizes]
        bias_slot = self.pool_sizes[0] ** 2
        if bias_slot >= blk[0]:
            blk[0] += 8
        col_splits = tuple(int(v) for v in np.cumsum([0] + blk))
        P2 = col_splits[-1]

        # Fused classifier weights (concat layout is [x, branch_1..branch_S]):
        #   identity: gxt = fc_w[:, :C];  branch s: gst[s] = F_s @ W_s.
        # NOTE(synk): this fusion is valid only because the stage convs are
        # purely linear (no BN/ReLU), matching the provided PyTorch module.
        gxt = np.zeros((Kp, C), np.float32)
        gxt[:K] = fc_w[:, :C]
        gst = np.zeros((S, Kp, C), np.float32)
        for s in range(S):
            W_s = np.asarray(stage_weights[s], np.float32)   # (OC, C)
            F_s = fc_w[:, C + s * OC: C + (s + 1) * OC]      # (K, OC)
            gst[s, :K] = F_s @ W_s
        bias = np.zeros((Kp, blk[0]), np.float32)
        bias[:K, bias_slot] = fc_b                           # pairs with ones-row

        self._cfg = _Cfg(C=C, Ct=_pick_channel_tile(C), Kp=Kp, K=K, S=S,
                         P2=P2, col_splits=col_splits)
        self._bias_slot = bias_slot
        self.compute_dtype = compute_dtype
        self.gxt = jnp.asarray(gxt, compute_dtype)
        self.gst = jnp.asarray(gst, compute_dtype)
        self.bias = jnp.asarray(bias, jnp.float32)
        self._fwd = jax.jit(functools.partial(_psp_forward, cfg=self._cfg))
        self._op_cache = {}

    def _operators(self, H, W):
        key = (H, W)
        if key not in self._op_cache:
            cfg = self._cfg
            HW = H * W
            pallT = np.zeros((HW, cfg.P2), np.float64)       # pooling, (HW, P2)
            uall = np.zeros((cfg.P2, HW), np.float64)        # upsample, (P2, HW)
            for s, p in enumerate(self.pool_sizes):
                Ph = adaptive_avg_pool_matrix(p, H)
                Pw = adaptive_avg_pool_matrix(p, W)
                Uh = bilinear_upsample_matrix(H, p)
                Uw = bilinear_upsample_matrix(W, p)
                r0 = cfg.col_splits[s]
                pallT[:, r0:r0 + p * p] = np.kron(Ph, Pw).T
                uall[r0:r0 + p * p, :] = np.kron(Uh, Uw).T
            # Bias carrier: an all-ones row in stage-0's zero padding.
            uall[cfg.col_splits[0] + self._bias_slot, :] = 1.0
            self._op_cache[key] = (jnp.asarray(pallT, self.compute_dtype),
                                   jnp.asarray(uall, self.compute_dtype))
        return self._op_cache[key]

    def __call__(self, x_nchw):
        N, C, H, W = x_nchw.shape
        if C != self._cfg.C:
            raise ValueError("channel count does not match the fused weights")
        pall, uall = self._operators(H, W)
        x3 = x_nchw.reshape(N, C, H * W)                     # free: no transpose
        out = self._fwd(x3, pall, uall, self.gxt, self.gst, self.bias)
        return out.reshape(N, self._cfg.K, H, W)


# ---------------------------------------------------------------------------
# Pure-JAX f32 reference (literal translation of the PyTorch module).
# ---------------------------------------------------------------------------
def psp_head_reference(x, stage_weights, fc_w, fc_b, pool_sizes=(1, 2, 3, 6)):
    N, C, H, W = x.shape
    pyramids = [x]
    for p, w in zip(pool_sizes, stage_weights):
        Ph = jnp.asarray(adaptive_avg_pool_matrix(p, H), jnp.float32)
        Pw = jnp.asarray(adaptive_avg_pool_matrix(p, W), jnp.float32)
        Uh = jnp.asarray(bilinear_upsample_matrix(H, p), jnp.float32)
        Uw = jnp.asarray(bilinear_upsample_matrix(W, p), jnp.float32)
        pooled = jnp.einsum('ih,nchw,jw->ncij', Ph, x, Pw)
        y = jnp.einsum('oc,ncij->noij', w, pooled)
        up = jnp.einsum('hi,noij,wj->nohw', Uh, y, Uw)
        pyramids.append(up)
    cat = jnp.concatenate(pyramids, axis=1)
    out = jnp.einsum('kc,nchw->nkhw', fc_w, cat) + fc_b.reshape(1, -1, 1, 1)
    return out


if __name__ == "__main__":
    key = jax.random.PRNGKey(0)
    N, C, H, W = 2, 16, 16, 16
    pool_sizes = (1, 2, 3, 6)
    num_classes = 5
    S = len(pool_sizes)
    OC = C // S

    keys = jax.random.split(key, 3 + S)
    x = jax.random.normal(keys[0], (N, C, H, W), jnp.float32)
    stage_weights = [
        0.1 * jax.random.normal(keys[1 + i], (OC, C), jnp.float32)
        for i in range(S)
    ]
    fc_w = 0.1 * jax.random.normal(keys[-2], (num_classes, 2 * C), jnp.float32)
    fc_b = 0.01 * jax.random.normal(keys[-1], (num_classes,), jnp.float32)

    head = PSPHeadPallas(stage_weights, fc_w, fc_b, pool_sizes)
    out = head(x)
    out = jax.block_until_ready(out)

    ref = psp_head_reference(x, stage_weights, fc_w, fc_b, pool_sizes)
    assert out.shape == (N, num_classes, H, W)
    # bf16 MXU inputs with f32 accumulation -> tolerance loosened vs f32 ref.
    max_err = float(jnp.max(jnp.abs(out - ref)))
    assert jnp.allclose(out, ref, atol=3e-2, rtol=3e-2), max_err
    print("KERNEL_OK")
</pallas_src>

<mosaic_0001>
module attributes {stable_mosaic.version = 11 : i64} {
  func.func @_psp_head_kernel(%arg0: i32, %arg1: i32, %arg2: memref<1x16x256xf32, #tpu.memory_space<vmem>>, %arg3: memref<256x72xbf16, #tpu.memory_space<vmem>>, %arg4: memref<72x256xbf16, #tpu.memory_space<vmem>>, %arg5: memref<128x16xbf16, #tpu.memory_space<vmem>>, %arg6: memref<4x128x16xbf16, #tpu.memory_space<vmem>>, %arg7: memref<128x8xf32, #tpu.memory_space<vmem>>, %arg8: memref<1x128x256xf32, #tpu.memory_space<vmem>>, %arg9: memref<128x8xf32, #tpu.memory_space<vmem>>, %arg10: memref<128x8xf32, #tpu.memory_space<vmem>>, %arg11: memref<128x16xf32, #tpu.memory_space<vmem>>, %arg12: memref<128x40xf32, #tpu.memory_space<vmem>>) attributes {dimension_semantics = [#tpu.dimension_semantics<parallel>, #tpu.dimension_semantics<arbitrary>], iteration_bounds = array<i64: 2, 1>, scalar_prefetch = 0 : i64, scratch_operands = 4 : i64, tpu.core_type = #tpu.core_type<tc>, window_params = [{transform_indices = @transform_0, window_bounds = array<i64: 1, 16, 256>}, {pipeline_mode = #tpu.pipeline_mode<synchronous>, transform_indices = @transform_1, window_bounds = array<i64: 256, 72>}, {pipeline_mode = #tpu.pipeline_mode<synchronous>, transform_indices = @transform_2, window_bounds = array<i64: 72, 256>}, {transform_indices = @transform_3, window_bounds = array<i64: 128, 16>}, {transform_indices = @transform_4, window_bounds = array<i64: 4, 128, 16>}, {pipeline_mode = #tpu.pipeline_mode<synchronous>, transform_indices = @transform_5, window_bounds = array<i64: 128, 8>}, {transform_indices = @transform_6, window_bounds = array<i64: 1, 128, 256>}]} {
    %c0 = arith.constant 0 : index
    %c0_0 = arith.constant 0 : index
    %c0_1 = arith.constant 0 : index
    %0 = vector.load %arg2[%c0, %c0_0, %c0_1] : memref<1x16x256xf32, #tpu.memory_space<vmem>>, vector<1x16x256xf32>
    %1 = vector.shape_cast %0 : vector<1x16x256xf32> to vector<16x256xf32>
    %2 = arith.truncf %1 : vector<16x256xf32> to vector<16x256xbf16>
    %c0_i32 = arith.constant 0 : i32
    %3 = arith.cmpi eq, %arg1, %c0_i32 : i32
    %4 = arith.extui %3 : i1 to i32
    %c0_i32_2 = arith.constant 0 : i32
    %5 = arith.cmpi ne, %4, %c0_i32_2 : i32
    scf.if %5 {
      %c0_43 = arith.constant 0 : index
      %c0_44 = arith.constant 0 : index
      %48 = vector.load %arg7[%c0_43, %c0_44] : memref<128x8xf32, #tpu.memory_space<vmem>>, vector<128x8xf32>
      %c0_45 = arith.constant 0 : index
      %c0_46 = arith.constant 0 : index
      %49 = vector.load %arg9[%c0_45, %c0_46] : memref<128x8xf32, #tpu.memory_space<vmem>>, vector<128x8xf32>
      tpu.vector_store %arg9[%c0_45, %c0_46], %48 {strides = array<i32>} : memref<128x8xf32, #tpu.memory_space<vmem>>, vector<128x8xf32>,
      %cst_47 = arith.constant 0.000000e+00 : f32
      %50 = vector.broadcast %cst_47 : f32 to vector<128x8xf32>
      %c0_48 = arith.constant 0 : index
      %c0_49 = arith.constant 0 : index
      %51 = vector.load %arg10[%c0_48, %c0_49] : memref<128x8xf32, #tpu.memory_space<vmem>>, vector<128x8xf32>
      tpu.vector_store %arg10[%c0_48, %c0_49], %50 {strides = array<i32>} : memref<128x8xf32, #tpu.memory_space<vmem>>, vector<128x8xf32>,
      %cst_50 = arith.constant 0.000000e+00 : f32
      %52 = vector.broadcast %cst_50 : f32 to vector<128x16xf32>
      %c0_51 = arith.constant 0 : index
      %c0_52 = arith.constant 0 : index
      %53 = vector.load %arg11[%c0_51, %c0_52] : memref<128x16xf32, #tpu.memory_space<vmem>>, vector<128x16xf32>
      tpu.vector_store %arg11[%c0_51, %c0_52], %52 {strides = array<i32>} : memref<128x16xf32, #tpu.memory_space<vmem>>, vector<128x16xf32>,
      %cst_53 = arith.constant 0.000000e+00 : f32
      %54 = vector.broadcast %cst_53 : f32 to vector<128x40xf32>
      %c0_54 = arith.constant 0 : index
      %c0_55 = arith.constant 0 : index
      %55 = vector.load %arg12[%c0_54, %c0_55] : memref<128x40xf32, #tpu.memory_space<vmem>>, vector<128x40xf32>
      tpu.vector_store %arg12[%c0_54, %c0_55], %54 {strides = array<i32>} : memref<128x40xf32, #tpu.memory_space<vmem>>, vector<128x40xf32>,
    } else {
    }
    %c0_3 = arith.constant 0 : index
    %c0_4 = arith.constant 0 : index
    %6 = vector.load %arg5[%c0_3, %c0_4] : memref<128x16xbf16, #tpu.memory_space<vmem>>, vector<128x16xbf16>
    %cst = arith.constant dense<0.000000e+00> : vector<128x256xf32>
    %7 = tpu.matmul %6, %2, %cst {dimension_numbers = #tpu.dot_dimension_numbers<[1], [0], [0], [1], [0, 0, 1, 1], [], []>} : vector<128x16xbf16>, vector<16x256xbf16>, vector<128x256xf32> -> vector<128x256xf32>
    %c0_i32_5 = arith.constant 0 : i32
    %8 = arith.cmpi eq, %arg1, %c0_i32_5 : i32
    %9 = arith.extui %8 : i1 to i32
    %c0_i32_6 = arith.constant 0 : i32
    %10 = arith.cmpi ne, %9, %c0_i32_6 : i32
    scf.if %10 {
      %c0_43 = arith.constant 0 : index
      %c0_44 = arith.constant 0 : index
      %c0_45 = arith.constant 0 : index
      %48 = vector.load %arg8[%c0_43, %c0_44, %c0_45] : memref<1x128x256xf32, #tpu.memory_space<vmem>>, vector<1x128x256xf32>
      %49 = vector.shape_cast %48 : vector<1x128x256xf32> to vector<128x256xf32>
      %50 = vector.shape_cast %7 : vector<128x256xf32> to vector<1x128x256xf32>
      tpu.vector_store %arg8[%c0_43, %c0_44, %c0_45], %50 {strides = array<i32>} : memref<1x128x256xf32, #tpu.memory_space<vmem>>, vector<1x128x256xf32>,
    } else {
    }
    %c0_i32_7 = arith.constant 0 : i32
    %11 = arith.cmpi ne, %arg1, %c0_i32_7 : i32
    %12 = arith.extui %11 : i1 to i32
    %c0_i32_8 = arith.constant 0 : i32
    %13 = arith.cmpi ne, %12, %c0_i32_8 : i32
    scf.if %13 {
      %c0_43 = arith.constant 0 : index
      %c0_44 = arith.constant 0 : index
      %c0_45 = arith.constant 0 : index
      %48 = vector.load %arg8[%c0_43, %c0_44, %c0_45] : memref<1x128x256xf32, #tpu.memory_space<vmem>>, vector<1x128x256xf32>
      %49 = vector.shape_cast %48 : vector<1x128x256xf32> to vector<128x256xf32>
      %50 = arith.addf %49, %7 : vector<128x256xf32>
      %c0_46 = arith.constant 0 : index
      %c0_47 = arith.constant 0 : index
      %c0_48 = arith.constant 0 : index
      %51 = vector.load %arg8[%c0_46, %c0_47, %c0_48] : memref<1x128x256xf32, #tpu.memory_space<vmem>>, vector<1x128x256xf32>
      %52 = vector.shape_cast %51 : vector<1x128x256xf32> to vector<128x256xf32>
      %53 = vector.shape_cast %50 : vector<128x256xf32> to vector<1x128x256xf32>
      tpu.vector_store %arg8[%c0_46, %c0_47, %c0_48], %53 {strides = array<i32>} : memref<1x128x256xf32, #tpu.memory_space<vmem>>, vector<1x128x256xf32>,
    } else {
    }
    %c0_9 = arith.constant 0 : index
    %c0_10 = arith.constant 0 : index
    %14 = vector.load %arg3[%c0_9, %c0_10] : memref<256x72xbf16, #tpu.memory_space<vmem>>, vector<256x72xbf16>
    %cst_11 = arith.constant dense<0.000000e+00> : vector<16x72xf32>
    %15 = tpu.matmul %2, %14, %cst_11 {dimension_numbers = #tpu.dot_dimension_numbers<[1], [0], [0], [1], [0, 0, 1, 1], [], []>} : vector<16x256xbf16>, vector<256x72xbf16>, vector<16x72xf32> -> vector<16x72xf32>
    %16 = arith.truncf %15 : vector<16x72xf32> to vector<16x72xbf16>
    %c0_12 = arith.constant 0 : index
    %c0_13 = arith.constant 0 : index
    %17 = vector.load %arg9[%c0_12, %c0_13] : memref<128x8xf32, #tpu.memory_space<vmem>>, vector<128x8xf32>
    %c0_14 = arith.constant 0 : index
    %c0_15 = arith.constant 0 : index
    %c0_16 = arith.constant 0 : index
    %18 = vector.load %arg6[%c0_14, %c0_15, %c0_16] : memref<4x128x16xbf16, #tpu.memory_space<vmem>>, vector<1x128x16xbf16>
    %19 = vector.shape_cast %18 : vector<1x128x16xbf16> to vector<128x16xbf16>
    %20 = vector.extract_strided_slice %16 {offsets = [0, 0], sizes = [16, 8], strides = [1, 1]} : vector<16x72xbf16> to vector<16x8xbf16>
    %cst_17 = arith.constant dense<0.000000e+00> : vector<128x8xf32>
    %21 = tpu.matmul %19, %20, %cst_17 {dimension_numbers = #tpu.dot_dimension_numbers<[1], [0], [0], [1], [0, 0, 1, 1], [], []>} : vector<128x16xbf16>, vector<16x8xbf16>, vector<128x8xf32> -> vector<128x8xf32>
    %22 = arith.addf %17, %21 : vector<128x8xf32>
    %c0_18 = arith.constant 0 : index
    %c0_19 = arith.constant 0 : index
    %23 = vector.load %arg9[%c0_18, %c0_19] : memref<128x8xf32, #tpu.memory_space<vmem>>, vector<128x8xf32>
    tpu.vector_store %arg9[%c0_18, %c0_19], %22 {strides = array<i32>} : memref<128x8xf32, #tpu.memory_space<vmem>>, vector<128x8xf32>,
    %c0_20 = arith.constant 0 : index
    %c0_21 = arith.constant 0 : index
    %24 = vector.load %arg10[%c0_20, %c0_21] : memref<128x8xf32, #tpu.memory_space<vmem>>, vector<128x8xf32>
    %c1 = arith.constant 1 : index
    %c0_22 = arith.constant 0 : index
    %c0_23 = arith.constant 0 : index
    %25 = vector.load %arg6[%c1, %c0_22, %c0_23] : memref<4x128x16xbf16, #tpu.memory_space<vmem>>, vector<1x128x16xbf16>
    %26 = vector.shape_cast %25 : vector<1x128x16xbf16> to vector<128x16xbf16>
    %27 = vector.extract_strided_slice %16 {offsets = [0, 8], sizes = [16, 8], strides = [1, 1]} : vector<16x72xbf16> to vector<16x8xbf16>
    %cst_24 = arith.constant dense<0.000000e+00> : vector<128x8xf32>
    %28 = tpu.matmul %26, %27, %cst_24 {dimension_numbers = #tpu.dot_dimension_numbers<[1], [0], [0], [1], [0, 0, 1, 1], [], []>} : vector<128x16xbf16>, vector<16x8xbf16>, vector<128x8xf32> -> vector<128x8xf32>
    %29 = arith.addf %24, %28 : vector<128x8xf32>
    %c0_25 = arith.constant 0 : index
    %c0_26 = arith.constant 0 : index
    %30 = vector.load %arg10[%c0_25, %c0_26] : memref<128x8xf32, #tpu.memory_space<vmem>>, vector<128x8xf32>
    tpu.vector_store %arg10[%c0_25, %c0_26], %29 {strides = array<i32>} : memref<128x8xf32, #tpu.memory_space<vmem>>, vector<128x8xf32>,
    %c0_27 = arith.constant 0 : index
    %c0_28 = arith.constant 0 : index
    %31 = vector.load %arg11[%c0_27, %c0_28] : memref<128x16xf32, #tpu.memory_space<vmem>>, vector<128x16xf32>
    %c2 = arith.constant 2 : index
    %c0_29 = arith.constant 0 : index
    %c0_30 = arith.constant 0 : index
    %32 = vector.load %arg6[%c2, %c0_29, %c0_30] : memref<4x128x16xbf16, #tpu.memory_space<vmem>>, vector<1x128x16xbf16>
    %33 = vector.shape_cast %32 : vector<1x128x16xbf16> to vector<128x16xbf16>
    %34 = vector.extract_strided_slice %16 {offsets = [0, 16], sizes = [16, 16], strides = [1, 1]} : vector<16x72xbf16> to vector<16x16xbf16>
    %cst_31 = arith.constant dense<0.000000e+00> : vector<128x16xf32>
    %35 = tpu.matmul %33, %34, %cst_31 {dimension_numbers = #tpu.dot_dimension_numbers<[1], [0], [0], [1], [0, 0, 1, 1], [], []>} : vector<128x16xbf16>, vector<16x16xbf16>, vector<128x16xf32> -> vector<128x16xf32>
    %36 = arith.addf %31, %35 : vector<128x16xf32>
    %c0_32 = arith.constant 0 : index
    %c0_33 = arith.constant 0 : index
    %37 = vector.load %arg11[%c0_32, %c0_33] : memref<128x16xf32, #tpu.memory_space<vmem>>, vector<128x16xf32>
    tpu.vector_store %arg11[%c0_32, %c0_33], %36 {strides = array<i32>} : memref<128x16xf32, #tpu.memory_space<vmem>>, vector<128x16xf32>,
    %c0_34 = arith.constant 0 : index
    %c0_35 = arith.constant 0 : index
    %38 = vector.load %arg12[%c0_34, %c0_35] : memref<128x40xf32, #tpu.memory_space<vmem>>, vector<128x40xf32>
    %c3 = arith.constant 3 : index
    %c0_36 = arith.constant 0 : index
    %c0_37 = arith.constant 0 : index
    %39 = vector.load %arg6[%c3, %c0_36, %c0_37] : memref<4x128x16xbf16, #tpu.memory_space<vmem>>, vector<1x128x16xbf16>
    %40 = vector.shape_cast %39 : vector<1x128x16xbf16> to vector<128x16xbf16>
    %41 = vector.extract_strided_slice %16 {offsets = [0, 32], sizes = [16, 40], strides = [1, 1]} : vector<16x72xbf16> to vector<16x40xbf16>
    %cst_38 = arith.constant dense<0.000000e+00> : vector<128x40xf32>
    %42 = tpu.matmul %40, %41, %cst_38 {dimension_numbers = #tpu.dot_dimension_numbers<[1], [0], [0], [1], [0, 0, 1, 1], [], []>} : vector<128x16xbf16>, vector<16x40xbf16>, vector<128x40xf32> -> vector<128x40xf32>
    %43 = arith.addf %38, %42 : vector<128x40xf32>
    %c0_39 = arith.constant 0 : index
    %c0_40 = arith.constant 0 : index
    %44 = vector.load %arg12[%c0_39, %c0_40] : memref<128x40xf32, #tpu.memory_space<vmem>>, vector<128x40xf32>
    tpu.vector_store %arg12[%c0_39, %c0_40], %43 {strides = array<i32>} : memref<128x40xf32, #tpu.memory_space<vmem>>, vector<128x40xf32>,
    %c0_i32_41 = arith.constant 0 : i32
    %45 = arith.cmpi eq, %arg1, %c0_i32_41 : i32
    %46 = arith.extui %45 : i1 to i32
    %c0_i32_42 = arith.constant 0 : i32
    %47 = arith.cmpi ne, %46, %c0_i32_42 : i32
    scf.if %47 {
      %c0_43 = arith.constant 0 : index
      %c0_44 = arith.constant 0 : index
      %c0_45 = arith.constant 0 : index
      %48 = vector.load %arg8[%c0_43, %c0_44, %c0_45] : memref<1x128x256xf32, #tpu.memory_space<vmem>>, vector<1x128x256xf32>
      %49 = vector.shape_cast %48 : vector<1x128x256xf32> to vector<128x256xf32>
      %c0_46 = arith.constant 0 : index
      %c0_47 = arith.constant 0 : index
      %50 = vector.load %arg9[%c0_46, %c0_47] : memref<128x8xf32, #tpu.memory_space<vmem>>, vector<128x8xf32>
      %51 = arith.truncf %50 : vector<128x8xf32> to vector<128x8xbf16>
      %c0_48 = arith.constant 0 : index
      %c0_49 = arith.constant 0 : index
      %52 = vector.load %arg4[%c0_48, %c0_49] : memref<72x256xbf16, #tpu.memory_space<vmem>>, vector<8x256xbf16>
      %cst_50 = arith.constant dense<0.000000e+00> : vector<128x256xf32>
      %53 = tpu.matmul %51, %52, %cst_50 {dimension_numbers = #tpu.dot_dimension_numbers<[1], [0], [0], [1], [0, 0, 1, 1], [], []>} : vector<128x8xbf16>, vector<8x256xbf16>, vector<128x256xf32> -> vector<128x256xf32>
      %54 = arith.addf %49, %53 : vector<128x256xf32>
      %c0_51 = arith.constant 0 : index
      %c0_52 = arith.constant 0 : index
      %c0_53 = arith.constant 0 : index
      %55 = vector.load %arg8[%c0_51, %c0_52, %c0_53] : memref<1x128x256xf32, #tpu.memory_space<vmem>>, vector<1x128x256xf32>
      %56 = vector.shape_cast %55 : vector<1x128x256xf32> to vector<128x256xf32>
      %57 = vector.shape_cast %54 : vector<128x256xf32> to vector<1x128x256xf32>
      tpu.vector_store %arg8[%c0_51, %c0_52, %c0_53], %57 {strides = array<i32>} : memref<1x128x256xf32, #tpu.memory_space<vmem>>, vector<1x128x256xf32>,
      %c0_54 = arith.constant 0 : index
      %c0_55 = arith.constant 0 : index
      %c0_56 = arith.constant 0 : index
      %58 = vector.load %arg8[%c0_54, %c0_55, %c0_56] : memref<1x128x256xf32, #tpu.memory_space<vmem>>, vector<1x128x256xf32>
      %59 = vector.shape_cast %58 : vector<1x128x256xf32> to vector<128x256xf32>
      %c0_57 = arith.constant 0 : index
      %c0_58 = arith.constant 0 : index
      %60 = vector.load %arg10[%c0_57, %c0_58] : memref<128x8xf32, #tpu.memory_space<vmem>>, vector<128x8xf32>
      %61 = arith.truncf %60 : vector<128x8xf32> to vector<128x8xbf16>
      %c8 = arith.constant 8 : index
      %c0_59 = arith.constant 0 : index
      %62 = vector.load %arg4[%c8, %c0_59] : memref<72x256xbf16, #tpu.memory_space<vmem>>, vector<8x256xbf16>
      %cst_60 = arith.constant dense<0.000000e+00> : vector<128x256xf32>
      %63 = tpu.matmul %61, %62, %cst_60 {dimension_numbers = #tpu.dot_dimension_numbers<[1], [0], [0], [1], [0, 0, 1, 1], [], []>} : vector<128x8xbf16>, vector<8x256xbf16>, vector<128x256xf32> -> vector<128x256xf32>
      %64 = arith.addf %59, %63 : vector<128x256xf32>
      %c0_61 = arith.constant 0 : index
      %c0_62 = arith.constant 0 : index
      %c0_63 = arith.constant 0 : index
      %65 = vector.load %arg8[%c0_61, %c0_62, %c0_63] : memref<1x128x256xf32, #tpu.memory_space<vmem>>, vector<1x128x256xf32>
      %66 = vector.shape_cast %65 : vector<1x128x256xf32> to vector<128x256xf32>
      %67 = vector.shape_cast %64 : vector<128x256xf32> to vector<1x128x256xf32>
      tpu.vector_store %arg8[%c0_61, %c0_62, %c0_63], %67 {strides = array<i32>} : memref<1x128x256xf32, #tpu.memory_space<vmem>>, vector<1x128x256xf32>,
      %c0_64 = arith.constant 0 : index
      %c0_65 = arith.constant 0 : index
      %c0_66 = arith.constant 0 : index
      %68 = vector.load %arg8[%c0_64, %c0_65, %c0_66] : memref<1x128x256xf32, #tpu.memory_space<vmem>>, vector<1x128x256xf32>
      %69 = vector.shape_cast %68 : vector<1x128x256xf32> to vector<128x256xf32>
      %c0_67 = arith.constant 0 : index
      %c0_68 = arith.constant 0 : index
      %70 = vector.load %arg11[%c0_67, %c0_68] : memref<128x16xf32, #tpu.memory_space<vmem>>, vector<128x16xf32>
      %71 = arith.truncf %70 : vector<128x16xf32> to vector<128x16xbf16>
      %c16 = arith.constant 16 : index
      %c0_69 = arith.constant 0 : index
      %72 = vector.load %arg4[%c16, %c0_69] : memref<72x256xbf16, #tpu.memory_space<vmem>>, vector<16x256xbf16>
      %cst_70 = arith.constant dense<0.000000e+00> : vector<128x256xf32>
      %73 = tpu.matmul %71, %72, %cst_70 {dimension_numbers = #tpu.dot_dimension_numbers<[1], [0], [0], [1], [0, 0, 1, 1], [], []>} : vector<128x16xbf16>, vector<16x256xbf16>, vector<128x256xf32> -> vector<128x256xf32>
      %74 = arith.addf %69, %73 : vector<128x256xf32>
      %c0_71 = arith.constant 0 : index
      %c0_72 = arith.constant 0 : index
      %c0_73 = arith.constant 0 : index
      %75 = vector.load %arg8[%c0_71, %c0_72, %c0_73] : memref<1x128x256xf32, #tpu.memory_space<vmem>>, vector<1x128x256xf32>
      %76 = vector.shape_cast %75 : vector<1x128x256xf32> to vector<128x256xf32>
      %77 = vector.shape_cast %74 : vector<128x256xf32> to vector<1x128x256xf32>
      tpu.vector_store %arg8[%c0_71, %c0_72, %c0_73], %77 {strides = array<i32>} : memref<1x128x256xf32, #tpu.memory_space<vmem>>, vector<1x128x256xf32>,
      %c0_74 = arith.constant 0 : index
      %c0_75 = arith.constant 0 : index
      %c0_76 = arith.constant 0 : index
      %78 = vector.load %arg8[%c0_74, %c0_75, %c0_76] : memref<1x128x256xf32, #tpu.memory_space<vmem>>, vector<1x128x256xf32>
      %79 = vector.shape_cast %78 : vector<1x128x256xf32> to vector<128x256xf32>
      %c0_77 = arith.constant 0 : index
      %c0_78 = arith.constant 0 : index
      %80 = vector.load %arg12[%c0_77, %c0_78] : memref<128x40xf32, #tpu.memory_space<vmem>>, vector<128x40xf32>
      %81 = arith.truncf %80 : vector<128x40xf32> to vector<128x40xbf16>
      %c32 = arith.constant 32 : index
      %c0_79 = arith.constant 0 : index
      %82 = vector.load %arg4[%c32, %c0_79] : memref<72x256xbf16, #tpu.memory_space<vmem>>, vector<40x256xbf16>
      %cst_80 = arith.constant dense<0.000000e+00> : vector<128x256xf32>
      %83 = tpu.matmul %81, %82, %cst_80 {dimension_numbers = #tpu.dot_dimension_numbers<[1], [0], [0], [1], [0, 0, 1, 1], [], []>} : vector<128x40xbf16>, vector<40x256xbf16>, vector<128x256xf32> -> vector<128x256xf32>
      %84 = arith.addf %79, %83 : vector<128x256xf32>
      %c0_81 = arith.constant 0 : index
      %c0_82 = arith.constant 0 : index
      %c0_83 = arith.constant 0 : index
      %85 = vector.load %arg8[%c0_81, %c0_82, %c0_83] : memref<1x128x256xf32, #tpu.memory_space<vmem>>, vector<1x128x256xf32>
      %86 = vector.shape_cast %85 : vector<1x128x256xf32> to vector<128x256xf32>
      %87 = vector.shape_cast %84 : vector<128x256xf32> to vector<1x128x256xf32>
      tpu.vector_store %arg8[%c0_81, %c0_82, %c0_83], %87 {strides = array<i32>} : memref<1x128x256xf32, #tpu.memory_space<vmem>>, vector<1x128x256xf32>,
    } else {
    }
    return
  }
  func.func @transform_0(%arg0: i32, %arg1: i32) -> (i32, i32, i32) {
    %c0_i32 = arith.constant 0 : i32
    %c0_i32_0 = arith.constant 0 : i32
    return %arg0, %arg1, %c0_i32 : i32, i32, i32
  }
  func.func @transform_1(%arg0: i32, %arg1: i32) -> (i32, i32) {
    %c0_i32 = arith.constant 0 : i32
    %c0_i32_0 = arith.constant 0 : i32
    %c0_i32_1 = arith.constant 0 : i32
    return %c0_i32, %c0_i32_0 : i32, i32
  }
  func.func @transform_2(%arg0: i32, %arg1: i32) -> (i32, i32) {
    %c0_i32 = arith.constant 0 : i32
    %c0_i32_0 = arith.constant 0 : i32
    %c0_i32_1 = arith.constant 0 : i32
    return %c0_i32, %c0_i32_0 : i32, i32
  }
  func.func @transform_3(%arg0: i32, %arg1: i32) -> (i32, i32) {
    %c0_i32 = arith.constant 0 : i32
    %c0_i32_0 = arith.constant 0 : i32
    return %c0_i32, %arg1 : i32, i32
  }
  func.func @transform_4(%arg0: i32, %arg1: i32) -> (i32, i32, i32) {
    %c0_i32 = arith.constant 0 : i32
    %c0_i32_0 = arith.constant 0 : i32
    %c0_i32_1 = arith.constant 0 : i32
    return %c0_i32, %c0_i32_0, %arg1 : i32, i32, i32
  }
  func.func @transform_5(%arg0: i32, %arg1: i32) -> (i32, i32) {
    %c0_i32 = arith.constant 0 : i32
    %c0_i32_0 = arith.constant 0 : i32
    %c0_i32_1 = arith.constant 0 : i32
    return %c0_i32, %c0_i32_0 : i32, i32
  }
  func.func @transform_6(%arg0: i32, %arg1: i32) -> (i32, i32, i32) {
    %c0_i32 = arith.constant 0 : i32
    %c0_i32_0 = arith.constant 0 : i32
    %c0_i32_1 = arith.constant 0 : i32
    return %arg0, %c0_i32, %c0_i32_0 : i32, i32, i32
  }
}

</mosaic_0001>

<llo_original>
// kernel: _psp_forward.1
$region0: #{_psp_forward.1}
  #allocation0 [shape = 'u32[]', space=smem, size = 0x4, offset = 0x4, fixed_abs, tag = 'smem constant byte address 0x4 - core index']
  #allocation1 [shape = 'u32[144,128]{1,0:T(1,128)}', space=vmem, size = 0x12000, scoped, tag = 'internal scratch']
  #allocation2 [shape = 'f32[128,8]{1,0:T(8,128)}', space=vmem, size = 0x10000, scoped, tag = 'scratch operand']
  #allocation3 [shape = 'f32[128,8]{1,0:T(8,128)}', space=vmem, size = 0x10000, scoped, tag = 'scratch operand']
  #allocation4 [shape = 'f32[128,16]{1,0:T(8,128)}', space=vmem, size = 0x10000, scoped, tag = 'scratch operand']
  #allocation5 [shape = 'f32[128,40]{1,0:T(8,128)}', space=vmem, size = 0x10000, scoped, tag = 'scratch operand']
  %s0 = inlined_call_operand.vmem [shape: f32[2,16,256], index: 0, kind: input, shape index: {}]
  %s1 = inlined_call_operand.vmem [shape: bf16[256,72], index: 1, kind: input, shape index: {}]
  %s2 = inlined_call_operand.vmem [shape: bf16[72,256], index: 2, kind: input, shape index: {}]
  %s3 = inlined_call_operand.vmem [shape: bf16[128,16], index: 3, kind: input, shape index: {}]
  %s4 = inlined_call_operand.vmem [shape: bf16[4,128,16], index: 4, kind: input, shape index: {}]
  %s5 = inlined_call_operand.vmem [shape: f32[128,8], index: 5, kind: input, shape index: {}]
  %s6 = inlined_call_operand.vmem [shape: f32[2,128,256], index: 6, kind: output, shape index: {}]
  %s7 = sld [smem:[#allocation0]]
  $region73: #{_psp_forward.1} parent=0
    _
  %s9 = ssub.s32 1, %s7
  %s10 = scalar_select 0, %s9, %s7
  loop: start=0, step=1, limit=4
  $region2: #{_psp_forward.1} parent=0 // loop_pre_header
    _
  $region3: #{_psp_forward.1} parent=0 // loop_header
    %s12 = sphi 0, %s16
    %p13 = scmp.ge.s32.totalorder %s12, 4
    %s19 = sphi 0, %s31
    %s20 = sphi 0, %s27
    %s21 = sphi 0, %s19
    %s22 = sphi 0, %s20
    %s23 = sphi 0, %s21
    %s24 = sphi 0, %s22
    %s36 = sphi 0, %s38
    %s39 = sphi 0, %s36
    %s40 = sphi 0, %s39
    %s56 = sphi 0, %s40
    %s60 = sphi 0, %s60
    %s62 = sphi 0, %s60
    %s63 = sphi 0, %s62
    %s77 = sphi 0, %s63
    %s81 = sphi 0, %s81
    %s83 = sphi 0, %s81
    %s84 = sphi 0, %s83
    %s98 = sphi 0, %s84
    %s104 = sphi 0, %s106
    %s107 = sphi 0, %s104
    %s108 = sphi 0, %s107
    %s124 = sphi 0, %s108
    %s130 = sphi 0, %s132
    %s133 = sphi 0, %s130
    %s134 = sphi 0, %s133
    %s150 = sphi 0, %s134
    %s154 = sphi 0, %s154
    %s156 = sphi 0, %s154
    %s157 = sphi 0, %s156
    %s171 = sphi 0, %s157
    %s177 = sphi 0, %s179
    %s180 = sphi 0, %s177
    %s181 = sphi 0, %s180
    %s197 = sphi 0, %s181
  $region4: #{_psp_forward.1} parent=0 // loop_header_branch
    %15 = sbr.rel (%p13) target = $region8
  $region5: #{_psp_forward.1} parent=0 // loop_body
    %s17 = ssub.s32 %s12, 1
    %s18 = ssub.s32 %s12, 2
    %s25 = sadd.s32 1, %s20
    %p26 = scmp.ge.s32.totalorder %s25, 1
    %s27 = scalar_select %p26, 0, %s25
    %s28 = sadd.s32 1, %s19
    %s29 = scalar_select %p26, %s28, %s19
    %p30 = scmp.ge.s32.totalorder %s29, 2
    %s31 = scalar_select %p30, 0, %s29
    %s32 = ssub.s32 %s19, %s31
    %s33 = ssub.s32 %s20, %s27
    %s34 = sor.u32 %s32, %s33
    %p35 = scmp.eq.s32.totalorder %s34, 0
    %s37 = sadd.s32 %s36, 1
    %s38 = scalar_select %p35, %s36, %s37
    %p41 = pneg %p35
    %p42 = scmp.eq.s32.totalorder %s12, 1
    %p43 = por %p41, %p42
    %p44 = scmp.ne.s32.totalorder %s36, %s39
    %p45 = scmp.eq.s32.totalorder %s12, 0
    %p46 = por %p44, %p45
    %p47 = scmp.ne.s32.totalorder %s36, %s39
    %p48 = scmp.eq.s32.totalorder %s17, 1
    %p49 = por %p47, %p48
    %p50 = scmp.ne.s32.totalorder %s39, %s40
    %p51 = scmp.eq.s32.totalorder %s17, 0
    %p52 = por %p50, %p51
    %p53 = scmp.ne.s32.totalorder %s39, %s40
    %p54 = scmp.eq.s32.totalorder %s18, 1
    %p55 = por %p53, %p54
    %p57 = scmp.ne.s32.totalorder %s40, %s56
    %p58 = scmp.eq.s32.totalorder %s18, 0
    %p59 = por %p57, %p58
    %s61 = sadd.s32 %s60, 1
    %p64 = scmp.eq.s32.totalorder %s12, 1
    %p65 = scmp.ne.s32.totalorder %s60, %s62
    %p66 = scmp.eq.s32.totalorder %s12, 0
    %p67 = por %p65, %p66
    %p68 = scmp.ne.s32.totalorder %s60, %s62
    %p69 = scmp.eq.s32.totalorder %s17, 1
    %p70 = por %p68, %p69
    %p71 = scmp.ne.s32.totalorder %s62, %s63
    %p72 = scmp.eq.s32.totalorder %s17, 0
    %p73 = por %p71, %p72
    %p74 = scmp.ne.s32.totalorder %s62, %s63
    %p75 = scmp.eq.s32.totalorder %s18, 1
    %p76 = por %p74, %p75
    %p78 = scmp.ne.s32.totalorder %s63, %s77
    %p79 = scmp.eq.s32.totalorder %s18, 0
    %p80 = por %p78, %p79
    %s82 = sadd.s32 %s81, 1
    %p85 = scmp.eq.s32.totalorder %s12, 1
    %p86 = scmp.ne.s32.totalorder %s81, %s83
    %p87 = scmp.eq.s32.totalorder %s12, 0
    %p88 = por %p86, %p87
    %p89 = scmp.ne.s32.totalorder %s81, %s83
    %p90 = scmp.eq.s32.totalorder %s17, 1
    %p91 = por %p89, %p90
    %p92 = scmp.ne.s32.totalorder %s83, %s84
    %p93 = scmp.eq.s32.totalorder %s17, 0
    %p94 = por %p92, %p93
    %p95 = scmp.ne.s32.totalorder %s83, %s84
    %p96 = scmp.eq.s32.totalorder %s18, 1
    %p97 = por %p95, %p96
    %p99 = scmp.ne.s32.totalorder %s84, %s98
    %p100 = scmp.eq.s32.totalorder %s18, 0
    %p101 = por %p99, %p100
    %s102 = ssub.s32 %s20, %s27
    %p103 = scmp.eq.s32.totalorder %s102, 0
    %s105 = sadd.s32 %s104, 1
    %s106 = scalar_select %p103, %s104, %s105
    %p109 = pneg %p103
    %p110 = scmp.eq.s32.totalorder %s12, 1
    %p111 = por %p109, %p110
    %p112 = scmp.ne.s32.totalorder %s104, %s107
    %p113 = scmp.eq.s32.totalorder %s12, 0
    %p114 = por %p112, %p113
    %p115 = scmp.ne.s32.totalorder %s104, %s107
    %p116 = scmp.eq.s32.totalorder %s17, 1
    %p117 = por %p115, %p116
    %p118 = scmp.ne.s32.totalorder %s107, %s108
    %p119 = scmp.eq.s32.totalorder %s17, 0
    %p120 = por %p118, %p119
    %p121 = scmp.ne.s32.totalorder %s107, %s108
    %p122 = scmp.eq.s32.totalorder %s18, 1
    %p123 = por %p121, %p122
    %p125 = scmp.ne.s32.totalorder %s108, %s124
    %p126 = scmp.eq.s32.totalorder %s18, 0
    %p127 = por %p125, %p126
    %s128 = ssub.s32 %s20, %s27
    %p129 = scmp.eq.s32.totalorder %s128, 0
    %s131 = sadd.s32 %s130, 1
    %s132 = scalar_select %p129, %s130, %s131
    %p135 = pneg %p129
    %p136 = scmp.eq.s32.totalorder %s12, 1
    %p137 = por %p135, %p136
    %p138 = scmp.ne.s32.totalorder %s130, %s133
    %p139 = scmp.eq.s32.totalorder %s12, 0
    %p140 = por %p138, %p139
    %p141 = scmp.ne.s32.totalorder %s130, %s133
    %p142 = scmp.eq.s32.totalorder %s17, 1
    %p143 = por %p141, %p142
    %p144 = scmp.ne.s32.totalorder %s133, %s134
    %p145 = scmp.eq.s32.totalorder %s17, 0
    %p146 = por %p144, %p145
    %p147 = scmp.ne.s32.totalorder %s133, %s134
    %p148 = scmp.eq.s32.totalorder %s18, 1
    %p149 = por %p147, %p148
    %p151 = scmp.ne.s32.totalorder %s134, %s150
    %p152 = scmp.eq.s32.totalorder %s18, 0
    %p153 = por %p151, %p152
    %s155 = sadd.s32 %s154, 1
    %p158 = scmp.eq.s32.totalorder %s12, 1
    %p159 = scmp.ne.s32.totalorder %s154, %s156
    %p160 = scmp.eq.s32.totalorder %s12, 0
    %p161 = por %p159, %p160
    %p162 = scmp.ne.s32.totalorder %s154, %s156
    %p163 = scmp.eq.s32.totalorder %s17, 1
    %p164 = por %p162, %p163
    %p165 = scmp.ne.s32.totalorder %s156, %s157
    %p166 = scmp.eq.s32.totalorder %s17, 0
    %p167 = por %p165, %p166
    %p168 = scmp.ne.s32.totalorder %s156, %s157
    %p169 = scmp.eq.s32.totalorder %s18, 1
    %p170 = por %p168, %p169
    %p172 = scmp.ne.s32.totalorder %s157, %s171
    %p173 = scmp.eq.s32.totalorder %s18, 0
    %p174 = por %p172, %p173
    %s175 = ssub.s32 %s19, %s31
    %p176 = scmp.eq.s32.totalorder %s175, 0
    %s178 = sadd.s32 %s177, 1
    %s179 = scalar_select %p176, %s177, %s178
    %p182 = pneg %p176
    %p183 = scmp.eq.s32.totalorder %s12, 1
    %p184 = por %p182, %p183
    %p185 = scmp.ne.s32.totalorder %s177, %s180
    %p186 = scmp.eq.s32.totalorder %s12, 0
    %p187 = por %p185, %p186
    %p188 = scmp.ne.s32.totalorder %s177, %s180
    %p189 = scmp.eq.s32.totalorder %s17, 1
    %p190 = por %p188, %p189
    %p191 = scmp.ne.s32.totalorder %s180, %s181
    %p192 = scmp.eq.s32.totalorder %s17, 0
    %p193 = por %p191, %p192
    %p194 = scmp.ne.s32.totalorder %s180, %s181
    %p195 = scmp.eq.s32.totalorder %s18, 1
    %p196 = por %p194, %p195
    %p198 = scmp.ne.s32.totalorder %s181, %s197
    %p199 = scmp.eq.s32.totalorder %s18, 0
    %p200 = por %p198, %p199
    %p201 = scmp.le.s32.totalorder 1, %s12
    %p202 = scmp.lt.s32.totalorder %s12, 3
    %p203 = pnand %p201, %p202
    %p204 = pneg %p203
    // Predicated region
    $region9: #{_psp_forward.1} parent=5 // pred_check
      _
    $region10: #{_psp_forward.1} parent=5 // pred_check_branch
      %206 = sbr.rel (%p203) target = $region12
    $region11: #{_psp_forward.1} parent=5 // pred_region
      %s207 = ssub.s32 %s12, 1
      // Predicated region
      $region13: #{_psp_forward.1} parent=11 // pred_check
        %p208 = pneg %p73
      $region14: #{_psp_forward.1} parent=11 // pred_check_branch
        %210 = sbr.rel (%p208) target = $region16
      $region15: #{_psp_forward.1} parent=11 // pred_region
        _
      $region16: #{_psp_forward.1} parent=11 // pred_fallthru
        _
      // Predicated region
      $region17: #{_psp_forward.1} parent=11 // pred_check
        %p211 = pneg %p94
      $region18: #{_psp_forward.1} parent=11 // pred_check_branch
        %213 = sbr.rel (%p211) target = $region20
      $region19: #{_psp_forward.1} parent=11 // pred_region
        _
      $region20: #{_psp_forward.1} parent=11 // pred_fallthru
        _
      // Predicated region
      $region21: #{_psp_forward.1} parent=11 // pred_check
        %p214 = pneg %p120
      $region22: #{_psp_forward.1} parent=11 // pred_check_branch
        %216 = sbr.rel (%p214) target = $region24
      $region23: #{_psp_forward.1} parent=11 // pred_region
        %p217 = scmp.lt.s32.totalorder %s22, 0
        %s218 = scalar_select %p217, %s22, 0
        %s219 = smul.addr %s218, 4
        %s220 = scalar_lea.vmem %s3, %s219
      $region24: #{_psp_forward.1} parent=11 // pred_fallthru
        _
      // Predicated region
      $region25: #{_psp_forward.1} parent=11 // pred_check
        %p221 = pneg %p146
      $region26: #{_psp_forward.1} parent=11 // pred_check_branch
        %223 = sbr.rel (%p221) target = $region28
      $region27: #{_psp_forward.1} parent=11 // pred_region
        %p224 = scmp.lt.s32.totalorder %s22, 0
        %s225 = scalar_select %p224, %s22, 0
        %s226 = smul.addr %s225, 4
        %s227 = scalar_lea.vmem %s4, %s226
      $region28: #{_psp_forward.1} parent=11 // pred_fallthru
        _
      // Predicated region
      $region29: #{_psp_forward.1} parent=11 // pred_check
        %p228 = pneg %p167
      $region30: #{_psp_forward.1} parent=11 // pred_check_branch
        %230 = sbr.rel (%p228) target = $region32
      $region31: #{_psp_forward.1} parent=11 // pred_region
        _
      $region32: #{_psp_forward.1} parent=11 // pred_fallthru
        _
    $region12: #{_psp_forward.1} parent=5 // pred_fallthru
      _
    %p231 = scmp.lt.s32.totalorder %s12, 2
    // Predicated region
    $region33: #{_psp_forward.1} parent=5 // pred_check
      %p232 = pneg %p231
    $region34: #{_psp_forward.1} parent=5 // pred_check_branch
      %234 = sbr.rel (%p232) target = $region36
    $region35: #{_psp_forward.1} parent=5 // pred_region
      // Predicated region
      $region37: #{_psp_forward.1} parent=35 // pred_check
        %p235 = pneg %p46
      $region38: #{_psp_forward.1} parent=35 // pred_check_branch
        %237 = sbr.rel (%p235) target = $region40
      $region39: #{_psp_forward.1} parent=35 // pred_region
        %s238 = smul.u32 2, %s20
        %p239 = scmp.lt.s32.totalorder %s19, 1
        %s240 = scalar_select %p239, %s19, 1
        %p241 = scmp.lt.s32.totalorder %s238, 1
        %s242 = scalar_select %p241, %s238, 1
        %s243 = smul.addr %s242, 2
        %s244 = smul.addr %s240, 4
        %s245 = sadd.s32 %s243, %s244
        %s246 = smul.addr %s245, 8
        %s247 = scalar_lea.vmem %s0, %s246
        %s248 = smul.u32 2, %s20
      $region40: #{_psp_forward.1} parent=35 // pred_fallthru
        _
    $region36: #{_psp_forward.1} parent=5 // pred_fallthru
      _
    %p249 = scmp.le.s32.totalorder 1, %s12
    %p250 = scmp.lt.s32.totalorder %s12, 3
    %p251 = pnand %p249, %p250
    %p252 = pneg %p251
    // Predicated region
    $region41: #{_psp_forward.1} parent=5 // pred_check
      _
    $region42: #{_psp_forward.1} parent=5 // pred_check_branch
      %254 = sbr.rel (%p251) target = $region44
    $region43: #{_psp_forward.1} parent=5 // pred_region
      %s255 = ssub.s32 %s12, 1
      %s256 = smul.u32 2, %s22
      %p257 = scmp.lt.s32.totalorder %s21, 1
      %s258 = scalar_select %p257, %s21, 1
      %p259 = scmp.lt.s32.totalorder %s256, 1
      %s260 = scalar_select %p259, %s256, 1
      %s261 = smul.addr %s260, 2
      %s262 = smul.addr %s258, 4
      %s263 = sadd.s32 %s261, %s262
      %s264 = smul.addr %s263, 8
      %s265 = scalar_lea.vmem %s0, %s264
      %p266 = pneg %p52
      %p267 = pneg %p49
      %p268 = pneg %p73
      %p269 = pneg %p70
      %p270 = pneg %p94
      %p271 = pneg %p91
      %p272 = scmp.lt.s32.totalorder %s22, 0
      %s273 = scalar_select %p272, %s22, 0
      %s274 = smul.addr %s273, 4
      %s275 = scalar_lea.vmem %s3, %s274
      %p276 = pneg %p120
      %p277 = pneg %p117
      %p278 = scmp.lt.s32.totalorder %s22, 0
      %s279 = scalar_select %p278, %s22, 0
      %s280 = smul.addr %s279, 4
      %s281 = scalar_lea.vmem %s4, %s280
      %p282 = pneg %p146
      %p283 = pneg %p143
      %p284 = pneg %p167
      %p285 = pneg %p164
      %p286 = pneg %p193
      %p287 = pneg %p190
      %p288 = scmp.lt.s32.totalorder %s21, 1
      %s289 = scalar_select %p288, %s21, 1
      %s290 = smul.addr %s289, 32
      %s291 = smul.addr %s290, 8
      %s292 = scalar_lea.vmem %s6, %s291
      %s293 = smul.u32 2, %s22
      %p294 = scmp.lt.s32.totalorder %s21, 1
      %s295 = scalar_select %p294, %s21, 1
      %p296 = scmp.lt.s32.totalorder %s293, 1
      %s297 = scalar_select %p296, %s293, 1
      %s298 = smul.addr %s297, 2
      %s299 = smul.addr %s295, 4
      %s300 = sadd.s32 %s298, %s299
      %s301 = smul.addr %s300, 8
      %s302 = scalar_lea.vmem %s0, %s301
      %s303 = smul.u32 2, %s22
      %p304 = scmp.lt.s32.totalorder %s22, 0
      %s305 = scalar_select %p304, %s22, 0
      %s306 = smul.addr %s305, 4
      %s307 = scalar_lea.vmem %s3, %s306
      %p308 = scmp.lt.s32.totalorder %s22, 0
      %s309 = scalar_select %p308, %s22, 0
      %s310 = smul.addr %s309, 4
      %s311 = scalar_lea.vmem %s4, %s310
      %p312 = scmp.lt.s32.totalorder %s21, 1
      %s313 = scalar_select %p312, %s21, 1
      %s314 = smul.addr %s313, 32
      %s315 = smul.addr %s314, 8
      %s316 = scalar_lea.vmem %s6, %s315
      %v318 = vld [vmem:[%s302] sm:$0xff]
      %v319 = vld [vmem:[%s302 + $0x8] sm:$0xff]
      %v320 = vld [vmem:[%s302 + $0x10] sm:$0xff]
      %v321 = vld [vmem:[%s302 + $0x18] sm:$0xff]
      %v322 = vpack.c.bf16 %v320, %v318
      %v323 = vpack.c.bf16 %v321, %v319
      %p324 = scmp.eq.s32.totalorder %s22, 0
      // Predicated region
      $region45: #{_psp_forward.1} parent=43 // pred_check
        %p325 = pneg %p324
      $region46: #{_psp_forward.1} parent=43 // pred_check_branch
        %327 = sbr.rel (%p325) target = $region48
      $region47: #{_psp_forward.1} parent=43 // pred_region
        %v328 = vld [vmem:[%s5] sm:$0xff]
        %v329 = vld [vmem:[%s5 + $0x8] sm:$0xff]
        %v330 = vld [vmem:[%s5 + $0x10] sm:$0xff]
        %v331 = vld [vmem:[%s5 + $0x18] sm:$0xff]
        %v332 = vld [vmem:[%s5 + $0x20] sm:$0xff]
        %v333 = vld [vmem:[%s5 + $0x28] sm:$0xff]
        %v334 = vld [vmem:[%s5 + $0x30] sm:$0xff]
        %v335 = vld [vmem:[%s5 + $0x38] sm:$0xff]
        %v336 = vld [vmem:[%s5 + $0x40] sm:$0xff]
        %v337 = vld [vmem:[%s5 + $0x48] sm:$0xff]
        %v338 = vld [vmem:[%s5 + $0x50] sm:$0xff]
        %v339 = vld [vmem:[%s5 + $0x58] sm:$0xff]
        %v340 = vld [vmem:[%s5 + $0x60] sm:$0xff]
        %v341 = vld [vmem:[%s5 + $0x68] sm:$0xff]
        %v342 = vld [vmem:[%s5 + $0x70] sm:$0xff]
        %v343 = vld [vmem:[%s5 + $0x78] sm:$0xff]
        %vm344 = vcmask 64512
        %345 = vst.msk [vmem:[#allocation2] sm:$0xff] %vm344, %v328
        %346 = vst.msk [vmem:[#allocation2 + $0x8] sm:$0xff] %vm344, %v329
        %347 = vst.msk [vmem:[#allocation2 + $0x10] sm:$0xff] %vm344, %v330
        %348 = vst.msk [vmem:[#allocation2 + $0x18] sm:$0xff] %vm344, %v331
        %349 = vst.msk [vmem:[#allocation2 + $0x20] sm:$0xff] %vm344, %v332
        %350 = vst.msk [vmem:[#allocation2 + $0x28] sm:$0xff] %vm344, %v333
        %351 = vst.msk [vmem:[#allocation2 + $0x30] sm:$0xff] %vm344, %v334
        %352 = vst.msk [vmem:[#allocation2 + $0x38] sm:$0xff] %vm344, %v335
        %353 = vst.msk [vmem:[#allocation2 + $0x40] sm:$0xff] %vm344, %v336
        %354 = vst.msk [vmem:[#allocation2 + $0x48] sm:$0xff] %vm344, %v337
        %355 = vst.msk [vmem:[#allocation2 + $0x50] sm:$0xff] %vm344, %v338
        %356 = vst.msk [vmem:[#allocation2 + $0x58] sm:$0xff] %vm344, %v339
        %357 = vst.msk [vmem:[#allocation2 + $0x60] sm:$0xff] %vm344, %v340
        %358 = vst.msk [vmem:[#allocation2 + $0x68] sm:$0xff] %vm344, %v341
        %359 = vst.msk [vmem:[#allocation2 + $0x70] sm:$0xff] %vm344, %v342
        %360 = vst.msk [vmem:[#allocation2 + $0x78] sm:$0xff] %vm344, %v343
        %361 = vst.msk [vmem:[#allocation3] sm:$0xff] %vm344, 0.0
        %362 = vst.msk [vmem:[#allocation3 + $0x8] sm:$0xff] %vm344, 0.0
        %363 = vst.msk [vmem:[#allocation3 + $0x10] sm:$0xff] %vm344, 0.0
        %364 = vst.msk [vmem:[#allocation3 + $0x18] sm:$0xff] %vm344, 0.0
        %365 = vst.msk [vmem:[#allocation3 + $0x20] sm:$0xff] %vm344, 0.0
        %366 = vst.msk [vmem:[#allocation3 + $0x28] sm:$0xff] %vm344, 0.0
        %367 = vst.msk [vmem:[#allocation3 + $0x30] sm:$0xff] %vm344, 0.0
        %368 = vst.msk [vmem:[#allocation3 + $0x38] sm:$0xff] %vm344, 0.0
        %369 = vst.msk [vmem:[#allocation3 + $0x40] sm:$0xff] %vm344, 0.0
        %370 = vst.msk [vmem:[#allocation3 + $0x48] sm:$0xff] %vm344, 0.0
        %371 = vst.msk [vmem:[#allocation3 + $0x50] sm:$0xff] %vm344, 0.0
        %372 = vst.msk [vmem:[#allocation3 + $0x58] sm:$0xff] %vm344, 0.0
        %373 = vst.msk [vmem:[#allocation3 + $0x60] sm:$0xff] %vm344, 0.0
        %374 = vst.msk [vmem:[#allocation3 + $0x68] sm:$0xff] %vm344, 0.0
        %375 = vst.msk [vmem:[#allocation3 + $0x70] sm:$0xff] %vm344, 0.0
        %376 = vst.msk [vmem:[#allocation3 + $0x78] sm:$0xff] %vm344, 0.0
        %vm377 = vcmask 130048
        %378 = vst.msk [vmem:[#allocation4] sm:$0xff] %vm377, 0.0
        %379 = vst.msk [vmem:[#allocation4 + $0x8] sm:$0xff] %vm377, 0.0
        %380 = vst.msk [vmem:[#allocation4 + $0x10] sm:$0xff] %vm377, 0.0
        %381 = vst.msk [vmem:[#allocation4 + $0x18] sm:$0xff] %vm377, 0.0
        %382 = vst.msk [vmem:[#allocation4 + $0x20] sm:$0xff] %vm377, 0.0
        %383 = vst.msk [vmem:[#allocation4 + $0x28] sm:$0xff] %vm377, 0.0
        %384 = vst.msk [vmem:[#allocation4 + $0x30] sm:$0xff] %vm377, 0.0
        %385 = vst.msk [vmem:[#allocation4 + $0x38] sm:$0xff] %vm377, 0.0
        %386 = vst.msk [vmem:[#allocation4 + $0x40] sm:$0xff] %vm377, 0.0
        %387 = vst.msk [vmem:[#allocation4 + $0x48] sm:$0xff] %vm377, 0.0
        %388 = vst.msk [vmem:[#allocation4 + $0x50] sm:$0xff] %vm377, 0.0
        %389 = vst.msk [vmem:[#allocation4 + $0x58] sm:$0xff] %vm377, 0.0
        %390 = vst.msk [vmem:[#allocation4 + $0x60] sm:$0xff] %vm377, 0.0
        %391 = vst.msk [vmem:[#allocation4 + $0x68] sm:$0xff] %vm377, 0.0
        %392 = vst.msk [vmem:[#allocation4 + $0x70] sm:$0xff] %vm377, 0.0
        %393 = vst.msk [vmem:[#allocation4 + $0x78] sm:$0xff] %vm377, 0.0
        %vm394 = vcmask 326656
        %395 = vst.msk [vmem:[#allocation5] sm:$0xff] %vm394, 0.0
        %396 = vst.msk [vmem:[#allocation5 + $0x8] sm:$0xff] %vm394, 0.0
        %397 = vst.msk [vmem:[#allocation5 + $0x10] sm:$0xff] %vm394, 0.0
        %398 = vst.msk [vmem:[#allocation5 + $0x18] sm:$0xff] %vm394, 0.0
        %399 = vst.msk [vmem:[#allocation5 + $0x20] sm:$0xff] %vm394, 0.0
        %400 = vst.msk [vmem:[#allocation5 + $0x28] sm:$0xff] %vm394, 0.0
        %401 = vst.msk [vmem:[#allocation5 + $0x30] sm:$0xff] %vm394, 0.0
        %402 = vst.msk [vmem:[#allocation5 + $0x38] sm:$0xff] %vm394, 0.0
        %403 = vst.msk [vmem:[#allocation5 + $0x40] sm:$0xff] %vm394, 0.0
        %404 = vst.msk [vmem:[#allocation5 + $0x48] sm:$0xff] %vm394, 0.0
        %405 = vst.msk [vmem:[#allocation5 + $0x50] sm:$0xff] %vm394, 0.0
        %406 = vst.msk [vmem:[#allocation5 + $0x58] sm:$0xff] %vm394, 0.0
        %407 = vst.msk [vmem:[#allocation5 + $0x60] sm:$0xff] %vm394, 0.0
        %408 = vst.msk [vmem:[#allocation5 + $0x68] sm:$0xff] %vm394, 0.0
        %409 = vst.msk [vmem:[#allocation5 + $0x70] sm:$0xff] %vm394, 0.0
        %410 = vst.msk [vmem:[#allocation5 + $0x78] sm:$0xff] %vm394, 0.0
      $region48: #{_psp_forward.1} parent=43 // pred_fallthru
        _
      %v411 = vld [vmem:[%s307] sm:$0xf]
      %v412 = vld [vmem:[%s307 + $0x4] sm:$0xf]
      %v413 = vld [vmem:[%s307 + $0x8] sm:$0xf]
      %v414 = vld [vmem:[%s307 + $0xc] sm:$0xf]
      %v415 = vld [vmem:[%s307 + $0x10] sm:$0xf]
      %v416 = vld [vmem:[%s307 + $0x14] sm:$0xf]
      %v417 = vld [vmem:[%s307 + $0x18] sm:$0xf]
      %v418 = vld [vmem:[%s307 + $0x1c] sm:$0xf]
      %v419 = vld [vmem:[%s307 + $0x20] sm:$0xf]
      %v420 = vld [vmem:[%s307 + $0x24] sm:$0xf]
      %v421 = vld [vmem:[%s307 + $0x28] sm:$0xf]
      %v422 = vld [vmem:[%s307 + $0x2c] sm:$0xf]
      %v423 = vld [vmem:[%s307 + $0x30] sm:$0xf]
      %v424 = vld [vmem:[%s307 + $0x34] sm:$0xf]
      %v425 = vld [vmem:[%s307 + $0x38] sm:$0xf]
      %v426 = vld [vmem:[%s307 + $0x3c] sm:$0xf]
      %v443 = vunpack.c.l.b16 %v411
      %v444 = vunpack.c.l.b16 %v412
      %v445 = vunpack.c.l.b16 %v413
      %v446 = vunpack.c.l.b16 %v414
      %v447 = vunpack.c.l.b16 %v415
      %v448 = vunpack.c.l.b16 %v416
      %v449 = vunpack.c.l.b16 %v417
      %v450 = vunpack.c.l.b16 %v418
      %v451 = vunpack.c.l.b16 %v419
      %v452 = vunpack.c.l.b16 %v420
      %v453 = vunpack.c.l.b16 %v421
      %v454 = vunpack.c.l.b16 %v422
      %v455 = vunpack.c.l.b16 %v423
      %v456 = vunpack.c.l.b16 %v424
      %v457 = vunpack.c.l.b16 %v425
      %v458 = vunpack.c.l.b16 %v426
      %v459 = vpack.c.b16 %v444, %v443
      %v460 = vpack.c.b16 %v446, %v445
      %v461 = vpack.c.b16 %v448, %v447
      %v462 = vpack.c.b16 %v450, %v449
      %v463 = vpack.c.b16 %v452, %v451
      %v464 = vpack.c.b16 %v454, %v453
      %v465 = vpack.c.b16 %v456, %v455
      %v466 = vpack.c.b16 %v458, %v457
      %vm467 = vcmask 130048
      %v469 = vsel %vm467, %v459, 0
      %v472 = vsel %vm467, %v460, 0
      %v475 = vsel %vm467, %v461, 0
      %v478 = vsel %vm467, %v462, 0
      %v481 = vsel %vm467, %v463, 0
      %v484 = vsel %vm467, %v464, 0
      %v487 = vsel %vm467, %v465, 0
      %v490 = vsel %vm467, %v466, 0
      %492 = vmatprep.subr.bf16.mxu0 %v323
      %493 = vmatpush1.bf16.msra.mxu0 %v322
      %494 = vmatprep.subr.bf16.mxu0 0
      %495 = vmatpush1.bf16.msra.mxu0 0
      %496 = vmatprep.subr.bf16.mxu0 0
      %497 = vmatpush1.bf16.msra.mxu0 0
      %498 = vmatprep.subr.bf16.mxu0 0
      %499 = vmatpush1.bf16.msra.mxu0 0
      %500 = vmatprep.subr.bf16.mxu0 0
      %501 = vmatpush1.bf16.msra.mxu0 0
      %502 = vmatprep.subr.bf16.mxu0 0
      %503 = vmatpush1.bf16.msra.mxu0 0
      %504 = vmatprep.subr.bf16.mxu0 0
      %505 = vmatpush1.bf16.msra.mxu0 0
      %506 = vmatprep.subr.bf16.mxu0 0
      %507 = vmatpush1.bf16.msra.mxu0 0
      %508 = vmatprep.subr.bf16.mxu0 0
      %509 = vmatpush1.bf16.msra.mxu0 0
      %510 = vmatprep.subr.bf16.mxu0 0
      %511 = vmatpush1.bf16.msra.mxu0 0
      %512 = vmatprep.subr.bf16.mxu0 0
      %513 = vmatpush1.bf16.msra.mxu0 0
      %514 = vmatprep.subr.bf16.mxu0 0
      %515 = vmatpush1.bf16.msra.mxu0 0
      %516 = vmatprep.subr.bf16.mxu0 0
      %517 = vmatpush1.bf16.msra.mxu0 0
      %518 = vmatprep.subr.bf16.mxu0 0
      %519 = vmatpush1.bf16.msra.mxu0 0
      %520 = vmatprep.subr.bf16.mxu0 0
      %521 = vmatpush1.bf16.msra.mxu0 0
      %522 = vmatprep.subr.bf16.mxu0 0
      %523 = vmatpush1.bf16.msra.mxu0 0
      %524 = vmatprep.mubr.bf16.mxu0 0
      %525 = vmatmul.mubr.bf16.gmra.mrb[0].mxu0 %v469
      %v526 = vpop.f32.mrb[0].mxu0
      %v527 = vadd.f32 0.0, %v526
      %v528 = vpop.f32.mrb[0].mxu0
      %v529 = vadd.f32 0.0, %v528
      %v530 = vpop.f32.mrb[0].mxu0
      %v531 = vadd.f32 0.0, %v530
      %v532 = vpop.f32.mrb[0].mxu0
      %v533 = vadd.f32 0.0, %v532
      %534 = vmatprep.mubr.bf16.mxu0 0
      %535 = vmatmul.mubr.bf16.gmra.mrb[0].mxu0 %v472
      %v536 = vpop.f32.mrb[0].mxu0
      %v537 = vadd.f32 0.0, %v536
      %v538 = vpop.f32.mrb[0].mxu0
      %v539 = vadd.f32 0.0, %v538
      %v540 = vpop.f32.mrb[0].mxu0
      %v541 = vadd.f32 0.0, %v540
      %v542 = vpop.f32.mrb[0].mxu0
      %v543 = vadd.f32 0.0, %v542
      %544 = vmatprep.mubr.bf16.mxu0 0
      %545 = vmatmul.mubr.bf16.gmra.mrb[0].mxu0 %v475
      %v546 = vpop.f32.mrb[0].mxu0
      %v547 = vadd.f32 0.0, %v546
      %v548 = vpop.f32.mrb[0].mxu0
      %v549 = vadd.f32 0.0, %v548
      %v550 = vpop.f32.mrb[0].mxu0
      %v551 = vadd.f32 0.0, %v550
      %v552 = vpop.f32.mrb[0].mxu0
      %v553 = vadd.f32 0.0, %v552
      %554 = vmatprep.mubr.bf16.mxu0 0
      %555 = vmatmul.mubr.bf16.gmra.mrb[0].mxu0 %v478
      %v556 = vpop.f32.mrb[0].mxu0
      %v557 = vadd.f32 0.0, %v556
      %v558 = vpop.f32.mrb[0].mxu0
      %v559 = vadd.f32 0.0, %v558
      %v560 = vpop.f32.mrb[0].mxu0
      %v561 = vadd.f32 0.0, %v560
      %v562 = vpop.f32.mrb[0].mxu0
      %v563 = vadd.f32 0.0, %v562
      %564 = vmatprep.mubr.bf16.mxu0 0
      %565 = vmatmul.mubr.bf16.gmra.mrb[0].mxu0 %v481
      %v566 = vpop.f32.mrb[0].mxu0
      %v567 = vadd.f32 0.0, %v566
      %v568 = vpop.f32.mrb[0].mxu0
      %v569 = vadd.f32 0.0, %v568
      %v570 = vpop.f32.mrb[0].mxu0
      %v571 = vadd.f32 0.0, %v570
      %v572 = vpop.f32.mrb[0].mxu0
      %v573 = vadd.f32 0.0, %v572
      %574 = vmatprep.mubr.bf16.mxu0 0
      %575 = vmatmul.mubr.bf16.gmra.mrb[0].mxu0 %v484
      %v576 = vpop.f32.mrb[0].mxu0
      %v577 = vadd.f32 0.0, %v576
      %v578 = vpop.f32.mrb[0].mxu0
      %v579 = vadd.f32 0.0, %v578
      %v580 = vpop.f32.mrb[0].mxu0
      %v581 = vadd.f32 0.0, %v580
      %v582 = vpop.f32.mrb[0].mxu0
      %v583 = vadd.f32 0.0, %v582
      %584 = vmatprep.mubr.bf16.mxu0 0
      %585 = vmatmul.mubr.bf16.gmra.mrb[0].mxu0 %v487
      %v586 = vpop.f32.mrb[0].mxu0
      %v587 = vadd.f32 0.0, %v586
      %v588 = vpop.f32.mrb[0].mxu0
      %v589 = vadd.f32 0.0, %v588
      %v590 = vpop.f32.mrb[0].mxu0
      %v591 = vadd.f32 0.0, %v590
      %v592 = vpop.f32.mrb[0].mxu0
      %v593 = vadd.f32 0.0, %v592
      %594 = vmatprep.mubr.bf16.mxu0 0
      %595 = vmatmul.mubr.bf16.gmra.mrb[0].mxu0 %v490
      %v596 = vpop.f32.mrb[0].mxu0
      %v597 = vadd.f32 0.0, %v596
      %v598 = vpop.f32.mrb[0].mxu0
      %v599 = vadd.f32 0.0, %v598
      %v600 = vpop.f32.mrb[0].mxu0
      %v601 = vadd.f32 0.0, %v600
      %v602 = vpop.f32.mrb[0].mxu0
      %v603 = vadd.f32 0.0, %v602
      %604 = vdwg.mxu0
      // Predicated region
      $region49: #{_psp_forward.1} parent=43 // pred_check
        %p605 = pneg %p324
      $region50: #{_psp_forward.1} parent=43 // pred_check_branch
        %607 = sbr.rel (%p605) target = $region52
      $region51: #{_psp_forward.1} parent=43 // pred_region
        %608 = vst [vmem:[%s316] sm:$0xff] %v527
        %609 = vst [vmem:[%s316 + $0x8] sm:$0xff] %v529
        %610 = vst [vmem:[%s316 + $0x10] sm:$0xff] %v531
        %611 = vst [vmem:[%s316 + $0x18] sm:$0xff] %v533
        %612 = vst [vmem:[%s316 + $0x20] sm:$0xff] %v537
        %613 = vst [vmem:[%s316 + $0x28] sm:$0xff] %v539
        %614 = vst [vmem:[%s316 + $0x30] sm:$0xff] %v541
        %615 = vst [vmem:[%s316 + $0x38] sm:$0xff] %v543
        %616 = vst [vmem:[%s316 + $0x40] sm:$0xff] %v547
        %617 = vst [vmem:[%s316 + $0x48] sm:$0xff] %v549
        %618 = vst [vmem:[%s316 + $0x50] sm:$0xff] %v551
        %619 = vst [vmem:[%s316 + $0x58] sm:$0xff] %v553
        %620 = vst [vmem:[%s316 + $0x60] sm:$0xff] %v557
        %621 = vst [vmem:[%s316 + $0x68] sm:$0xff] %v559
        %622 = vst [vmem:[%s316 + $0x70] sm:$0xff] %v561
        %623 = vst [vmem:[%s316 + $0x78] sm:$0xff] %v563
        %624 = vst [vmem:[%s316 + $0x80] sm:$0xff] %v567
        %625 = vst [vmem:[%s316 + $0x88] sm:$0xff] %v569
        %626 = vst [vmem:[%s316 + $0x90] sm:$0xff] %v571
        %627 = vst [vmem:[%s316 + $0x98] sm:$0xff] %v573
        %628 = vst [vmem:[%s316 + $0xa0] sm:$0xff] %v577
        %629 = vst [vmem:[%s316 + $0xa8] sm:$0xff] %v579
        %630 = vst [vmem:[%s316 + $0xb0] sm:$0xff] %v581
        %631 = vst [vmem:[%s316 + $0xb8] sm:$0xff] %v583
        %632 = vst [vmem:[%s316 + $0xc0] sm:$0xff] %v587
        %633 = vst [vmem:[%s316 + $0xc8] sm:$0xff] %v589
        %634 = vst [vmem:[%s316 + $0xd0] sm:$0xff] %v591
        %635 = vst [vmem:[%s316 + $0xd8] sm:$0xff] %v593
        %636 = vst [vmem:[%s316 + $0xe0] sm:$0xff] %v597
        %637 = vst [vmem:[%s316 + $0xe8] sm:$0xff] %v599
        %638 = vst [vmem:[%s316 + $0xf0] sm:$0xff] %v601
        %639 = vst [vmem:[%s316 + $0xf8] sm:$0xff] %v603
      $region52: #{_psp_forward.1} parent=43 // pred_fallthru
        _
      %p640 = scmp.ne.s32.totalorder %s22, 0
      // Predicated region
      $region53: #{_psp_forward.1} parent=43 // pred_check
        %p641 = pneg %p640
      $region54: #{_psp_forward.1} parent=43 // pred_check_branch
        %643 = sbr.rel (%p641) target = $region56
      $region55: #{_psp_forward.1} parent=43 // pred_region
        %v644 = vld [vmem:[%s316] sm:$0xff]
        %v645 = vld [vmem:[%s316 + $0x8] sm:$0xff]
        %v646 = vld [vmem:[%s316 + $0x10] sm:$0xff]
        %v647 = vld [vmem:[%s316 + $0x18] sm:$0xff]
        %v648 = vld [vmem:[%s316 + $0x20] sm:$0xff]
        %v649 = vld [vmem:[%s316 + $0x28] sm:$0xff]
        %v650 = vld [vmem:[%s316 + $0x30] sm:$0xff]
        %v651 = vld [vmem:[%s316 + $0x38] sm:$0xff]
        %v652 = vld [vmem:[%s316 + $0x40] sm:$0xff]
        %v653 = vld [vmem:[%s316 + $0x48] sm:$0xff]
        %v654 = vld [vmem:[%s316 + $0x50] sm:$0xff]
        %v655 = vld [vmem:[%s316 + $0x58] sm:$0xff]
        %v656 = vld [vmem:[%s316 + $0x60] sm:$0xff]
        %v657 = vld [vmem:[%s316 + $0x68] sm:$0xff]
        %v658 = vld [vmem:[%s316 + $0x70] sm:$0xff]
        %v659 = vld [vmem:[%s316 + $0x78] sm:$0xff]
        %v660 = vld [vmem:[%s316 + $0x80] sm:$0xff]
        %v661 = vld [vmem:[%s316 + $0x88] sm:$0xff]
        %v662 = vld [vmem:[%s316 + $0x90] sm:$0xff]
        %v663 = vld [vmem:[%s316 + $0x98] sm:$0xff]
        %v664 = vld [vmem:[%s316 + $0xa0] sm:$0xff]
        %v665 = vld [vmem:[%s316 + $0xa8] sm:$0xff]
        %v666 = vld [vmem:[%s316 + $0xb0] sm:$0xff]
        %v667 = vld [vmem:[%s316 + $0xb8] sm:$0xff]
        %v668 = vld [vmem:[%s316 + $0xc0] sm:$0xff]
        %v669 = vld [vmem:[%s316 + $0xc8] sm:$0xff]
        %v670 = vld [vmem:[%s316 + $0xd0] sm:$0xff]
        %v671 = vld [vmem:[%s316 + $0xd8] sm:$0xff]
        %v672 = vld [vmem:[%s316 + $0xe0] sm:$0xff]
        %v673 = vld [vmem:[%s316 + $0xe8] sm:$0xff]
        %v674 = vld [vmem:[%s316 + $0xf0] sm:$0xff]
        %v675 = vld [vmem:[%s316 + $0xf8] sm:$0xff]
        %v676 = vadd.f32 %v644, %v527
        %v677 = vadd.f32 %v645, %v529
        %v678 = vadd.f32 %v646, %v531
        %v679 = vadd.f32 %v647, %v533
        %v680 = vadd.f32 %v648, %v537
        %v681 = vadd.f32 %v649, %v539
        %v682 = vadd.f32 %v650, %v541
        %v683 = vadd.f32 %v651, %v543
        %v684 = vadd.f32 %v652, %v547
        %v685 = vadd.f32 %v653, %v549
        %v686 = vadd.f32 %v654, %v551
        %v687 = vadd.f32 %v655, %v553
        %v688 = vadd.f32 %v656, %v557
        %v689 = vadd.f32 %v657, %v559
        %v690 = vadd.f32 %v658, %v561
        %v691 = vadd.f32 %v659, %v563
        %v692 = vadd.f32 %v660, %v567
        %v693 = vadd.f32 %v661, %v569
        %v694 = vadd.f32 %v662, %v571
        %v695 = vadd.f32 %v663, %v573
        %v696 = vadd.f32 %v664, %v577
        %v697 = vadd.f32 %v665, %v579
        %v698 = vadd.f32 %v666, %v581
        %v699 = vadd.f32 %v667, %v583
        %v700 = vadd.f32 %v668, %v587
        %v701 = vadd.f32 %v669, %v589
        %v702 = vadd.f32 %v670, %v591
        %v703 = vadd.f32 %v671, %v593
        %v704 = vadd.f32 %v672, %v597
        %v705 = vadd.f32 %v673, %v599
        %v706 = vadd.f32 %v674, %v601
        %v707 = vadd.f32 %v675, %v603
        %708 = vst [vmem:[%s316] sm:$0xff] %v676
        %709 = vst [vmem:[%s316 + $0x8] sm:$0xff] %v677
        %710 = vst [vmem:[%s316 + $0x10] sm:$0xff] %v678
        %711 = vst [vmem:[%s316 + $0x18] sm:$0xff] %v679
        %712 = vst [vmem:[%s316 + $0x20] sm:$0xff] %v680
        %713 = vst [vmem:[%s316 + $0x28] sm:$0xff] %v681
        %714 = vst [vmem:[%s316 + $0x30] sm:$0xff] %v682
        %715 = vst [vmem:[%s316 + $0x38] sm:$0xff] %v683
        %716 = vst [vmem:[%s316 + $0x40] sm:$0xff] %v684
        %717 = vst [vmem:[%s316 + $0x48] sm:$0xff] %v685
        %718 = vst [vmem:[%s316 + $0x50] sm:$0xff] %v686
        %719 = vst [vmem:[%s316 + $0x58] sm:$0xff] %v687
        %720 = vst [vmem:[%s316 + $0x60] sm:$0xff] %v688
        %721 = vst [vmem:[%s316 + $0x68] sm:$0xff] %v689
        %722 = vst [vmem:[%s316 + $0x70] sm:$0xff] %v690
        %723 = vst [vmem:[%s316 + $0x78] sm:$0xff] %v691
        %724 = vst [vmem:[%s316 + $0x80] sm:$0xff] %v692
        %725 = vst [vmem:[%s316 + $0x88] sm:$0xff] %v693
        %726 = vst [vmem:[%s316 + $0x90] sm:$0xff] %v694
        %727 = vst [vmem:[%s316 + $0x98] sm:$0xff] %v695
        %728 = vst [vmem:[%s316 + $0xa0] sm:$0xff] %v696
        %729 = vst [vmem:[%s316 + $0xa8] sm:$0xff] %v697
        %730 = vst [vmem:[%s316 + $0xb0] sm:$0xff] %v698
        %731 = vst [vmem:[%s316 + $0xb8] sm:$0xff] %v699
        %732 = vst [vmem:[%s316 + $0xc0] sm:$0xff] %v700
        %733 = vst [vmem:[%s316 + $0xc8] sm:$0xff] %v701
        %734 = vst [vmem:[%s316 + $0xd0] sm:$0xff] %v702
        %735 = vst [vmem:[%s316 + $0xd8] sm:$0xff] %v703
        %736 = vst [vmem:[%s316 + $0xe0] sm:$0xff] %v704
        %737 = vst [vmem:[%s316 + $0xe8] sm:$0xff] %v705
        %738 = vst [vmem:[%s316 + $0xf0] sm:$0xff] %v706
        %739 = vst [vmem:[%s316 + $0xf8] sm:$0xff] %v707
      $region56: #{_psp_forward.1} parent=43 // pred_fallthru
        _
      %v740 = vld [vmem:[%s1] sm:$0xf]
      %v741 = vld [vmem:[%s1 + $0x4] sm:$0xf]
      %v742 = vld [vmem:[%s1 + $0x8] sm:$0xf]
      %v743 = vld [vmem:[%s1 + $0xc] sm:$0xf]
      %v744 = vld [vmem:[%s1 + $0x10] sm:$0xf]
      %v745 = vld [vmem:[%s1 + $0x14] sm:$0xf]
      %v746 = vld [vmem:[%s1 + $0x18] sm:$0xf]
      %v747 = vld [vmem:[%s1 + $0x1c] sm:$0xf]
      %v748 = vld [vmem:[%s1 + $0x20] sm:$0xf]
      %v749 = vld [vmem:[%s1 + $0x24] sm:$0xf]
      %v750 = vld [vmem:[%s1 + $0x28] sm:$0xf]
      %v751 = vld [vmem:[%s1 + $0x2c] sm:$0xf]
      %v752 = vld [vmem:[%s1 + $0x30] sm:$0xf]
      %v753 = vld [vmem:[%s1 + $0x34] sm:$0xf]
      %v754 = vld [vmem:[%s1 + $0x38] sm:$0xf]
      %v755 = vld [vmem:[%s1 + $0x3c] sm:$0xf]
      %v756 = vld [vmem:[%s1 + $0x40] sm:$0xf]
      %v757 = vld [vmem:[%s1 + $0x44] sm:$0xf]
      %v758 = vld [vmem:[%s1 + $0x48] sm:$0xf]
      %v759 = vld [vmem:[%s1 + $0x4c] sm:$0xf]
      %v760 = vld [vmem:[%s1 + $0x50] sm:$0xf]
      %v761 = vld [vmem:[%s1 + $0x54] sm:$0xf]
      %v762 = vld [vmem:[%s1 + $0x58] sm:$0xf]
      %v763 = vld [vmem:[%s1 + $0x5c] sm:$0xf]
      %v764 = vld [vmem:[%s1 + $0x60] sm:$0xf]
      %v765 = vld [vmem:[%s1 + $0x64] sm:$0xf]
      %v766 = vld [vmem:[%s1 + $0x68] sm:$0xf]
      %v767 = vld [vmem:[%s1 + $0x6c] sm:$0xf]
      %v768 = vld [vmem:[%s1 + $0x70] sm:$0xf]
      %v769 = vld [vmem:[%s1 + $0x74] sm:$0xf]
      %v770 = vld [vmem:[%s1 + $0x78] sm:$0xf]
      %v771 = vld [vmem:[%s1 + $0x7c] sm:$0xf]
      %v804 = vunpack.c.l.b16 %v740
      %v805 = vunpack.c.l.b16 %v741
      %v806 = vunpack.c.l.b16 %v742
      %v807 = vunpack.c.l.b16 %v743
      %v808 = vunpack.c.l.b16 %v744
      %v809 = vunpack.c.l.b16 %v745
      %v810 = vunpack.c.l.b16 %v746
      %v811 = vunpack.c.l.b16 %v747
      %v812 = vunpack.c.l.b16 %v748
      %v813 = vunpack.c.l.b16 %v749
      %v814 = vunpack.c.l.b16 %v750
      %v815 = vunpack.c.l.b16 %v751
      %v816 = vunpack.c.l.b16 %v752
      %v817 = vunpack.c.l.b16 %v753
      %v818 = vunpack.c.l.b16 %v754
      %v819 = vunpack.c.l.b16 %v755
      %v820 = vunpack.c.l.b16 %v756
      %v821 = vunpack.c.l.b16 %v757
      %v822 = vunpack.c.l.b16 %v758
      %v823 = vunpack.c.l.b16 %v759
      %v824 = vunpack.c.l.b16 %v760
      %v825 = vunpack.c.l.b16 %v761
      %v826 = vunpack.c.l.b16 %v762
      %v827 = vunpack.c.l.b16 %v763
      %v828 = vunpack.c.l.b16 %v764
      %v829 = vunpack.c.l.b16 %v765
      %v830 = vunpack.c.l.b16 %v766
      %v831 = vunpack.c.l.b16 %v767
      %v832 = vunpack.c.l.b16 %v768
      %v833 = vunpack.c.l.b16 %v769
      %v834 = vunpack.c.l.b16 %v770
      %v835 = vunpack.c.l.b16 %v771
      %v836 = vpack.c.b16 %v805, %v804
      %v837 = vpack.c.b16 %v807, %v806
      %v838 = vpack.c.b16 %v809, %v808
      %v839 = vpack.c.b16 %v811, %v810
      %v840 = vpack.c.b16 %v813, %v812
      %v841 = vpack.c.b16 %v815, %v814
      %v842 = vpack.c.b16 %v817, %v816
      %v843 = vpack.c.b16 %v819, %v818
      %v844 = vpack.c.b16 %v821, %v820
      %v845 = vpack.c.b16 %v823, %v822
      %v846 = vpack.c.b16 %v825, %v824
      %v847 = vpack.c.b16 %v827, %v826
      %v848 = vpack.c.b16 %v829, %v828
      %v849 = vpack.c.b16 %v831, %v830
      %v850 = vpack.c.b16 %v833, %v832
      %v851 = vpack.c.b16 %v835, %v834
      %868 = vmatprep.subr.bf16.mxu0 0
      %869 = vmatpush1.bf16.msra.mxu0 %v836
      %870 = vmatprep.subr.bf16.mxu0 0
      %871 = vmatpush1.bf16.msra.mxu0 %v837
      %872 = vmatprep.subr.bf16.mxu0 0
      %873 = vmatpush1.bf16.msra.mxu0 %v838
      %874 = vmatprep.subr.bf16.mxu0 0
      %875 = vmatpush1.bf16.msra.mxu0 %v839
      %876 = vmatprep.subr.bf16.mxu0 0
      %877 = vmatpush1.bf16.msra.mxu0 %v840
      %878 = vmatprep.subr.bf16.mxu0 0
      %879 = vmatpush1.bf16.msra.mxu0 %v841
      %880 = vmatprep.subr.bf16.mxu0 0
      %881 = vmatpush1.bf16.msra.mxu0 %v842
      %882 = vmatprep.subr.bf16.mxu0 0
      %883 = vmatpush1.bf16.msra.mxu0 %v843
      %884 = vmatprep.subr.bf16.mxu0 0
      %885 = vmatpush1.bf16.msra.mxu0 %v844
      %886 = vmatprep.subr.bf16.mxu0 0
      %887 = vmatpush1.bf16.msra.mxu0 %v845
      %888 = vmatprep.subr.bf16.mxu0 0
      %889 = vmatpush1.bf16.msra.mxu0 %v846
      %890 = vmatprep.subr.bf16.mxu0 0
      %891 = vmatpush1.bf16.msra.mxu0 %v847
      %892 = vmatprep.subr.bf16.mxu0 0
      %893 = vmatpush1.bf16.msra.mxu0 %v848
      %894 = vmatprep.subr.bf16.mxu0 0
      %895 = vmatpush1.bf16.msra.mxu0 %v849
      %896 = vmatprep.subr.bf16.mxu0 0
      %897 = vmatpush1.bf16.msra.mxu0 %v850
      %898 = vmatprep.subr.bf16.mxu0 0
      %899 = vmatpush1.bf16.msra.mxu0 %v851
      %900 = vmatprep.mubr.bf16.mxu0 %v323
      %901 = vmatmul.mubr.bf16.gmra.mrb[0].mxu0 %v322
      %v902 = vpop.f32.mrb[0].mxu0
      %v903 = vadd.f32 0.0, %v902
      %v904 = vpop.f32.mrb[0].mxu0
      %v905 = vpop.f32.mrb[0].mxu0
      %v906 = vadd.f32 0.0, %v905
      %v907 = vpop.f32.mrb[0].mxu0
      %908 = vdwg.mxu0
      %v909 = vpack.c.bf16 %v906, %v903
      %v910 = vld [vmem:[#allocation2] sm:$0xff]
      %v911 = vld [vmem:[#allocation2 + $0x8] sm:$0xff]
      %v912 = vld [vmem:[#allocation2 + $0x10] sm:$0xff]
      %v913 = vld [vmem:[#allocation2 + $0x18] sm:$0xff]
      %v914 = vld [vmem:[#allocation2 + $0x20] sm:$0xff]
      %v915 = vld [vmem:[#allocation2 + $0x28] sm:$0xff]
      %v916 = vld [vmem:[#allocation2 + $0x30] sm:$0xff]
      %v917 = vld [vmem:[#allocation2 + $0x38] sm:$0xff]
      %v918 = vld [vmem:[#allocation2 + $0x40] sm:$0xff]
      %v919 = vld [vmem:[#allocation2 + $0x48] sm:$0xff]
      %v920 = vld [vmem:[#allocation2 + $0x50] sm:$0xff]
      %v921 = vld [vmem:[#allocation2 + $0x58] sm:$0xff]
      %v922 = vld [vmem:[#allocation2 + $0x60] sm:$0xff]
      %v923 = vld [vmem:[#allocation2 + $0x68] sm:$0xff]
      %v924 = vld [vmem:[#allocation2 + $0x70] sm:$0xff]
      %v925 = vld [vmem:[#allocation2 + $0x78] sm:$0xff]
      %v926 = vld [vmem:[%s311] sm:$0xf]
      %v927 = vld [vmem:[%s311 + $0x4] sm:$0xf]
      %v928 = vld [vmem:[%s311 + $0x8] sm:$0xf]
      %v929 = vld [vmem:[%s311 + $0xc] sm:$0xf]
      %v930 = vld [vmem:[%s311 + $0x10] sm:$0xf]
      %v931 = vld [vmem:[%s311 + $0x14] sm:$0xf]
      %v932 = vld [vmem:[%s311 + $0x18] sm:$0xf]
      %v933 = vld [vmem:[%s311 + $0x1c] sm:$0xf]
      %v934 = vld [vmem:[%s311 + $0x20] sm:$0xf]
      %v935 = vld [vmem:[%s311 + $0x24] sm:$0xf]
      %v936 = vld [vmem:[%s311 + $0x28] sm:$0xf]
      %v937 = vld [vmem:[%s311 + $0x2c] sm:$0xf]
      %v938 = vld [vmem:[%s311 + $0x30] sm:$0xf]
      %v939 = vld [vmem:[%s311 + $0x34] sm:$0xf]
      %v940 = vld [vmem:[%s311 + $0x38] sm:$0xf]
      %v941 = vld [vmem:[%s311 + $0x3c] sm:$0xf]
      %v958 = vunpack.c.l.b16 %v926
      %v959 = vunpack.c.l.b16 %v927
      %v960 = vunpack.c.l.b16 %v928
      %v961 = vunpack.c.l.b16 %v929
      %v962 = vunpack.c.l.b16 %v930
      %v963 = vunpack.c.l.b16 %v931
      %v964 = vunpack.c.l.b16 %v932
      %v965 = vunpack.c.l.b16 %v933
      %v966 = vunpack.c.l.b16 %v934
      %v967 = vunpack.c.l.b16 %v935
      %v968 = vunpack.c.l.b16 %v936
      %v969 = vunpack.c.l.b16 %v937
      %v970 = vunpack.c.l.b16 %v938
      %v971 = vunpack.c.l.b16 %v939
      %v972 = vunpack.c.l.b16 %v940
      %v973 = vunpack.c.l.b16 %v941
      %v974 = vpack.c.b16 %v959, %v958
      %v975 = vpack.c.b16 %v961, %v960
      %v976 = vpack.c.b16 %v963, %v962
      %v977 = vpack.c.b16 %v965, %v964
      %v978 = vpack.c.b16 %v967, %v966
      %v979 = vpack.c.b16 %v969, %v968
      %v980 = vpack.c.b16 %v971, %v970
      %v981 = vpack.c.b16 %v973, %v972
      %v983 = vsel %vm467, %v974, 0
      %v986 = vsel %vm467, %v975, 0
      %v989 = vsel %vm467, %v976, 0
      %v992 = vsel %vm467, %v977, 0
      %v995 = vsel %vm467, %v978, 0
      %v998 = vsel %vm467, %v979, 0
      %v1001 = vsel %vm467, %v980, 0
      %v1004 = vsel %vm467, %v981, 0
      %1006 = vmatprep.subr.bf16.mxu0 0
      %1007 = vmatpush1.bf16.msra.mxu0 %v909
      %1008 = vmatprep.subr.bf16.mxu0 0
      %1009 = vmatpush1.bf16.msra.mxu0 0
      %1010 = vmatprep.subr.bf16.mxu0 0
      %1011 = vmatpush1.bf16.msra.mxu0 0
      %1012 = vmatprep.subr.bf16.mxu0 0
      %1013 = vmatpush1.bf16.msra.mxu0 0
      %1014 = vmatprep.subr.bf16.mxu0 0
      %1015 = vmatpush1.bf16.msra.mxu0 0
      %1016 = vmatprep.subr.bf16.mxu0 0
      %1017 = vmatpush1.bf16.msra.mxu0 0
      %1018 = vmatprep.subr.bf16.mxu0 0
      %1019 = vmatpush1.bf16.msra.mxu0 0
      %1020 = vmatprep.subr.bf16.mxu0 0
      %1021 = vmatpush1.bf16.msra.mxu0 0
      %1022 = vmatprep.subr.bf16.mxu0 0
      %1023 = vmatpush1.bf16.msra.mxu0 0
      %1024 = vmatprep.subr.bf16.mxu0 0
      %1025 = vmatpush1.bf16.msra.mxu0 0
      %1026 = vmatprep.subr.bf16.mxu0 0
      %1027 = vmatpush1.bf16.msra.mxu0 0
      %1028 = vmatprep.subr.bf16.mxu0 0
      %1029 = vmatpush1.bf16.msra.mxu0 0
      %1030 = vmatprep.subr.bf16.mxu0 0
      %1031 = vmatpush1.bf16.msra.mxu0 0
      %1032 = vmatprep.subr.bf16.mxu0 0
      %1033 = vmatpush1.bf16.msra.mxu0 0
      %1034 = vmatprep.subr.bf16.mxu0 0
      %1035 = vmatpush1.bf16.msra.mxu0 0
      %1036 = vmatprep.subr.bf16.mxu0 0
      %1037 = vmatpush1.bf16.msra.mxu0 0
      %1038 = vmatprep.mubr.bf16.mxu0 0
      %1039 = vmatmul.mubr.bf16.gmra.mrb[0].mxu0 %v983
      %v1040 = vpop.f32.mrb[0].mxu0
      %v1041 = vadd.f32 0.0, %v1040
      %v1042 = vpop.f32.mrb[0].mxu0
      %v1043 = vpop.f32.mrb[0].mxu0
      %v1044 = vadd.f32 0.0, %v1043
      %v1045 = vpop.f32.mrb[0].mxu0
      %1046 = vmatprep.mubr.bf16.mxu0 0
      %1047 = vmatmul.mubr.bf16.gmra.mrb[0].mxu0 %v986
      %v1048 = vpop.f32.mrb[0].mxu0
      %v1049 = vadd.f32 0.0, %v1048
      %v1050 = vpop.f32.mrb[0].mxu0
      %v1051 = vpop.f32.mrb[0].mxu0
      %v1052 = vadd.f32 0.0, %v1051
      %v1053 = vpop.f32.mrb[0].mxu0
      %1054 = vmatprep.mubr.bf16.mxu0 0
      %1055 = vmatmul.mubr.bf16.gmra.mrb[0].mxu0 %v989
      %v1056 = vpop.f32.mrb[0].mxu0
      %v1057 = vadd.f32 0.0, %v1056
      %v1058 = vpop.f32.mrb[0].mxu0
      %v1059 = vpop.f32.mrb[0].mxu0
      %v1060 = vadd.f32 0.0, %v1059
      %v1061 = vpop.f32.mrb[0].mxu0
      %1062 = vmatprep.mubr.bf16.mxu0 0
      %1063 = vmatmul.mubr.bf16.gmra.mrb[0].mxu0 %v992
      %v1064 = vpop.f32.mrb[0].mxu0
      %v1065 = vadd.f32 0.0, %v1064
      %v1066 = vpop.f32.mrb[0].mxu0
      %v1067 = vpop.f32.mrb[0].mxu0
      %v1068 = vadd.f32 0.0, %v1067
      %v1069 = vpop.f32.mrb[0].mxu0
      %1070 = vmatprep.mubr.bf16.mxu0 0
      %1071 = vmatmul.mubr.bf16.gmra.mrb[0].mxu0 %v995
      %v1072 = vpop.f32.mrb[0].mxu0
      %v1073 = vadd.f32 0.0, %v1072
      %v1074 = vpop.f32.mrb[0].mxu0
      %v1075 = vpop.f32.mrb[0].mxu0
      %v1076 = vadd.f32 0.0, %v1075
      %v1077 = vpop.f32.mrb[0].mxu0
      %1078 = vmatprep.mubr.bf16.mxu0 0
      %1079 = vmatmul.mubr.bf16.gmra.mrb[0].mxu0 %v998
      %v1080 = vpop.f32.mrb[0].mxu0
      %v1081 = vadd.f32 0.0, %v1080
      %v1082 = vpop.f32.mrb[0].mxu0
      %v1083 = vpop.f32.mrb[0].mxu0
      %v1084 = vadd.f32 0.0, %v1083
      %v1085 = vpop.f32.mrb[0].mxu0
      %1086 = vmatprep.mubr.bf16.mxu0 0
      %1087 = vmatmul.mubr.bf16.gmra.mrb[0].mxu0 %v1001
      %v1088 = vpop.f32.mrb[0].mxu0
      %v1089 = vadd.f32 0.0, %v1088
      %v1090 = vpop.f32.mrb[0].mxu0
      %v1091 = vpop.f32.mrb[0].mxu0
      %v1092 = vadd.f32 0.0, %v1091
      %v1093 = vpop.f32.mrb[0].mxu0
      %1094 = vmatprep.mubr.bf16.mxu0 0
      %1095 = vmatmul.mubr.bf16.gmra.mrb[0].mxu0 %v1004
      %v1096 = vpop.f32.mrb[0].mxu0
      %v1097 = vadd.f32 0.0, %v1096
      %v1098 = vpop.f32.mrb[0].mxu0
      %v1099 = vpop.f32.mrb[0].mxu0
      %v1100 = vadd.f32 0.0, %v1099
      %v1101 = vpop.f32.mrb[0].mxu0
      %1102 = vdwg.mxu0
      %v1103 = vadd.f32 %v910, %v1041
      %v1104 = vadd.f32 %v911, %v1044
      %v1105 = vadd.f32 %v912, %v1049
      %v1106 = vadd.f32 %v913, %v1052
      %v1107 = vadd.f32 %v914, %v1057
      %v1108 = vadd.f32 %v915, %v1060
      %v1109 = vadd.f32 %v916, %v1065
      %v1110 = vadd.f32 %v917, %v1068
      %v1111 = vadd.f32 %v918, %v1073
      %v1112 = vadd.f32 %v919, %v1076
      %v1113 = vadd.f32 %v920, %v1081
      %v1114 = vadd.f32 %v921, %v1084
      %v1115 = vadd.f32 %v922, %v1089
      %v1116 = vadd.f32 %v923, %v1092
      %v1117 = vadd.f32 %v924, %v1097
      %v1118 = vadd.f32 %v925, %v1100
      %vm1119 = vcmask 64512
      %1120 = vst.msk [vmem:[#allocation2] sm:$0xff] %vm1119, %v1103
      %1121 = vst.msk [vmem:[#allocation2 + $0x8] sm:$0xff] %vm1119, %v1104
      %1122 = vst.msk [vmem:[#allocation2 + $0x10] sm:$0xff] %vm1119, %v1105
      %1123 = vst.msk [vmem:[#allocation2 + $0x18] sm:$0xff] %vm1119, %v1106
      %1124 = vst.msk [vmem:[#allocation2 + $0x20] sm:$0xff] %vm1119, %v1107
      %1125 = vst.msk [vmem:[#allocation2 + $0x28] sm:$0xff] %vm1119, %v1108
      %1126 = vst.msk [vmem:[#allocation2 + $0x30] sm:$0xff] %vm1119, %v1109
      %1127 = vst.msk [vmem:[#allocation2 + $0x38] sm:$0xff] %vm1119, %v1110
      %1128 = vst.msk [vmem:[#allocation2 + $0x40] sm:$0xff] %vm1119, %v1111
      %1129 = vst.msk [vmem:[#allocation2 + $0x48] sm:$0xff] %vm1119, %v1112
      %1130 = vst.msk [vmem:[#allocation2 + $0x50] sm:$0xff] %vm1119, %v1113
      %1131 = vst.msk [vmem:[#allocation2 + $0x58] sm:$0xff] %vm1119, %v1114
      %1132 = vst.msk [vmem:[#allocation2 + $0x60] sm:$0xff] %vm1119, %v1115
      %1133 = vst.msk [vmem:[#allocation2 + $0x68] sm:$0xff] %vm1119, %v1116
      %1134 = vst.msk [vmem:[#allocation2 + $0x70] sm:$0xff] %vm1119, %v1117
      %1135 = vst.msk [vmem:[#allocation2 + $0x78] sm:$0xff] %vm1119, %v1118
      %v1136 = vld [vmem:[#allocation3] sm:$0xff]
      %v1137 = vld [vmem:[#allocation3 + $0x8] sm:$0xff]
      %v1138 = vld [vmem:[#allocation3 + $0x10] sm:$0xff]
      %v1139 = vld [vmem:[#allocation3 + $0x18] sm:$0xff]
      %v1140 = vld [vmem:[#allocation3 + $0x20] sm:$0xff]
      %v1141 = vld [vmem:[#allocation3 + $0x28] sm:$0xff]
      %v1142 = vld [vmem:[#allocation3 + $0x30] sm:$0xff]
      %v1143 = vld [vmem:[#allocation3 + $0x38] sm:$0xff]
      %v1144 = vld [vmem:[#allocation3 + $0x40] sm:$0xff]
      %v1145 = vld [vmem:[#allocation3 + $0x48] sm:$0xff]
      %v1146 = vld [vmem:[#allocation3 + $0x50] sm:$0xff]
      %v1147 = vld [vmem:[#allocation3 + $0x58] sm:$0xff]
      %v1148 = vld [vmem:[#allocation3 + $0x60] sm:$0xff]
      %v1149 = vld [vmem:[#allocation3 + $0x68] sm:$0xff]
      %v1150 = vld [vmem:[#allocation3 + $0x70] sm:$0xff]
      %v1151 = vld [vmem:[#allocation3 + $0x78] sm:$0xff]
      %s1152 = scalar_lea.vmem %s311, 64
      %v1153 = vld [vmem:[%s1152] sm:$0xf]
      %v1154 = vld [vmem:[%s1152 + $0x4] sm:$0xf]
      %v1155 = vld [vmem:[%s1152 + $0x8] sm:$0xf]
      %v1156 = vld [vmem:[%s1152 + $0xc] sm:$0xf]
      %v1157 = vld [vmem:[%s1152 + $0x10] sm:$0xf]
      %v1158 = vld [vmem:[%s1152 + $0x14] sm:$0xf]
      %v1159 = vld [vmem:[%s1152 + $0x18] sm:$0xf]
      %v1160 = vld [vmem:[%s1152 + $0x1c] sm:$0xf]
      %v1161 = vld [vmem:[%s1152 + $0x20] sm:$0xf]
      %v1162 = vld [vmem:[%s1152 + $0x24] sm:$0xf]
      %v1163 = vld [vmem:[%s1152 + $0x28] sm:$0xf]
      %v1164 = vld [vmem:[%s1152 + $0x2c] sm:$0xf]
      %v1165 = vld [vmem:[%s1152 + $0x30] sm:$0xf]
      %v1166 = vld [vmem:[%s1152 + $0x34] sm:$0xf]
      %v1167 = vld [vmem:[%s1152 + $0x38] sm:$0xf]
      %v1168 = vld [vmem:[%s1152 + $0x3c] sm:$0xf]
      %v1185 = vunpack.c.l.b16 %v1153
      %v1186 = vunpack.c.l.b16 %v1154
      %v1187 = vunpack.c.l.b16 %v1155
      %v1188 = vunpack.c.l.b16 %v1156
      %v1189 = vunpack.c.l.b16 %v1157
      %v1190 = vunpack.c.l.b16 %v1158
      %v1191 = vunpack.c.l.b16 %v1159
      %v1192 = vunpack.c.l.b16 %v1160
      %v1193 = vunpack.c.l.b16 %v1161
      %v1194 = vunpack.c.l.b16 %v1162
      %v1195 = vunpack.c.l.b16 %v1163
      %v1196 = vunpack.c.l.b16 %v1164
      %v1197 = vunpack.c.l.b16 %v1165
      %v1198 = vunpack.c.l.b16 %v1166
      %v1199 = vunpack.c.l.b16 %v1167
      %v1200 = vunpack.c.l.b16 %v1168
      %v1201 = vpack.c.b16 %v1186, %v1185
      %v1202 = vpack.c.b16 %v1188, %v1187
      %v1203 = vpack.c.b16 %v1190, %v1189
      %v1204 = vpack.c.b16 %v1192, %v1191
      %v1205 = vpack.c.b16 %v1194, %v1193
      %v1206 = vpack.c.b16 %v1196, %v1195
      %v1207 = vpack.c.b16 %v1198, %v1197
      %v1208 = vpack.c.b16 %v1200, %v1199
      %1210 = vrot.lane.b32.xlu0 %v909, 120
      %v1211 = vpop.permute.xlu0 %1210
      %v1214 = vsel %vm467, %v1201, 0
      %v1217 = vsel %vm467, %v1202, 0
      %v1220 = vsel %vm467, %v1203, 0
      %v1223 = vsel %vm467, %v1204, 0
      %v1226 = vsel %vm467, %v1205, 0
      %v1229 = vsel %vm467, %v1206, 0
      %v1232 = vsel %vm467, %v1207, 0
      %v1235 = vsel %vm467, %v1208, 0
      %1237 = vmatprep.subr.bf16.mxu0 0
      %1238 = vmatpush1.bf16.msra.mxu0 %v1211
      %1239 = vmatprep.subr.bf16.mxu0 0
      %1240 = vmatpush1.bf16.msra.mxu0 0
      %1241 = vmatprep.subr.bf16.mxu0 0
      %1242 = vmatpush1.bf16.msra.mxu0 0
      %1243 = vmatprep.subr.bf16.mxu0 0
      %1244 = vmatpush1.bf16.msra.mxu0 0
      %1245 = vmatprep.subr.bf16.mxu0 0
      %1246 = vmatpush1.bf16.msra.mxu0 0
      %1247 = vmatprep.subr.bf16.mxu0 0
      %1248 = vmatpush1.bf16.msra.mxu0 0
      %1249 = vmatprep.subr.bf16.mxu0 0
      %1250 = vmatpush1.bf16.msra.mxu0 0
      %1251 = vmatprep.subr.bf16.mxu0 0
      %1252 = vmatpush1.bf16.msra.mxu0 0
      %1253 = vmatprep.subr.bf16.mxu0 0
      %1254 = vmatpush1.bf16.msra.mxu0 0
      %1255 = vmatprep.subr.bf16.mxu0 0
      %1256 = vmatpush1.bf16.msra.mxu0 0
      %1257 = vmatprep.subr.bf16.mxu0 0
      %1258 = vmatpush1.bf16.msra.mxu0 0
      %1259 = vmatprep.subr.bf16.mxu0 0
      %1260 = vmatpush1.bf16.msra.mxu0 0
      %1261 = vmatprep.subr.bf16.mxu0 0
      %1262 = vmatpush1.bf16.msra.mxu0 0
      %1263 = vmatprep.subr.bf16.mxu0 0
      %1264 = vmatpush1.bf16.msra.mxu0 0
      %1265 = vmatprep.subr.bf16.mxu0 0
      %1266 = vmatpush1.bf16.msra.mxu0 0
      %1267 = vmatprep.subr.bf16.mxu0 0
      %1268 = vmatpush1.bf16.msra.mxu0 0
      %1269 = vmatprep.mubr.bf16.mxu0 0
      %1270 = vmatmul.mubr.bf16.gmra.mrb[0].mxu0 %v1214
      %v1271 = vpop.f32.mrb[0].mxu0
      %v1272 = vadd.f32 0.0, %v1271
      %v1273 = vpop.f32.mrb[0].mxu0
      %v1274 = vpop.f32.mrb[0].mxu0
      %v1275 = vadd.f32 0.0, %v1274
      %v1276 = vpop.f32.mrb[0].mxu0
      %1277 = vmatprep.mubr.bf16.mxu0 0
      %1278 = vmatmul.mubr.bf16.gmra.mrb[0].mxu0 %v1217
      %v1279 = vpop.f32.mrb[0].mxu0
      %v1280 = vadd.f32 0.0, %v1279
      %v1281 = vpop.f32.mrb[0].mxu0
      %v1282 = vpop.f32.mrb[0].mxu0
      %v1283 = vadd.f32 0.0, %v1282
      %v1284 = vpop.f32.mrb[0].mxu0
      %1285 = vmatprep.mubr.bf16.mxu0 0
      %1286 = vmatmul.mubr.bf16.gmra.mrb[0].mxu0 %v1220
      %v1287 = vpop.f32.mrb[0].mxu0
      %v1288 = vadd.f32 0.0, %v1287
      %v1289 = vpop.f32.mrb[0].mxu0
      %v1290 = vpop.f32.mrb[0].mxu0
      %v1291 = vadd.f32 0.0, %v1290
      %v1292 = vpop.f32.mrb[0].mxu0
      %1293 = vmatprep.mubr.bf16.mxu0 0
      %1294 = vmatmul.mubr.bf16.gmra.mrb[0].mxu0 %v1223
      %v1295 = vpop.f32.mrb[0].mxu0
      %v1296 = vadd.f32 0.0, %v1295
      %v1297 = vpop.f32.mrb[0].mxu0
      %v1298 = vpop.f32.mrb[0].mxu0
      %v1299 = vadd.f32 0.0, %v1298
      %v1300 = vpop.f32.mrb[0].mxu0
      %1301 = vmatprep.mubr.bf16.mxu0 0
      %1302 = vmatmul.mubr.bf16.gmra.mrb[0].mxu0 %v1226
      %v1303 = vpop.f32.mrb[0].mxu0
      %v1304 = vadd.f32 0.0, %v1303
      %v1305 = vpop.f32.mrb[0].mxu0
      %v1306 = vpop.f32.mrb[0].mxu0
      %v1307 = vadd.f32 0.0, %v1306
      %v1308 = vpop.f32.mrb[0].mxu0
      %1309 = vmatprep.mubr.bf16.mxu0 0
      %1310 = vmatmul.mubr.bf16.gmra.mrb[0].mxu0 %v1229
      %v1311 = vpop.f32.mrb[0].mxu0
      %v1312 = vadd.f32 0.0, %v1311
      %v1313 = vpop.f32.mrb[0].mxu0
      %v1314 = vpop.f32.mrb[0].mxu0
      %v1315 = vadd.f32 0.0, %v1314
      %v1316 = vpop.f32.mrb[0].mxu0
      %1317 = vmatprep.mubr.bf16.mxu0 0
      %1318 = vmatmul.mubr.bf16.gmra.mrb[0].mxu0 %v1232
      %v1319 = vpop.f32.mrb[0].mxu0
      %v1320 = vadd.f32 0.0, %v1319
      %v1321 = vpop.f32.mrb[0].mxu0
      %v1322 = vpop.f32.mrb[0].mxu0
      %v1323 = vadd.f32 0.0, %v1322
      %v1324 = vpop.f32.mrb[0].mxu0
      %1325 = vmatprep.mubr.bf16.mxu0 0
      %1326 = vmatmul.mubr.bf16.gmra.mrb[0].mxu0 %v1235
      %v1327 = vpop.f32.mrb[0].mxu0
      %v1328 = vadd.f32 0.0, %v1327
      %v1329 = vpop.f32.mrb[0].mxu0
      %v1330 = vpop.f32.mrb[0].mxu0
      %v1331 = vadd.f32 0.0, %v1330
      %v1332 = vpop.f32.mrb[0].mxu0
      %1333 = vdwg.mxu0
      %v1334 = vadd.f32 %v1136, %v1272
      %v1335 = vadd.f32 %v1137, %v1275
      %v1336 = vadd.f32 %v1138, %v1280
      %v1337 = vadd.f32 %v1139, %v1283
      %v1338 = vadd.f32 %v1140, %v1288
      %v1339 = vadd.f32 %v1141, %v1291
      %v1340 = vadd.f32 %v1142, %v1296
      %v1341 = vadd.f32 %v1143, %v1299
      %v1342 = vadd.f32 %v1144, %v1304
      %v1343 = vadd.f32 %v1145, %v1307
      %v1344 = vadd.f32 %v1146, %v1312
      %v1345 = vadd.f32 %v1147, %v1315
      %v1346 = vadd.f32 %v1148, %v1320
      %v1347 = vadd.f32 %v1149, %v1323
      %v1348 = vadd.f32 %v1150, %v1328
      %v1349 = vadd.f32 %v1151, %v1331
      %1350 = vst.msk [vmem:[#allocation3] sm:$0xff] %vm1119, %v1334
      %1351 = vst.msk [vmem:[#allocation3 + $0x8] sm:$0xff] %vm1119, %v1335
      %1352 = vst.msk [vmem:[#allocation3 + $0x10] sm:$0xff] %vm1119, %v1336
      %1353 = vst.msk [vmem:[#allocation3 + $0x18] sm:$0xff] %vm1119, %v1337
      %1354 = vst.msk [vmem:[#allocation3 + $0x20] sm:$0xff] %vm1119, %v1338
      %1355 = vst.msk [vmem:[#allocation3 + $0x28] sm:$0xff] %vm1119, %v1339
      %1356 = vst.msk [vmem:[#allocation3 + $0x30] sm:$0xff] %vm1119, %v1340
      %1357 = vst.msk [vmem:[#allocation3 + $0x38] sm:$0xff] %vm1119, %v1341
      %1358 = vst.msk [vmem:[#allocation3 + $0x40] sm:$0xff] %vm1119, %v1342
      %1359 = vst.msk [vmem:[#allocation3 + $0x48] sm:$0xff] %vm1119, %v1343
      %1360 = vst.msk [vmem:[#allocation3 + $0x50] sm:$0xff] %vm1119, %v1344
      %1361 = vst.msk [vmem:[#allocation3 + $0x58] sm:$0xff] %vm1119, %v1345
      %1362 = vst.msk [vmem:[#allocation3 + $0x60] sm:$0xff] %vm1119, %v1346
      %1363 = vst.msk [vmem:[#allocation3 + $0x68] sm:$0xff] %vm1119, %v1347
      %1364 = vst.msk [vmem:[#allocation3 + $0x70] sm:$0xff] %vm1119, %v1348
      %1365 = vst.msk [vmem:[#allocation3 + $0x78] sm:$0xff] %vm1119, %v1349
      %v1366 = vld [vmem:[#allocation4] sm:$0xff]
      %v1367 = vld [vmem:[#allocation4 + $0x8] sm:$0xff]
      %v1368 = vld [vmem:[#allocation4 + $0x10] sm:$0xff]
      %v1369 = vld [vmem:[#allocation4 + $0x18] sm:$0xff]
      %v1370 = vld [vmem:[#allocation4 + $0x20] sm:$0xff]
      %v1371 = vld [vmem:[#allocation4 + $0x28] sm:$0xff]
      %v1372 = vld [vmem:[#allocation4 + $0x30] sm:$0xff]
      %v1373 = vld [vmem:[#allocation4 + $0x38] sm:$0xff]
      %v1374 = vld [vmem:[#allocation4 + $0x40] sm:$0xff]
      %v1375 = vld [vmem:[#allocation4 + $0x48] sm:$0xff]
      %v1376 = vld [vmem:[#allocation4 + $0x50] sm:$0xff]
      %v1377 = vld [vmem:[#allocation4 + $0x58] sm:$0xff]
      %v1378 = vld [vmem:[#allocation4 + $0x60] sm:$0xff]
      %v1379 = vld [vmem:[#allocation4 + $0x68] sm:$0xff]
      %v1380 = vld [vmem:[#allocation4 + $0x70] sm:$0xff]
      %v1381 = vld [vmem:[#allocation4 + $0x78] sm:$0xff]
      %s1382 = scalar_lea.vmem %s311, 128
      %v1383 = vld [vmem:[%s1382] sm:$0xf]
      %v1384 = vld [vmem:[%s1382 + $0x4] sm:$0xf]
      %v1385 = vld [vmem:[%s1382 + $0x8] sm:$0xf]
      %v1386 = vld [vmem:[%s1382 + $0xc] sm:$0xf]
      %v1387 = vld [vmem:[%s1382 + $0x10] sm:$0xf]
      %v1388 = vld [vmem:[%s1382 + $0x14] sm:$0xf]
      %v1389 = vld [vmem:[%s1382 + $0x18] sm:$0xf]
      %v1390 = vld [vmem:[%s1382 + $0x1c] sm:$0xf]
      %v1391 = vld [vmem:[%s1382 + $0x20] sm:$0xf]
      %v1392 = vld [vmem:[%s1382 + $0x24] sm:$0xf]
      %v1393 = vld [vmem:[%s1382 + $0x28] sm:$0xf]
      %v1394 = vld [vmem:[%s1382 + $0x2c] sm:$0xf]
      %v1395 = vld [vmem:[%s1382 + $0x30] sm:$0xf]
      %v1396 = vld [vmem:[%s1382 + $0x34] sm:$0xf]
      %v1397 = vld [vmem:[%s1382 + $0x38] sm:$0xf]
      %v1398 = vld [vmem:[%s1382 + $0x3c] sm:$0xf]
      %v1415 = vunpack.c.l.b16 %v1383
      %v1416 = vunpack.c.l.b16 %v1384
      %v1417 = vunpack.c.l.b16 %v1385
      %v1418 = vunpack.c.l.b16 %v1386
      %v1419 = vunpack.c.l.b16 %v1387
      %v1420 = vunpack.c.l.b16 %v1388
      %v1421 = vunpack.c.l.b16 %v1389
      %v1422 = vunpack.c.l.b16 %v1390
      %v1423 = vunpack.c.l.b16 %v1391
      %v1424 = vunpack.c.l.b16 %v1392
      %v1425 = vunpack.c.l.b16 %v1393
      %v1426 = vunpack.c.l.b16 %v1394
      %v1427 = vunpack.c.l.b16 %v1395
      %v1428 = vunpack.c.l.b16 %v1396
      %v1429 = vunpack.c.l.b16 %v1397
      %v1430 = vunpack.c.l.b16 %v1398
      %v1431 = vpack.c.b16 %v1416, %v1415
      %v1432 = vpack.c.b16 %v1418, %v1417
      %v1433 = vpack.c.b16 %v1420, %v1419
      %v1434 = vpack.c.b16 %v1422, %v1421
      %v1435 = vpack.c.b16 %v1424, %v1423
      %v1436 = vpack.c.b16 %v1426, %v1425
      %v1437 = vpack.c.b16 %v1428, %v1427
      %v1438 = vpack.c.b16 %v1430, %v1429
      %1439 = vrot.lane.b32.xlu0 %v909, 112
      %v1440 = vpop.permute.xlu0 %1439
      %v1443 = vsel %vm467, %v1431, 0
      %v1446 = vsel %vm467, %v1432, 0
      %v1449 = vsel %vm467, %v1433, 0
      %v1452 = vsel %vm467, %v1434, 0
      %v1455 = vsel %vm467, %v1435, 0
      %v1458 = vsel %vm467, %v1436, 0
      %v1461 = vsel %vm467, %v1437, 0
      %v1464 = vsel %vm467, %v1438, 0
      %1466 = vmatprep.subr.bf16.mxu0 0
      %1467 = vmatpush1.bf16.msra.mxu0 %v1440
      %1468 = vmatprep.subr.bf16.mxu0 0
      %1469 = vmatpush1.bf16.msra.mxu0 0
      %1470 = vmatprep.subr.bf16.mxu0 0
      %1471 = vmatpush1.bf16.msra.mxu0 0
      %1472 = vmatprep.subr.bf16.mxu0 0
      %1473 = vmatpush1.bf16.msra.mxu0 0
      %1474 = vmatprep.subr.bf16.mxu0 0
      %1475 = vmatpush1.bf16.msra.mxu0 0
      %1476 = vmatprep.subr.bf16.mxu0 0
      %1477 = vmatpush1.bf16.msra.mxu0 0
      %1478 = vmatprep.subr.bf16.mxu0 0
      %1479 = vmatpush1.bf16.msra.mxu0 0
      %1480 = vmatprep.subr.bf16.mxu0 0
      %1481 = vmatpush1.bf16.msra.mxu0 0
      %1482 = vmatprep.subr.bf16.mxu0 0
      %1483 = vmatpush1.bf16.msra.mxu0 0
      %1484 = vmatprep.subr.bf16.mxu0 0
      %1485 = vmatpush1.bf16.msra.mxu0 0
      %1486 = vmatprep.subr.bf16.mxu0 0
      %1487 = vmatpush1.bf16.msra.mxu0 0
      %1488 = vmatprep.subr.bf16.mxu0 0
      %1489 = vmatpush1.bf16.msra.mxu0 0
      %1490 = vmatprep.subr.bf16.mxu0 0
      %1491 = vmatpush1.bf16.msra.mxu0 0
      %1492 = vmatprep.subr.bf16.mxu0 0
      %1493 = vmatpush1.bf16.msra.mxu0 0
      %1494 = vmatprep.subr.bf16.mxu0 0
      %1495 = vmatpush1.bf16.msra.mxu0 0
      %1496 = vmatprep.subr.bf16.mxu0 0
      %1497 = vmatpush1.bf16.msra.mxu0 0
      %1498 = vmatprep.mubr.bf16.mxu0 0
      %1499 = vmatmul.mubr.bf16.gmra.mrb[0].mxu0 %v1443
      %v1500 = vpop.f32.mrb[0].mxu0
      %v1501 = vadd.f32 0.0, %v1500
      %v1502 = vpop.f32.mrb[0].mxu0
      %v1503 = vpop.f32.mrb[0].mxu0
      %v1504 = vadd.f32 0.0, %v1503
      %v1505 = vpop.f32.mrb[0].mxu0
      %1506 = vmatprep.mubr.bf16.mxu0 0
      %1507 = vmatmul.mubr.bf16.gmra.mrb[0].mxu0 %v1446
      %v1508 = vpop.f32.mrb[0].mxu0
      %v1509 = vadd.f32 0.0, %v1508
      %v1510 = vpop.f32.mrb[0].mxu0
      %v1511 = vpop.f32.mrb[0].mxu0
      %v1512 = vadd.f32 0.0, %v1511
      %v1513 = vpop.f32.mrb[0].mxu0
      %1514 = vmatprep.mubr.bf16.mxu0 0
      %1515 = vmatmul.mubr.bf16.gmra.mrb[0].mxu0 %v1449
      %v1516 = vpop.f32.mrb[0].mxu0
      %v1517 = vadd.f32 0.0, %v1516
      %v1518 = vpop.f32.mrb[0].mxu0
      %v1519 = vpop.f32.mrb[0].mxu0
      %v1520 = vadd.f32 0.0, %v1519
      %v1521 = vpop.f32.mrb[0].mxu0
      %1522 = vmatprep.mubr.bf16.mxu0 0
      %1523 = vmatmul.mubr.bf16.gmra.mrb[0].mxu0 %v1452
      %v1524 = vpop.f32.mrb[0].mxu0
      %v1525 = vadd.f32 0.0, %v1524
      %v1526 = vpop.f32.mrb[0].mxu0
      %v1527 = vpop.f32.mrb[0].mxu0
      %v1528 = vadd.f32 0.0, %v1527
      %v1529 = vpop.f32.mrb[0].mxu0
      %1530 = vmatprep.mubr.bf16.mxu0 0
      %1531 = vmatmul.mubr.bf16.gmra.mrb[0].mxu0 %v1455
      %v1532 = vpop.f32.mrb[0].mxu0
      %v1533 = vadd.f32 0.0, %v1532
      %v1534 = vpop.f32.mrb[0].mxu0
      %v1535 = vpop.f32.mrb[0].mxu0
      %v1536 = vadd.f32 0.0, %v1535
      %v1537 = vpop.f32.mrb[0].mxu0
      %1538 = vmatprep.mubr.bf16.mxu0 0
      %1539 = vmatmul.mubr.bf16.gmra.mrb[0].mxu0 %v1458
      %v1540 = vpop.f32.mrb[0].mxu0
      %v1541 = vadd.f32 0.0, %v1540
      %v1542 = vpop.f32.mrb[0].mxu0
      %v1543 = vpop.f32.mrb[0].mxu0
      %v1544 = vadd.f32 0.0, %v1543
      %v1545 = vpop.f32.mrb[0].mxu0
      %1546 = vmatprep.mubr.bf16.mxu0 0
      %1547 = vmatmul.mubr.bf16.gmra.mrb[0].mxu0 %v1461
      %v1548 = vpop.f32.mrb[0].mxu0
      %v1549 = vadd.f32 0.0, %v1548
      %v1550 = vpop.f32.mrb[0].mxu0
      %v1551 = vpop.f32.mrb[0].mxu0
      %v1552 = vadd.f32 0.0, %v1551
      %v1553 = vpop.f32.mrb[0].mxu0
      %1554 = vmatprep.mubr.bf16.mxu0 0
      %1555 = vmatmul.mubr.bf16.gmra.mrb[0].mxu0 %v1464
      %v1556 = vpop.f32.mrb[0].mxu0
      %v1557 = vadd.f32 0.0, %v1556
      %v1558 = vpop.f32.mrb[0].mxu0
      %v1559 = vpop.f32.mrb[0].mxu0
      %v1560 = vadd.f32 0.0, %v1559
      %v1561 = vpop.f32.mrb[0].mxu0
      %1562 = vdwg.mxu0
      %v1563 = vadd.f32 %v1366, %v1501
      %v1564 = vadd.f32 %v1367, %v1504
      %v1565 = vadd.f32 %v1368, %v1509
      %v1566 = vadd.f32 %v1369, %v1512
      %v1567 = vadd.f32 %v1370, %v1517
      %v1568 = vadd.f32 %v1371, %v1520
      %v1569 = vadd.f32 %v1372, %v1525
      %v1570 = vadd.f32 %v1373, %v1528
      %v1571 = vadd.f32 %v1374, %v1533
      %v1572 = vadd.f32 %v1375, %v1536
      %v1573 = vadd.f32 %v1376, %v1541
      %v1574 = vadd.f32 %v1377, %v1544
      %v1575 = vadd.f32 %v1378, %v1549
      %v1576 = vadd.f32 %v1379, %v1552
      %v1577 = vadd.f32 %v1380, %v1557
      %v1578 = vadd.f32 %v1381, %v1560
      %1579 = vst.msk [vmem:[#allocation4] sm:$0xff] %vm467, %v1563
      %1580 = vst.msk [vmem:[#allocation4 + $0x8] sm:$0xff] %vm467, %v1564
      %1581 = vst.msk [vmem:[#allocation4 + $0x10] sm:$0xff] %vm467, %v1565
      %1582 = vst.msk [vmem:[#allocation4 + $0x18] sm:$0xff] %vm467, %v1566
      %1583 = vst.msk [vmem:[#allocation4 + $0x20] sm:$0xff] %vm467, %v1567
      %1584 = vst.msk [vmem:[#allocation4 + $0x28] sm:$0xff] %vm467, %v1568
      %1585 = vst.msk [vmem:[#allocation4 + $0x30] sm:$0xff] %vm467, %v1569
      %1586 = vst.msk [vmem:[#allocation4 + $0x38] sm:$0xff] %vm467, %v1570
      %1587 = vst.msk [vmem:[#allocation4 + $0x40] sm:$0xff] %vm467, %v1571
      %1588 = vst.msk [vmem:[#allocation4 + $0x48] sm:$0xff] %vm467, %v1572
      %1589 = vst.msk [vmem:[#allocation4 + $0x50] sm:$0xff] %vm467, %v1573
      %1590 = vst.msk [vmem:[#allocation4 + $0x58] sm:$0xff] %vm467, %v1574
      %1591 = vst.msk [vmem:[#allocation4 + $0x60] sm:$0xff] %vm467, %v1575
      %1592 = vst.msk [vmem:[#allocation4 + $0x68] sm:$0xff] %vm467, %v1576
      %1593 = vst.msk [vmem:[#allocation4 + $0x70] sm:$0xff] %vm467, %v1577
      %1594 = vst.msk [vmem:[#allocation4 + $0x78] sm:$0xff] %vm467, %v1578
      %v1595 = vld [vmem:[#allocation5] sm:$0xff]
      %v1596 = vld [vmem:[#allocation5 + $0x8] sm:$0xff]
      %v1597 = vld [vmem:[#allocation5 + $0x10] sm:$0xff]
      %v1598 = vld [vmem:[#allocation5 + $0x18] sm:$0xff]
      %v1599 = vld [vmem:[#allocation5 + $0x20] sm:$0xff]
      %v1600 = vld [vmem:[#allocation5 + $0x28] sm:$0xff]
      %v1601 = vld [vmem:[#allocation5 + $0x30] sm:$0xff]
      %v1602 = vld [vmem:[#allocation5 + $0x38] sm:$0xff]
      %v1603 = vld [vmem:[#allocation5 + $0x40] sm:$0xff]
      %v1604 = vld [vmem:[#allocation5 + $0x48] sm:$0xff]
      %v1605 = vld [vmem:[#allocation5 + $0x50] sm:$0xff]
      %v1606 = vld [vmem:[#allocation5 + $0x58] sm:$0xff]
      %v1607 = vld [vmem:[#allocation5 + $0x60] sm:$0xff]
      %v1608 = vld [vmem:[#allocation5 + $0x68] sm:$0xff]
      %v1609 = vld [vmem:[#allocation5 + $0x70] sm:$0xff]
      %v1610 = vld [vmem:[#allocation5 + $0x78] sm:$0xff]
      %s1611 = scalar_lea.vmem %s311, 192
      %v1612 = vld [vmem:[%s1611] sm:$0xf]
      %v1613 = vld [vmem:[%s1611 + $0x4] sm:$0xf]
      %v1614 = vld [vmem:[%s1611 + $0x8] sm:$0xf]
      %v1615 = vld [vmem:[%s1611 + $0xc] sm:$0xf]
      %v1616 = vld [vmem:[%s1611 + $0x10] sm:$0xf]
      %v1617 = vld [vmem:[%s1611 + $0x14] sm:$0xf]
      %v1618 = vld [vmem:[%s1611 + $0x18] sm:$0xf]
      %v1619 = vld [vmem:[%s1611 + $0x1c] sm:$0xf]
      %v1620 = vld [vmem:[%s1611 + $0x20] sm:$0xf]
      %v1621 = vld [vmem:[%s1611 + $0x24] sm:$0xf]
      %v1622 = vld [vmem:[%s1611 + $0x28] sm:$0xf]
      %v1623 = vld [vmem:[%s1611 + $0x2c] sm:$0xf]
      %v1624 = vld [vmem:[%s1611 + $0x30] sm:$0xf]
      %v1625 = vld [vmem:[%s1611 + $0x34] sm:$0xf]
      %v1626 = vld [vmem:[%s1611 + $0x38] sm:$0xf]
      %v1627 = vld [vmem:[%s1611 + $0x3c] sm:$0xf]
      %v1644 = vunpack.c.l.b16 %v1612
      %v1645 = vunpack.c.l.b16 %v1613
      %v1646 = vunpack.c.l.b16 %v1614
      %v1647 = vunpack.c.l.b16 %v1615
      %v1648 = vunpack.c.l.b16 %v1616
      %v1649 = vunpack.c.l.b16 %v1617
      %v1650 = vunpack.c.l.b16 %v1618
      %v1651 = vunpack.c.l.b16 %v1619
      %v1652 = vunpack.c.l.b16 %v1620
      %v1653 = vunpack.c.l.b16 %v1621
      %v1654 = vunpack.c.l.b16 %v1622
      %v1655 = vunpack.c.l.b16 %v1623
      %v1656 = vunpack.c.l.b16 %v1624
      %v1657 = vunpack.c.l.b16 %v1625
      %v1658 = vunpack.c.l.b16 %v1626
      %v1659 = vunpack.c.l.b16 %v1627
      %v1660 = vpack.c.b16 %v1645, %v1644
      %v1661 = vpack.c.b16 %v1647, %v1646
      %v1662 = vpack.c.b16 %v1649, %v1648
      %v1663 = vpack.c.b16 %v1651, %v1650
      %v1664 = vpack.c.b16 %v1653, %v1652
      %v1665 = vpack.c.b16 %v1655, %v1654
      %v1666 = vpack.c.b16 %v1657, %v1656
      %v1667 = vpack.c.b16 %v1659, %v1658
      %1668 = vrot.lane.b32.xlu0 %v909, 96
      %v1669 = vpop.permute.xlu0 %1668
      %v1672 = vsel %vm467, %v1660, 0
      %v1675 = vsel %vm467, %v1661, 0
      %v1678 = vsel %vm467, %v1662, 0
      %v1681 = vsel %vm467, %v1663, 0
      %v1684 = vsel %vm467, %v1664, 0
      %v1687 = vsel %vm467, %v1665, 0
      %v1690 = vsel %vm467, %v1666, 0
      %v1693 = vsel %vm467, %v1667, 0
      %1695 = vmatprep.subr.bf16.mxu0 0
      %1696 = vmatpush1.bf16.msra.mxu0 %v1669
      %1697 = vmatprep.subr.bf16.mxu0 0
      %1698 = vmatpush1.bf16.msra.mxu0 0
      %1699 = vmatprep.subr.bf16.mxu0 0
      %1700 = vmatpush1.bf16.msra.mxu0 0
      %1701 = vmatprep.subr.bf16.mxu0 0
      %1702 = vmatpush1.bf16.msra.mxu0 0
      %1703 = vmatprep.subr.bf16.mxu0 0
      %1704 = vmatpush1.bf16.msra.mxu0 0
      %1705 = vmatprep.subr.bf16.mxu0 0
      %1706 = vmatpush1.bf16.msra.mxu0 0
      %1707 = vmatprep.subr.bf16.mxu0 0
      %1708 = vmatpush1.bf16.msra.mxu0 0
      %1709 = vmatprep.subr.bf16.mxu0 0
      %1710 = vmatpush1.bf16.msra.mxu0 0
      %1711 = vmatprep.subr.bf16.mxu0 0
      %1712 = vmatpush1.bf16.msra.mxu0 0
      %1713 = vmatprep.subr.bf16.mxu0 0
      %1714 = vmatpush1.bf16.msra.mxu0 0
      %1715 = vmatprep.subr.bf16.mxu0 0
      %1716 = vmatpush1.bf16.msra.mxu0 0
      %1717 = vmatprep.subr.bf16.mxu0 0
      %1718 = vmatpush1.bf16.msra.mxu0 0
      %1719 = vmatprep.subr.bf16.mxu0 0
      %1720 = vmatpush1.bf16.msra.mxu0 0
      %1721 = vmatprep.subr.bf16.mxu0 0
      %1722 = vmatpush1.bf16.msra.mxu0 0
      %1723 = vmatprep.subr.bf16.mxu0 0
      %1724 = vmatpush1.bf16.msra.mxu0 0
      %1725 = vmatprep.subr.bf16.mxu0 0
      %1726 = vmatpush1.bf16.msra.mxu0 0
      %1727 = vmatprep.mubr.bf16.mxu0 0
      %1728 = vmatmul.mubr.bf16.gmra.mrb[0].mxu0 %v1672
      %v1729 = vpop.f32.mrb[0].mxu0
      %v1730 = vadd.f32 0.0, %v1729
      %v1731 = vpop.f32.mrb[0].mxu0
      %v1732 = vpop.f32.mrb[0].mxu0
      %v1733 = vadd.f32 0.0, %v1732
      %v1734 = vpop.f32.mrb[0].mxu0
      %1735 = vmatprep.mubr.bf16.mxu0 0
      %1736 = vmatmul.mubr.bf16.gmra.mrb[0].mxu0 %v1675
      %v1737 = vpop.f32.mrb[0].mxu0
      %v1738 = vadd.f32 0.0, %v1737
      %v1739 = vpop.f32.mrb[0].mxu0
      %v1740 = vpop.f32.mrb[0].mxu0
      %v1741 = vadd.f32 0.0, %v1740
      %v1742 = vpop.f32.mrb[0].mxu0
      %1743 = vmatprep.mubr.bf16.mxu0 0
      %1744 = vmatmul.mubr.bf16.gmra.mrb[0].mxu0 %v1678
      %v1745 = vpop.f32.mrb[0].mxu0
      %v1746 = vadd.f32 0.0, %v1745
      %v1747 = vpop.f32.mrb[0].mxu0
      %v1748 = vpop.f32.mrb[0].mxu0
      %v1749 = vadd.f32 0.0, %v1748
      %v1750 = vpop.f32.mrb[0].mxu0
      %1751 = vmatprep.mubr.bf16.mxu0 0
      %1752 = vmatmul.mubr.bf16.gmra.mrb[0].mxu0 %v1681
      %v1753 = vpop.f32.mrb[0].mxu0
      %v1754 = vadd.f32 0.0, %v1753
      %v1755 = vpop.f32.mrb[0].mxu0
      %v1756 = vpop.f32.mrb[0].mxu0
      %v1757 = vadd.f32 0.0, %v1756
      %v1758 = vpop.f32.mrb[0].mxu0
      %1759 = vmatprep.mubr.bf16.mxu0 0
      %1760 = vmatmul.mubr.bf16.gmra.mrb[0].mxu0 %v1684
      %v1761 = vpop.f32.mrb[0].mxu0
      %v1762 = vadd.f32 0.0, %v1761
      %v1763 = vpop.f32.mrb[0].mxu0
      %v1764 = vpop.f32.mrb[0].mxu0
      %v1765 = vadd.f32 0.0, %v1764
      %v1766 = vpop.f32.mrb[0].mxu0
      %1767 = vmatprep.mubr.bf16.mxu0 0
      %1768 = vmatmul.mubr.bf16.gmra.mrb[0].mxu0 %v1687
      %v1769 = vpop.f32.mrb[0].mxu0
      %v1770 = vadd.f32 0.0, %v1769
      %v1771 = vpop.f32.mrb[0].mxu0
      %v1772 = vpop.f32.mrb[0].mxu0
      %v1773 = vadd.f32 0.0, %v1772
      %v1774 = vpop.f32.mrb[0].mxu0
      %1775 = vmatprep.mubr.bf16.mxu0 0
      %1776 = vmatmul.mubr.bf16.gmra.mrb[0].mxu0 %v1690
      %v1777 = vpop.f32.mrb[0].mxu0
      %v1778 = vadd.f32 0.0, %v1777
      %v1779 = vpop.f32.mrb[0].mxu0
      %v1780 = vpop.f32.mrb[0].mxu0
      %v1781 = vadd.f32 0.0, %v1780
      %v1782 = vpop.f32.mrb[0].mxu0
      %1783 = vmatprep.mubr.bf16.mxu0 0
      %1784 = vmatmul.mubr.bf16.gmra.mrb[0].mxu0 %v1693
      %v1785 = vpop.f32.mrb[0].mxu0
      %v1786 = vadd.f32 0.0, %v1785
      %v1787 = vpop.f32.mrb[0].mxu0
      %v1788 = vpop.f32.mrb[0].mxu0
      %v1789 = vadd.f32 0.0, %v1788
      %v1790 = vpop.f32.mrb[0].mxu0
      %1791 = vdwg.mxu0
      %v1792 = vadd.f32 %v1595, %v1730
      %v1793 = vadd.f32 %v1596, %v1733
      %v1794 = vadd.f32 %v1597, %v1738
      %v1795 = vadd.f32 %v1598, %v1741
      %v1796 = vadd.f32 %v1599, %v1746
      %v1797 = vadd.f32 %v1600, %v1749
      %v1798 = vadd.f32 %v1601, %v1754
      %v1799 = vadd.f32 %v1602, %v1757
      %v1800 = vadd.f32 %v1603, %v1762
      %v1801 = vadd.f32 %v1604, %v1765
      %v1802 = vadd.f32 %v1605, %v1770
      %v1803 = vadd.f32 %v1606, %v1773
      %v1804 = vadd.f32 %v1607, %v1778
      %v1805 = vadd.f32 %v1608, %v1781
      %v1806 = vadd.f32 %v1609, %v1786
      %v1807 = vadd.f32 %v1610, %v1789
      %vm1808 = vcmask 326656
      %1809 = vst.msk [vmem:[#allocation5] sm:$0xff] %vm1808, %v1792
      %1810 = vst.msk [vmem:[#allocation5 + $0x8] sm:$0xff] %vm1808, %v1793
      %1811 = vst.msk [vmem:[#allocation5 + $0x10] sm:$0xff] %vm1808, %v1794
      %1812 = vst.msk [vmem:[#allocation5 + $0x18] sm:$0xff] %vm1808, %v1795
      %1813 = vst.msk [vmem:[#allocation5 + $0x20] sm:$0xff] %vm1808, %v1796
      %1814 = vst.msk [vmem:[#allocation5 + $0x28] sm:$0xff] %vm1808, %v1797
      %1815 = vst.msk [vmem:[#allocation5 + $0x30] sm:$0xff] %vm1808, %v1798
      %1816 = vst.msk [vmem:[#allocation5 + $0x38] sm:$0xff] %vm1808, %v1799
      %1817 = vst.msk [vmem:[#allocation5 + $0x40] sm:$0xff] %vm1808, %v1800
      %1818 = vst.msk [vmem:[#allocation5 + $0x48] sm:$0xff] %vm1808, %v1801
      %1819 = vst.msk [vmem:[#allocation5 + $0x50] sm:$0xff] %vm1808, %v1802
      %1820 = vst.msk [vmem:[#allocation5 + $0x58] sm:$0xff] %vm1808, %v1803
      %1821 = vst.msk [vmem:[#allocation5 + $0x60] sm:$0xff] %vm1808, %v1804
      %1822 = vst.msk [vmem:[#allocation5 + $0x68] sm:$0xff] %vm1808, %v1805
      %1823 = vst.msk [vmem:[#allocation5 + $0x70] sm:$0xff] %vm1808, %v1806
      %1824 = vst.msk [vmem:[#allocation5 + $0x78] sm:$0xff] %vm1808, %v1807
      // Predicated region
      $region57: #{_psp_forward.1} parent=43 // pred_check
        %p1825 = pneg %p324
      $region58: #{_psp_forward.1} parent=43 // pred_check_branch
        %1827 = sbr.rel (%p1825) target = $region60
      $region59: #{_psp_forward.1} parent=43 // pred_region
        %v1828 = vld [vmem:[%s316] sm:$0xff]
        %v1829 = vld [vmem:[%s316 + $0x8] sm:$0xff]
        %v1830 = vld [vmem:[%s316 + $0x10] sm:$0xff]
        %v1831 = vld [vmem:[%s316 + $0x18] sm:$0xff]
        %v1832 = vld [vmem:[%s316 + $0x20] sm:$0xff]
        %v1833 = vld [vmem:[%s316 + $0x28] sm:$0xff]
        %v1834 = vld [vmem:[%s316 + $0x30] sm:$0xff]
        %v1835 = vld [vmem:[%s316 + $0x38] sm:$0xff]
        %v1836 = vld [vmem:[%s316 + $0x40] sm:$0xff]
        %v1837 = vld [vmem:[%s316 + $0x48] sm:$0xff]
        %v1838 = vld [vmem:[%s316 + $0x50] sm:$0xff]
        %v1839 = vld [vmem:[%s316 + $0x58] sm:$0xff]
        %v1840 = vld [vmem:[%s316 + $0x60] sm:$0xff]
        %v1841 = vld [vmem:[%s316 + $0x68] sm:$0xff]
        %v1842 = vld [vmem:[%s316 + $0x70] sm:$0xff]
        %v1843 = vld [vmem:[%s316 + $0x78] sm:$0xff]
        %v1844 = vld [vmem:[%s316 + $0x80] sm:$0xff]
        %v1845 = vld [vmem:[%s316 + $0x88] sm:$0xff]
        %v1846 = vld [vmem:[%s316 + $0x90] sm:$0xff]
        %v1847 = vld [vmem:[%s316 + $0x98] sm:$0xff]
        %v1848 = vld [vmem:[%s316 + $0xa0] sm:$0xff]
        %v1849 = vld [vmem:[%s316 + $0xa8] sm:$0xff]
        %v1850 = vld [vmem:[%s316 + $0xb0] sm:$0xff]
        %v1851 = vld [vmem:[%s316 + $0xb8] sm:$0xff]
        %v1852 = vld [vmem:[%s316 + $0xc0] sm:$0xff]
        %v1853 = vld [vmem:[%s316 + $0xc8] sm:$0xff]
        %v1854 = vld [vmem:[%s316 + $0xd0] sm:$0xff]
        %v1855 = vld [vmem:[%s316 + $0xd8] sm:$0xff]
        %v1856 = vld [vmem:[%s316 + $0xe0] sm:$0xff]
        %v1857 = vld [vmem:[%s316 + $0xe8] sm:$0xff]
        %v1858 = vld [vmem:[%s316 + $0xf0] sm:$0xff]
        %v1859 = vld [vmem:[%s316 + $0xf8] sm:$0xff]
        %v1860 = vld [vmem:[#allocation2] sm:$0xff]
        %v1861 = vld [vmem:[#allocation2 + $0x8] sm:$0xff]
        %v1862 = vld [vmem:[#allocation2 + $0x10] sm:$0xff]
        %v1863 = vld [vmem:[#allocation2 + $0x18] sm:$0xff]
        %v1864 = vld [vmem:[#allocation2 + $0x20] sm:$0xff]
        %v1865 = vld [vmem:[#allocation2 + $0x28] sm:$0xff]
        %v1866 = vld [vmem:[#allocation2 + $0x30] sm:$0xff]
        %v1867 = vld [vmem:[#allocation2 + $0x38] sm:$0xff]
        %v1868 = vld [vmem:[#allocation2 + $0x40] sm:$0xff]
        %v1869 = vld [vmem:[#allocation2 + $0x48] sm:$0xff]
        %v1870 = vld [vmem:[#allocation2 + $0x50] sm:$0xff]
        %v1871 = vld [vmem:[#allocation2 + $0x58] sm:$0xff]
        %v1872 = vld [vmem:[#allocation2 + $0x60] sm:$0xff]
        %v1873 = vld [vmem:[#allocation2 + $0x68] sm:$0xff]
        %v1874 = vld [vmem:[#allocation2 + $0x70] sm:$0xff]
        %v1875 = vld [vmem:[#allocation2 + $0x78] sm:$0xff]
        %v1876 = vpack.c.bf16 %v1861, %v1860
        %v1877 = vpack.c.bf16 %v1863, %v1862
        %v1878 = vpack.c.bf16 %v1865, %v1864
        %v1879 = vpack.c.bf16 %v1867, %v1866
        %v1880 = vpack.c.bf16 %v1869, %v1868
        %v1881 = vpack.c.bf16 %v1871, %v1870
        %v1882 = vpack.c.bf16 %v1873, %v1872
        %v1883 = vpack.c.bf16 %v1875, %v1874
        %v1884 = vld [vmem:[%s2] sm:$0xff]
        %v1886 = vunpack.c.l.b16 %v1884
        %v1887 = vunpack.c.h.b16 %v1884
        %v1888 = vpack.c.b16 %v1886, %v1886
        %v1889 = vpack.c.b16 %v1887, %v1887
        %v1891 = vsel %vm1119, %v1876, 0
        %v1894 = vsel %vm1119, %v1877, 0
        %v1897 = vsel %vm1119, %v1878, 0
        %v1900 = vsel %vm1119, %v1879, 0
        %v1903 = vsel %vm1119, %v1880, 0
        %v1906 = vsel %vm1119, %v1881, 0
        %v1909 = vsel %vm1119, %v1882, 0
        %v1912 = vsel %vm1119, %v1883, 0
        %vm1914 = vcmask 1043456
        %v1916 = vsel %vm1914, %v1888, 0
        %v1919 = vsel %vm1914, %v1889, 0
        %1921 = vmatprep.subr.bf16.mxu0 %v1919
        %1922 = vmatpush1.bf16.msra.mxu0 %v1916
        %1923 = vmatprep.subr.bf16.mxu0 0
        %1924 = vmatpush1.bf16.msra.mxu0 0
        %1925 = vmatprep.subr.bf16.mxu0 0
        %1926 = vmatpush1.bf16.msra.mxu0 0
        %1927 = vmatprep.subr.bf16.mxu0 0
        %1928 = vmatpush1.bf16.msra.mxu0 0
        %1929 = vmatprep.subr.bf16.mxu0 0
        %1930 = vmatpush1.bf16.msra.mxu0 0
        %1931 = vmatprep.subr.bf16.mxu0 0
        %1932 = vmatpush1.bf16.msra.mxu0 0
        %1933 = vmatprep.subr.bf16.mxu0 0
        %1934 = vmatpush1.bf16.msra.mxu0 0
        %1935 = vmatprep.subr.bf16.mxu0 0
        %1936 = vmatpush1.bf16.msra.mxu0 0
        %1937 = vmatprep.subr.bf16.mxu0 0
        %1938 = vmatpush1.bf16.msra.mxu0 0
        %1939 = vmatprep.subr.bf16.mxu0 0
        %1940 = vmatpush1.bf16.msra.mxu0 0
        %1941 = vmatprep.subr.bf16.mxu0 0
        %1942 = vmatpush1.bf16.msra.mxu0 0
        %1943 = vmatprep.subr.bf16.mxu0 0
        %1944 = vmatpush1.bf16.msra.mxu0 0
        %1945 = vmatprep.subr.bf16.mxu0 0
        %1946 = vmatpush1.bf16.msra.mxu0 0
        %1947 = vmatprep.subr.bf16.mxu0 0
        %1948 = vmatpush1.bf16.msra.mxu0 0
        %1949 = vmatprep.subr.bf16.mxu0 0
        %1950 = vmatpush1.bf16.msra.mxu0 0
        %1951 = vmatprep.subr.bf16.mxu0 0
        %1952 = vmatpush1.bf16.msra.mxu0 0
        %1953 = vmatprep.mubr.bf16.mxu0 0
        %1954 = vmatmul.mubr.bf16.gmra.mrb[0].mxu0 %v1891
        %v1955 = vpop.f32.mrb[0].mxu0
        %v1956 = vadd.f32 0.0, %v1955
        %v1957 = vpop.f32.mrb[0].mxu0
        %v1958 = vadd.f32 0.0, %v1957
        %v1959 = vpop.f32.mrb[0].mxu0
        %v1960 = vadd.f32 0.0, %v1959
        %v1961 = vpop.f32.mrb[0].mxu0
        %v1962 = vadd.f32 0.0, %v1961
        %1963 = vmatprep.mubr.bf16.mxu0 0
        %1964 = vmatmul.mubr.bf16.gmra.mrb[0].mxu0 %v1894
        %v1965 = vpop.f32.mrb[0].mxu0
        %v1966 = vadd.f32 0.0, %v1965
        %v1967 = vpop.f32.mrb[0].mxu0
        %v1968 = vadd.f32 0.0, %v1967
        %v1969 = vpop.f32.mrb[0].mxu0
        %v1970 = vadd.f32 0.0, %v1969
        %v1971 = vpop.f32.mrb[0].mxu0
        %v1972 = vadd.f32 0.0, %v1971
        %1973 = vmatprep.mubr.bf16.mxu0 0
        %1974 = vmatmul.mubr.bf16.gmra.mrb[0].mxu0 %v1897
        %v1975 = vpop.f32.mrb[0].mxu0
        %v1976 = vadd.f32 0.0, %v1975
        %v1977 = vpop.f32.mrb[0].mxu0
        %v1978 = vadd.f32 0.0, %v1977
        %v1979 = vpop.f32.mrb[0].mxu0
        %v1980 = vadd.f32 0.0, %v1979
        %v1981 = vpop.f32.mrb[0].mxu0
        %v1982 = vadd.f32 0.0, %v1981
        %1983 = vmatprep.mubr.bf16.mxu0 0
        %1984 = vmatmul.mubr.bf16.gmra.mrb[0].mxu0 %v1900
        %v1985 = vpop.f32.mrb[0].mxu0
        %v1986 = vadd.f32 0.0, %v1985
        %v1987 = vpop.f32.mrb[0].mxu0
        %v1988 = vadd.f32 0.0, %v1987
        %v1989 = vpop.f32.mrb[0].mxu0
        %v1990 = vadd.f32 0.0, %v1989
        %v1991 = vpop.f32.mrb[0].mxu0
        %v1992 = vadd.f32 0.0, %v1991
        %1993 = vmatprep.mubr.bf16.mxu0 0
        %1994 = vmatmul.mubr.bf16.gmra.mrb[0].mxu0 %v1903
        %v1995 = vpop.f32.mrb[0].mxu0
        %v1996 = vadd.f32 0.0, %v1995
        %v1997 = vpop.f32.mrb[0].mxu0
        %v1998 = vadd.f32 0.0, %v1997
        %v1999 = vpop.f32.mrb[0].mxu0
        %v2000 = vadd.f32 0.0, %v1999
        %v2001 = vpop.f32.mrb[0].mxu0
        %v2002 = vadd.f32 0.0, %v2001
        %2003 = vmatprep.mubr.bf16.mxu0 0
        %2004 = vmatmul.mubr.bf16.gmra.mrb[0].mxu0 %v1906
        %v2005 = vpop.f32.mrb[0].mxu0
        %v2006 = vadd.f32 0.0, %v2005
        %v2007 = vpop.f32.mrb[0].mxu0
        %v2008 = vadd.f32 0.0, %v2007
        %v2009 = vpop.f32.mrb[0].mxu0
        %v2010 = vadd.f32 0.0, %v2009
        %v2011 = vpop.f32.mrb[0].mxu0
        %v2012 = vadd.f32 0.0, %v2011
        %2013 = vmatprep.mubr.bf16.mxu0 0
        %2014 = vmatmul.mubr.bf16.gmra.mrb[0].mxu0 %v1909
        %v2015 = vpop.f32.mrb[0].mxu0
        %v2016 = vadd.f32 0.0, %v2015
        %v2017 = vpop.f32.mrb[0].mxu0
        %v2018 = vadd.f32 0.0, %v2017
        %v2019 = vpop.f32.mrb[0].mxu0
        %v2020 = vadd.f32 0.0, %v2019
        %v2021 = vpop.f32.mrb[0].mxu0
        %v2022 = vadd.f32 0.0, %v2021
        %2023 = vmatprep.mubr.bf16.mxu0 0
        %2024 = vmatmul.mubr.bf16.gmra.mrb[0].mxu0 %v1912
        %v2025 = vpop.f32.mrb[0].mxu0
        %v2026 = vadd.f32 0.0, %v2025
        %v2027 = vpop.f32.mrb[0].mxu0
        %v2028 = vadd.f32 0.0, %v2027
        %v2029 = vpop.f32.mrb[0].mxu0
        %v2030 = vadd.f32 0.0, %v2029
        %v2031 = vpop.f32.mrb[0].mxu0
        %v2032 = vadd.f32 0.0, %v2031
        %2033 = vdwg.mxu0
        %v2034 = vadd.f32 %v1828, %v1956
        %v2035 = vadd.f32 %v1829, %v1958
        %v2036 = vadd.f32 %v1830, %v1960
        %v2037 = vadd.f32 %v1831, %v1962
        %v2038 = vadd.f32 %v1832, %v1966
        %v2039 = vadd.f32 %v1833, %v1968
        %v2040 = vadd.f32 %v1834, %v1970
        %v2041 = vadd.f32 %v1835, %v1972
        %v2042 = vadd.f32 %v1836, %v1976
        %v2043 = vadd.f32 %v1837, %v1978
        %v2044 = vadd.f32 %v1838, %v1980
        %v2045 = vadd.f32 %v1839, %v1982
        %v2046 = vadd.f32 %v1840, %v1986
        %v2047 = vadd.f32 %v1841, %v1988
        %v2048 = vadd.f32 %v1842, %v1990
        %v2049 = vadd.f32 %v1843, %v1992
        %v2050 = vadd.f32 %v1844, %v1996
        %v2051 = vadd.f32 %v1845, %v1998
        %v2052 = vadd.f32 %v1846, %v2000
        %v2053 = vadd.f32 %v1847, %v2002
        %v2054 = vadd.f32 %v1848, %v2006
        %v2055 = vadd.f32 %v1849, %v2008
        %v2056 = vadd.f32 %v1850, %v2010
        %v2057 = vadd.f32 %v1851, %v2012
        %v2058 = vadd.f32 %v1852, %v2016
        %v2059 = vadd.f32 %v1853, %v2018
        %v2060 = vadd.f32 %v1854, %v2020
        %v2061 = vadd.f32 %v1855, %v2022
        %v2062 = vadd.f32 %v1856, %v2026
        %v2063 = vadd.f32 %v1857, %v2028
        %v2064 = vadd.f32 %v1858, %v2030
        %v2065 = vadd.f32 %v1859, %v2032
        %2066 = vst [vmem:[%s316] sm:$0xff] %v2034
        %2067 = vst [vmem:[%s316 + $0x8] sm:$0xff] %v2035
        %2068 = vst [vmem:[%s316 + $0x10] sm:$0xff] %v2036
        %2069 = vst [vmem:[%s316 + $0x18] sm:$0xff] %v2037
        %2070 = vst [vmem:[%s316 + $0x20] sm:$0xff] %v2038
        %2071 = vst [vmem:[%s316 + $0x28] sm:$0xff] %v2039
        %2072 = vst [vmem:[%s316 + $0x30] sm:$0xff] %v2040
        %2073 = vst [vmem:[%s316 + $0x38] sm:$0xff] %v2041
        %2074 = vst [vmem:[%s316 + $0x40] sm:$0xff] %v2042
        %2075 = vst [vmem:[%s316 + $0x48] sm:$0xff] %v2043
        %2076 = vst [vmem:[%s316 + $0x50] sm:$0xff] %v2044
        %2077 = vst [vmem:[%s316 + $0x58] sm:$0xff] %v2045
        %2078 = vst [vmem:[%s316 + $0x60] sm:$0xff] %v2046
        %2079 = vst [vmem:[%s316 + $0x68] sm:$0xff] %v2047
        %2080 = vst [vmem:[%s316 + $0x70] sm:$0xff] %v2048
        %2081 = vst [vmem:[%s316 + $0x78] sm:$0xff] %v2049
        %2082 = vst [vmem:[%s316 + $0x80] sm:$0xff] %v2050
        %2083 = vst [vmem:[%s316 + $0x88] sm:$0xff] %v2051
        %2084 = vst [vmem:[%s316 + $0x90] sm:$0xff] %v2052
        %2085 = vst [vmem:[%s316 + $0x98] sm:$0xff] %v2053
        %2086 = vst [vmem:[%s316 + $0xa0] sm:$0xff] %v2054
        %2087 = vst [vmem:[%s316 + $0xa8] sm:$0xff] %v2055
        %2088 = vst [vmem:[%s316 + $0xb0] sm:$0xff] %v2056
        %2089 = vst [vmem:[%s316 + $0xb8] sm:$0xff] %v2057
        %2090 = vst [vmem:[%s316 + $0xc0] sm:$0xff] %v2058
        %2091 = vst [vmem:[%s316 + $0xc8] sm:$0xff] %v2059
        %2092 = vst [vmem:[%s316 + $0xd0] sm:$0xff] %v2060
        %2093 = vst [vmem:[%s316 + $0xd8] sm:$0xff] %v2061
        %2094 = vst [vmem:[%s316 + $0xe0] sm:$0xff] %v2062
        %2095 = vst [vmem:[%s316 + $0xe8] sm:$0xff] %v2063
        %2096 = vst [vmem:[%s316 + $0xf0] sm:$0xff] %v2064
        %2097 = vst [vmem:[%s316 + $0xf8] sm:$0xff] %v2065
        %v2098 = vld [vmem:[%s316] sm:$0xff]
        %v2099 = vld [vmem:[%s316 + $0x8] sm:$0xff]
        %v2100 = vld [vmem:[%s316 + $0x10] sm:$0xff]
        %v2101 = vld [vmem:[%s316 + $0x18] sm:$0xff]
        %v2102 = vld [vmem:[%s316 + $0x20] sm:$0xff]
        %v2103 = vld [vmem:[%s316 + $0x28] sm:$0xff]
        %v2104 = vld [vmem:[%s316 + $0x30] sm:$0xff]
        %v2105 = vld [vmem:[%s316 + $0x38] sm:$0xff]
        %v2106 = vld [vmem:[%s316 + $0x40] sm:$0xff]
        %v2107 = vld [vmem:[%s316 + $0x48] sm:$0xff]
        %v2108 = vld [vmem:[%s316 + $0x50] sm:$0xff]
        %v2109 = vld [vmem:[%s316 + $0x58] sm:$0xff]
        %v2110 = vld [vmem:[%s316 + $0x60] sm:$0xff]
        %v2111 = vld [vmem:[%s316 + $0x68] sm:$0xff]
        %v2112 = vld [vmem:[%s316 + $0x70] sm:$0xff]
        %v2113 = vld [vmem:[%s316 + $0x78] sm:$0xff]
        %v2114 = vld [vmem:[%s316 + $0x80] sm:$0xff]
        %v2115 = vld [vmem:[%s316 + $0x88] sm:$0xff]
        %v2116 = vld [vmem:[%s316 + $0x90] sm:$0xff]
        %v2117 = vld [vmem:[%s316 + $0x98] sm:$0xff]
        %v2118 = vld [vmem:[%s316 + $0xa0] sm:$0xff]
        %v2119 = vld [vmem:[%s316 + $0xa8] sm:$0xff]
        %v2120 = vld [vmem:[%s316 + $0xb0] sm:$0xff]
        %v2121 = vld [vmem:[%s316 + $0xb8] sm:$0xff]
        %v2122 = vld [vmem:[%s316 + $0xc0] sm:$0xff]
        %v2123 = vld [vmem:[%s316 + $0xc8] sm:$0xff]
        %v2124 = vld [vmem:[%s316 + $0xd0] sm:$0xff]
        %v2125 = vld [vmem:[%s316 + $0xd8] sm:$0xff]
        %v2126 = vld [vmem:[%s316 + $0xe0] sm:$0xff]
        %v2127 = vld [vmem:[%s316 + $0xe8] sm:$0xff]
        %v2128 = vld [vmem:[%s316 + $0xf0] sm:$0xff]
        %v2129 = vld [vmem:[%s316 + $0xf8] sm:$0xff]
        %v2130 = vld [vmem:[#allocation3] sm:$0xff]
        %v2131 = vld [vmem:[#allocation3 + $0x8] sm:$0xff]
        %v2132 = vld [vmem:[#allocation3 + $0x10] sm:$0xff]
        %v2133 = vld [vmem:[#allocation3 + $0x18] sm:$0xff]
        %v2134 = vld [vmem:[#allocation3 + $0x20] sm:$0xff]
        %v2135 = vld [vmem:[#allocation3 + $0x28] sm:$0xff]
        %v2136 = vld [vmem:[#allocation3 + $0x30] sm:$0xff]
        %v2137 = vld [vmem:[#allocation3 + $0x38] sm:$0xff]
        %v2138 = vld [vmem:[#allocation3 + $0x40] sm:$0xff]
        %v2139 = vld [vmem:[#allocation3 + $0x48] sm:$0xff]
        %v2140 = vld [vmem:[#allocation3 + $0x50] sm:$0xff]
        %v2141 = vld [vmem:[#allocation3 + $0x58] sm:$0xff]
        %v2142 = vld [vmem:[#allocation3 + $0x60] sm:$0xff]
        %v2143 = vld [vmem:[#allocation3 + $0x68] sm:$0xff]
        %v2144 = vld [vmem:[#allocation3 + $0x70] sm:$0xff]
        %v2145 = vld [vmem:[#allocation3 + $0x78] sm:$0xff]
        %v2146 = vpack.c.bf16 %v2131, %v2130
        %v2147 = vpack.c.bf16 %v2133, %v2132
        %v2148 = vpack.c.bf16 %v2135, %v2134
        %v2149 = vpack.c.bf16 %v2137, %v2136
        %v2150 = vpack.c.bf16 %v2139, %v2138
        %v2151 = vpack.c.bf16 %v2141, %v2140
        %v2152 = vpack.c.bf16 %v2143, %v2142
        %v2153 = vpack.c.bf16 %v2145, %v2144
        %v2154 = vld [vmem:[%s2 + $0x8] sm:$0xff]
        %v2156 = vunpack.c.l.b16 %v2154
        %v2157 = vunpack.c.h.b16 %v2154
        %v2158 = vpack.c.b16 %v2156, %v2156
        %v2159 = vpack.c.b16 %v2157, %v2157
        %v2161 = vsel %vm1119, %v2146, 0
        %v2164 = vsel %vm1119, %v2147, 0
        %v2167 = vsel %vm1119, %v2148, 0
        %v2170 = vsel %vm1119, %v2149, 0
        %v2173 = vsel %vm1119, %v2150, 0
        %v2176 = vsel %vm1119, %v2151, 0
        %v2179 = vsel %vm1119, %v2152, 0
        %v2182 = vsel %vm1119, %v2153, 0
        %v2185 = vsel %vm1914, %v2158, 0
        %v2188 = vsel %vm1914, %v2159, 0
        %2190 = vmatprep.subr.bf16.mxu0 %v2188
        %2191 = vmatpush1.bf16.msra.mxu0 %v2185
        %2192 = vmatprep.subr.bf16.mxu0 0
        %2193 = vmatpush1.bf16.msra.mxu0 0
        %2194 = vmatprep.subr.bf16.mxu0 0
        %2195 = vmatpush1.bf16.msra.mxu0 0
        %2196 = vmatprep.subr.bf16.mxu0 0
        %2197 = vmatpush1.bf16.msra.mxu0 0
        %2198 = vmatprep.subr.bf16.mxu0 0
        %2199 = vmatpush1.bf16.msra.mxu0 0
        %2200 = vmatprep.subr.bf16.mxu0 0
        %2201 = vmatpush1.bf16.msra.mxu0 0
        %2202 = vmatprep.subr.bf16.mxu0 0
        %2203 = vmatpush1.bf16.msra.mxu0 0
        %2204 = vmatprep.subr.bf16.mxu0 0
        %2205 = vmatpush1.bf16.msra.mxu0 0
        %2206 = vmatprep.subr.bf16.mxu0 0
        %2207 = vmatpush1.bf16.msra.mxu0 0
        %2208 = vmatprep.subr.bf16.mxu0 0
        %2209 = vmatpush1.bf16.msra.mxu0 0
        %2210 = vmatprep.subr.bf16.mxu0 0
        %2211 = vmatpush1.bf16.msra.mxu0 0
        %2212 = vmatprep.subr.bf16.mxu0 0
        %2213 = vmatpush1.bf16.msra.mxu0 0
        %2214 = vmatprep.subr.bf16.mxu0 0
        %2215 = vmatpush1.bf16.msra.mxu0 0
        %2216 = vmatprep.subr.bf16.mxu0 0
        %2217 = vmatpush1.bf16.msra.mxu0 0
        %2218 = vmatprep.subr.bf16.mxu0 0
        %2219 = vmatpush1.bf16.msra.mxu0 0
        %2220 = vmatprep.subr.bf16.mxu0 0
        %2221 = vmatpush1.bf16.msra.mxu0 0
        %2222 = vmatprep.mubr.bf16.mxu0 0
        %2223 = vmatmul.mubr.bf16.gmra.mrb[0].mxu0 %v2161
        %v2224 = vpop.f32.mrb[0].mxu0
        %v2225 = vadd.f32 0.0, %v2224
        %v2226 = vpop.f32.mrb[0].mxu0
        %v2227 = vadd.f32 0.0, %v2226
        %v2228 = vpop.f32.mrb[0].mxu0
        %v2229 = vadd.f32 0.0, %v2228
        %v2230 = vpop.f32.mrb[0].mxu0
        %v2231 = vadd.f32 0.0, %v2230
        %2232 = vmatprep.mubr.bf16.mxu0 0
        %2233 = vmatmul.mubr.bf16.gmra.mrb[0].mxu0 %v2164
        %v2234 = vpop.f32.mrb[0].mxu0
        %v2235 = vadd.f32 0.0, %v2234
        %v2236 = vpop.f32.mrb[0].mxu0
        %v2237 = vadd.f32 0.0, %v2236
        %v2238 = vpop.f32.mrb[0].mxu0
        %v2239 = vadd.f32 0.0, %v2238
        %v2240 = vpop.f32.mrb[0].mxu0
        %v2241 = vadd.f32 0.0, %v2240
        %2242 = vmatprep.mubr.bf16.mxu0 0
        %2243 = vmatmul.mubr.bf16.gmra.mrb[0].mxu0 %v2167
        %v2244 = vpop.f32.mrb[0].mxu0
        %v2245 = vadd.f32 0.0, %v2244
        %v2246 = vpop.f32.mrb[0].mxu0
        %v2247 = vadd.f32 0.0, %v2246
        %v2248 = vpop.f32.mrb[0].mxu0
        %v2249 = vadd.f32 0.0, %v2248
        %v2250 = vpop.f32.mrb[0].mxu0
        %v2251 = vadd.f32 0.0, %v2250
        %2252 = vmatprep.mubr.bf16.mxu0 0
        %2253 = vmatmul.mubr.bf16.gmra.mrb[0].mxu0 %v2170
        %v2254 = vpop.f32.mrb[0].mxu0
        %v2255 = vadd.f32 0.0, %v2254
        %v2256 = vpop.f32.mrb[0].mxu0
        %v2257 = vadd.f32 0.0, %v2256
        %v2258 = vpop.f32.mrb[0].mxu0
        %v2259 = vadd.f32 0.0, %v2258
        %v2260 = vpop.f32.mrb[0].mxu0
        %v2261 = vadd.f32 0.0, %v2260
        %2262 = vmatprep.mubr.bf16.mxu0 0
        %2263 = vmatmul.mubr.bf16.gmra.mrb[0].mxu0 %v2173
        %v2264 = vpop.f32.mrb[0].mxu0
        %v2265 = vadd.f32 0.0, %v2264
        %v2266 = vpop.f32.mrb[0].mxu0
        %v2267 = vadd.f32 0.0, %v2266
        %v2268 = vpop.f32.mrb[0].mxu0
        %v2269 = vadd.f32 0.0, %v2268
        %v2270 = vpop.f32.mrb[0].mxu0
        %v2271 = vadd.f32 0.0, %v2270
        %2272 = vmatprep.mubr.bf16.mxu0 0
        %2273 = vmatmul.mubr.bf16.gmra.mrb[0].mxu0 %v2176
        %v2274 = vpop.f32.mrb[0].mxu0
        %v2275 = vadd.f32 0.0, %v2274
        %v2276 = vpop.f32.mrb[0].mxu0
        %v2277 = vadd.f32 0.0, %v2276
        %v2278 = vpop.f32.mrb[0].mxu0
        %v2279 = vadd.f32 0.0, %v2278
        %v2280 = vpop.f32.mrb[0].mxu0
        %v2281 = vadd.f32 0.0, %v2280
        %2282 = vmatprep.mubr.bf16.mxu0 0
        %2283 = vmatmul.mubr.bf16.gmra.mrb[0].mxu0 %v2179
        %v2284 = vpop.f32.mrb[0].mxu0
        %v2285 = vadd.f32 0.0, %v2284
        %v2286 = vpop.f32.mrb[0].mxu0
        %v2287 = vadd.f32 0.0, %v2286
        %v2288 = vpop.f32.mrb[0].mxu0
        %v2289 = vadd.f32 0.0, %v2288
        %v2290 = vpop.f32.mrb[0].mxu0
        %v2291 = vadd.f32 0.0, %v2290
        %2292 = vmatprep.mubr.bf16.mxu0 0
        %2293 = vmatmul.mubr.bf16.gmra.mrb[0].mxu0 %v2182
        %v2294 = vpop.f32.mrb[0].mxu0
        %v2295 = vadd.f32 0.0, %v2294
        %v2296 = vpop.f32.mrb[0].mxu0
        %v2297 = vadd.f32 0.0, %v2296
        %v2298 = vpop.f32.mrb[0].mxu0
        %v2299 = vadd.f32 0.0, %v2298
        %v2300 = vpop.f32.mrb[0].mxu0
        %v2301 = vadd.f32 0.0, %v2300
        %2302 = vdwg.mxu0
        %v2303 = vadd.f32 %v2098, %v2225
        %v2304 = vadd.f32 %v2099, %v2227
        %v2305 = vadd.f32 %v2100, %v2229
        %v2306 = vadd.f32 %v2101, %v2231
        %v2307 = vadd.f32 %v2102, %v2235
        %v2308 = vadd.f32 %v2103, %v2237
        %v2309 = vadd.f32 %v2104, %v2239
        %v2310 = vadd.f32 %v2105, %v2241
        %v2311 = vadd.f32 %v2106, %v2245
        %v2312 = vadd.f32 %v2107, %v2247
        %v2313 = vadd.f32 %v2108, %v2249
        %v2314 = vadd.f32 %v2109, %v2251
        %v2315 = vadd.f32 %v2110, %v2255
        %v2316 = vadd.f32 %v2111, %v2257
        %v2317 = vadd.f32 %v2112, %v2259
        %v2318 = vadd.f32 %v2113, %v2261
        %v2319 = vadd.f32 %v2114, %v2265
        %v2320 = vadd.f32 %v2115, %v2267
        %v2321 = vadd.f32 %v2116, %v2269
        %v2322 = vadd.f32 %v2117, %v2271
        %v2323 = vadd.f32 %v2118, %v2275
        %v2324 = vadd.f32 %v2119, %v2277
        %v2325 = vadd.f32 %v2120, %v2279
        %v2326 = vadd.f32 %v2121, %v2281
        %v2327 = vadd.f32 %v2122, %v2285
        %v2328 = vadd.f32 %v2123, %v2287
        %v2329 = vadd.f32 %v2124, %v2289
        %v2330 = vadd.f32 %v2125, %v2291
        %v2331 = vadd.f32 %v2126, %v2295
        %v2332 = vadd.f32 %v2127, %v2297
        %v2333 = vadd.f32 %v2128, %v2299
        %v2334 = vadd.f32 %v2129, %v2301
        %2335 = vst [vmem:[%s316] sm:$0xff] %v2303
        %2336 = vst [vmem:[%s316 + $0x8] sm:$0xff] %v2304
        %2337 = vst [vmem:[%s316 + $0x10] sm:$0xff] %v2305
        %2338 = vst [vmem:[%s316 + $0x18] sm:$0xff] %v2306
        %2339 = vst [vmem:[%s316 + $0x20] sm:$0xff] %v2307
        %2340 = vst [vmem:[%s316 + $0x28] sm:$0xff] %v2308
        %2341 = vst [vmem:[%s316 + $0x30] sm:$0xff] %v2309
        %2342 = vst [vmem:[%s316 + $0x38] sm:$0xff] %v2310
        %2343 = vst [vmem:[%s316 + $0x40] sm:$0xff] %v2311
        %2344 = vst [vmem:[%s316 + $0x48] sm:$0xff] %v2312
        %2345 = vst [vmem:[%s316 + $0x50] sm:$0xff] %v2313
        %2346 = vst [vmem:[%s316 + $0x58] sm:$0xff] %v2314
        %2347 = vst [vmem:[%s316 + $0x60] sm:$0xff] %v2315
        %2348 = vst [vmem:[%s316 + $0x68] sm:$0xff] %v2316
        %2349 = vst [vmem:[%s316 + $0x70] sm:$0xff] %v2317
        %2350 = vst [vmem:[%s316 + $0x78] sm:$0xff] %v2318
        %2351 = vst [vmem:[%s316 + $0x80] sm:$0xff] %v2319
        %2352 = vst [vmem:[%s316 + $0x88] sm:$0xff] %v2320
        %2353 = vst [vmem:[%s316 + $0x90] sm:$0xff] %v2321
        %2354 = vst [vmem:[%s316 + $0x98] sm:$0xff] %v2322
        %2355 = vst [vmem:[%s316 + $0xa0] sm:$0xff] %v2323
        %2356 = vst [vmem:[%s316 + $0xa8] sm:$0xff] %v2324
        %2357 = vst [vmem:[%s316 + $0xb0] sm:$0xff] %v2325
        %2358 = vst [vmem:[%s316 + $0xb8] sm:$0xff] %v2326
        %2359 = vst [vmem:[%s316 + $0xc0] sm:$0xff] %v2327
        %2360 = vst [vmem:[%s316 + $0xc8] sm:$0xff] %v2328
        %2361 = vst [vmem:[%s316 + $0xd0] sm:$0xff] %v2329
        %2362 = vst [vmem:[%s316 + $0xd8] sm:$0xff] %v2330
        %2363 = vst [vmem:[%s316 + $0xe0] sm:$0xff] %v2331
        %2364 = vst [vmem:[%s316 + $0xe8] sm:$0xff] %v2332
        %2365 = vst [vmem:[%s316 + $0xf0] sm:$0xff] %v2333
        %2366 = vst [vmem:[%s316 + $0xf8] sm:$0xff] %v2334
        %v2367 = vld [vmem:[%s316] sm:$0xff]
        %v2368 = vld [vmem:[%s316 + $0x8] sm:$0xff]
        %v2369 = vld [vmem:[%s316 + $0x10] sm:$0xff]
        %v2370 = vld [vmem:[%s316 + $0x18] sm:$0xff]
        %v2371 = vld [vmem:[%s316 + $0x20] sm:$0xff]
        %v2372 = vld [vmem:[%s316 + $0x28] sm:$0xff]
        %v2373 = vld [vmem:[%s316 + $0x30] sm:$0xff]
        %v2374 = vld [vmem:[%s316 + $0x38] sm:$0xff]
        %v2375 = vld [vmem:[%s316 + $0x40] sm:$0xff]
        %v2376 = vld [vmem:[%s316 + $0x48] sm:$0xff]
        %v2377 = vld [vmem:[%s316 + $0x50] sm:$0xff]
        %v2378 = vld [vmem:[%s316 + $0x58] sm:$0xff]
        %v2379 = vld [vmem:[%s316 + $0x60] sm:$0xff]
        %v2380 = vld [vmem:[%s316 + $0x68] sm:$0xff]
        %v2381 = vld [vmem:[%s316 + $0x70] sm:$0xff]
        %v2382 = vld [vmem:[%s316 + $0x78] sm:$0xff]
        %v2383 = vld [vmem:[%s316 + $0x80] sm:$0xff]
        %v2384 = vld [vmem:[%s316 + $0x88] sm:$0xff]
        %v2385 = vld [vmem:[%s316 + $0x90] sm:$0xff]
        %v2386 = vld [vmem:[%s316 + $0x98] sm:$0xff]
        %v2387 = vld [vmem:[%s316 + $0xa0] sm:$0xff]
        %v2388 = vld [vmem:[%s316 + $0xa8] sm:$0xff]
        %v2389 = vld [vmem:[%s316 + $0xb0] sm:$0xff]
        %v2390 = vld [vmem:[%s316 + $0xb8] sm:$0xff]
        %v2391 = vld [vmem:[%s316 + $0xc0] sm:$0xff]
        %v2392 = vld [vmem:[%s316 + $0xc8] sm:$0xff]
        %v2393 = vld [vmem:[%s316 + $0xd0] sm:$0xff]
        %v2394 = vld [vmem:[%s316 + $0xd8] sm:$0xff]
        %v2395 = vld [vmem:[%s316 + $0xe0] sm:$0xff]
        %v2396 = vld [vmem:[%s316 + $0xe8] sm:$0xff]
        %v2397 = vld [vmem:[%s316 + $0xf0] sm:$0xff]
        %v2398 = vld [vmem:[%s316 + $0xf8] sm:$0xff]
        %v2399 = vld [vmem:[#allocation4] sm:$0xff]
        %v2400 = vld [vmem:[#allocation4 + $0x8] sm:$0xff]
        %v2401 = vld [vmem:[#allocation4 + $0x10] sm:$0xff]
        %v2402 = vld [vmem:[#allocation4 + $0x18] sm:$0xff]
        %v2403 = vld [vmem:[#allocation4 + $0x20] sm:$0xff]
        %v2404 = vld [vmem:[#allocation4 + $0x28] sm:$0xff]
        %v2405 = vld [vmem:[#allocation4 + $0x30] sm:$0xff]
        %v2406 = vld [vmem:[#allocation4 + $0x38] sm:$0xff]
        %v2407 = vld [vmem:[#allocation4 + $0x40] sm:$0xff]
        %v2408 = vld [vmem:[#allocation4 + $0x48] sm:$0xff]
        %v2409 = vld [vmem:[#allocation4 + $0x50] sm:$0xff]
        %v2410 = vld [vmem:[#allocation4 + $0x58] sm:$0xff]
        %v2411 = vld [vmem:[#allocation4 + $0x60] sm:$0xff]
        %v2412 = vld [vmem:[#allocation4 + $0x68] sm:$0xff]
        %v2413 = vld [vmem:[#allocation4 + $0x70] sm:$0xff]
        %v2414 = vld [vmem:[#allocation4 + $0x78] sm:$0xff]
        %v2415 = vpack.c.bf16 %v2400, %v2399
        %v2416 = vpack.c.bf16 %v2402, %v2401
        %v2417 = vpack.c.bf16 %v2404, %v2403
        %v2418 = vpack.c.bf16 %v2406, %v2405
        %v2419 = vpack.c.bf16 %v2408, %v2407
        %v2420 = vpack.c.bf16 %v2410, %v2409
        %v2421 = vpack.c.bf16 %v2412, %v2411
        %v2422 = vpack.c.bf16 %v2414, %v2413
        %v2423 = vld [vmem:[%s2 + $0x10] sm:$0xff]
        %v2424 = vld [vmem:[%s2 + $0x18] sm:$0xff]
        %v2427 = vunpack.c.l.b16 %v2423
        %v2428 = vunpack.c.h.b16 %v2423
        %v2429 = vunpack.c.l.b16 %v2424
        %v2430 = vunpack.c.h.b16 %v2424
        %v2431 = vpack.c.b16 %v2429, %v2427
        %v2432 = vpack.c.b16 %v2430, %v2428
        %v2436 = vsel %vm467, %v2415, 0
        %v2439 = vsel %vm467, %v2416, 0
        %v2442 = vsel %vm467, %v2417, 0
        %v2445 = vsel %vm467, %v2418, 0
        %v2448 = vsel %vm467, %v2419, 0
        %v2451 = vsel %vm467, %v2420, 0
        %v2454 = vsel %vm467, %v2421, 0
        %v2457 = vsel %vm467, %v2422, 0
        %2459 = vmatprep.subr.bf16.mxu0 %v2432
        %2460 = vmatpush1.bf16.msra.mxu0 %v2431
        %2461 = vmatprep.subr.bf16.mxu0 0
        %2462 = vmatpush1.bf16.msra.mxu0 0
        %2463 = vmatprep.subr.bf16.mxu0 0
        %2464 = vmatpush1.bf16.msra.mxu0 0
        %2465 = vmatprep.subr.bf16.mxu0 0
        %2466 = vmatpush1.bf16.msra.mxu0 0
        %2467 = vmatprep.subr.bf16.mxu0 0
        %2468 = vmatpush1.bf16.msra.mxu0 0
        %2469 = vmatprep.subr.bf16.mxu0 0
        %2470 = vmatpush1.bf16.msra.mxu0 0
        %2471 = vmatprep.subr.bf16.mxu0 0
        %2472 = vmatpush1.bf16.msra.mxu0 0
        %2473 = vmatprep.subr.bf16.mxu0 0
        %2474 = vmatpush1.bf16.msra.mxu0 0
        %2475 = vmatprep.subr.bf16.mxu0 0
        %2476 = vmatpush1.bf16.msra.mxu0 0
        %2477 = vmatprep.subr.bf16.mxu0 0
        %2478 = vmatpush1.bf16.msra.mxu0 0
        %2479 = vmatprep.subr.bf16.mxu0 0
        %2480 = vmatpush1.bf16.msra.mxu0 0
        %2481 = vmatprep.subr.bf16.mxu0 0
        %2482 = vmatpush1.bf16.msra.mxu0 0
        %2483 = vmatprep.subr.bf16.mxu0 0
        %2484 = vmatpush1.bf16.msra.mxu0 0
        %2485 = vmatprep.subr.bf16.mxu0 0
        %2486 = vmatpush1.bf16.msra.mxu0 0
        %2487 = vmatprep.subr.bf16.mxu0 0
        %2488 = vmatpush1.bf16.msra.mxu0 0
        %2489 = vmatprep.subr.bf16.mxu0 0
        %2490 = vmatpush1.bf16.msra.mxu0 0
        %2491 = vmatprep.mubr.bf16.mxu0 0
        %2492 = vmatmul.mubr.bf16.gmra.mrb[0].mxu0 %v2436
        %v2493 = vpop.f32.mrb[0].mxu0
        %v2494 = vadd.f32 0.0, %v2493
        %v2495 = vpop.f32.mrb[0].mxu0
        %v2496 = vadd.f32 0.0, %v2495
        %v2497 = vpop.f32.mrb[0].mxu0
        %v2498 = vadd.f32 0.0, %v2497
        %v2499 = vpop.f32.mrb[0].mxu0
        %v2500 = vadd.f32 0.0, %v2499
        %2501 = vmatprep.mubr.bf16.mxu0 0
        %2502 = vmatmul.mubr.bf16.gmra.mrb[0].mxu0 %v2439
        %v2503 = vpop.f32.mrb[0].mxu0
        %v2504 = vadd.f32 0.0, %v2503
        %v2505 = vpop.f32.mrb[0].mxu0
        %v2506 = vadd.f32 0.0, %v2505
        %v2507 = vpop.f32.mrb[0].mxu0
        %v2508 = vadd.f32 0.0, %v2507
        %v2509 = vpop.f32.mrb[0].mxu0
        %v2510 = vadd.f32 0.0, %v2509
        %2511 = vmatprep.mubr.bf16.mxu0 0
        %2512 = vmatmul.mubr.bf16.gmra.mrb[0].mxu0 %v2442
        %v2513 = vpop.f32.mrb[0].mxu0
        %v2514 = vadd.f32 0.0, %v2513
        %v2515 = vpop.f32.mrb[0].mxu0
        %v2516 = vadd.f32 0.0, %v2515
        %v2517 = vpop.f32.mrb[0].mxu0
        %v2518 = vadd.f32 0.0, %v2517
        %v2519 = vpop.f32.mrb[0].mxu0
        %v2520 = vadd.f32 0.0, %v2519
        %2521 = vmatprep.mubr.bf16.mxu0 0
        %2522 = vmatmul.mubr.bf16.gmra.mrb[0].mxu0 %v2445
        %v2523 = vpop.f32.mrb[0].mxu0
        %v2524 = vadd.f32 0.0, %v2523
        %v2525 = vpop.f32.mrb[0].mxu0
        %v2526 = vadd.f32 0.0, %v2525
        %v2527 = vpop.f32.mrb[0].mxu0
        %v2528 = vadd.f32 0.0, %v2527
        %v2529 = vpop.f32.mrb[0].mxu0
        %v2530 = vadd.f32 0.0, %v2529
        %2531 = vmatprep.mubr.bf16.mxu0 0
        %2532 = vmatmul.mubr.bf16.gmra.mrb[0].mxu0 %v2448
        %v2533 = vpop.f32.mrb[0].mxu0
        %v2534 = vadd.f32 0.0, %v2533
        %v2535 = vpop.f32.mrb[0].mxu0
        %v2536 = vadd.f32 0.0, %v2535
        %v2537 = vpop.f32.mrb[0].mxu0
        %v2538 = vadd.f32 0.0, %v2537
        %v2539 = vpop.f32.mrb[0].mxu0
        %v2540 = vadd.f32 0.0, %v2539
        %2541 = vmatprep.mubr.bf16.mxu0 0
        %2542 = vmatmul.mubr.bf16.gmra.mrb[0].mxu0 %v2451
        %v2543 = vpop.f32.mrb[0].mxu0
        %v2544 = vadd.f32 0.0, %v2543
        %v2545 = vpop.f32.mrb[0].mxu0
        %v2546 = vadd.f32 0.0, %v2545
        %v2547 = vpop.f32.mrb[0].mxu0
        %v2548 = vadd.f32 0.0, %v2547
        %v2549 = vpop.f32.mrb[0].mxu0
        %v2550 = vadd.f32 0.0, %v2549
        %2551 = vmatprep.mubr.bf16.mxu0 0
        %2552 = vmatmul.mubr.bf16.gmra.mrb[0].mxu0 %v2454
        %v2553 = vpop.f32.mrb[0].mxu0
        %v2554 = vadd.f32 0.0, %v2553
        %v2555 = vpop.f32.mrb[0].mxu0
        %v2556 = vadd.f32 0.0, %v2555
        %v2557 = vpop.f32.mrb[0].mxu0
        %v2558 = vadd.f32 0.0, %v2557
        %v2559 = vpop.f32.mrb[0].mxu0
        %v2560 = vadd.f32 0.0, %v2559
        %2561 = vmatprep.mubr.bf16.mxu0 0
        %2562 = vmatmul.mubr.bf16.gmra.mrb[0].mxu0 %v2457
        %v2563 = vpop.f32.mrb[0].mxu0
        %v2564 = vadd.f32 0.0, %v2563
        %v2565 = vpop.f32.mrb[0].mxu0
        %v2566 = vadd.f32 0.0, %v2565
        %v2567 = vpop.f32.mrb[0].mxu0
        %v2568 = vadd.f32 0.0, %v2567
        %v2569 = vpop.f32.mrb[0].mxu0
        %v2570 = vadd.f32 0.0, %v2569
        %2571 = vdwg.mxu0
        %v2572 = vadd.f32 %v2367, %v2494
        %v2573 = vadd.f32 %v2368, %v2496
        %v2574 = vadd.f32 %v2369, %v2498
        %v2575 = vadd.f32 %v2370, %v2500
        %v2576 = vadd.f32 %v2371, %v2504
        %v2577 = vadd.f32 %v2372, %v2506
        %v2578 = vadd.f32 %v2373, %v2508
        %v2579 = vadd.f32 %v2374, %v2510
        %v2580 = vadd.f32 %v2375, %v2514
        %v2581 = vadd.f32 %v2376, %v2516
        %v2582 = vadd.f32 %v2377, %v2518
        %v2583 = vadd.f32 %v2378, %v2520
        %v2584 = vadd.f32 %v2379, %v2524
        %v2585 = vadd.f32 %v2380, %v2526
        %v2586 = vadd.f32 %v2381, %v2528
        %v2587 = vadd.f32 %v2382, %v2530
        %v2588 = vadd.f32 %v2383, %v2534
        %v2589 = vadd.f32 %v2384, %v2536
        %v2590 = vadd.f32 %v2385, %v2538
        %v2591 = vadd.f32 %v2386, %v2540
        %v2592 = vadd.f32 %v2387, %v2544
        %v2593 = vadd.f32 %v2388, %v2546
        %v2594 = vadd.f32 %v2389, %v2548
        %v2595 = vadd.f32 %v2390, %v2550
        %v2596 = vadd.f32 %v2391, %v2554
        %v2597 = vadd.f32 %v2392, %v2556
        %v2598 = vadd.f32 %v2393, %v2558
        %v2599 = vadd.f32 %v2394, %v2560
        %v2600 = vadd.f32 %v2395, %v2564
        %v2601 = vadd.f32 %v2396, %v2566
        %v2602 = vadd.f32 %v2397, %v2568
        %v2603 = vadd.f32 %v2398, %v2570
        %2604 = vst [vmem:[%s316] sm:$0xff] %v2572
        %2605 = vst [vmem:[%s316 + $0x8] sm:$0xff] %v2573
        %2606 = vst [vmem:[%s316 + $0x10] sm:$0xff] %v2574
        %2607 = vst [vmem:[%s316 + $0x18] sm:$0xff] %v2575
        %2608 = vst [vmem:[%s316 + $0x20] sm:$0xff] %v2576
        %2609 = vst [vmem:[%s316 + $0x28] sm:$0xff] %v2577
        %2610 = vst [vmem:[%s316 + $0x30] sm:$0xff] %v2578
        %2611 = vst [vmem:[%s316 + $0x38] sm:$0xff] %v2579
        %2612 = vst [vmem:[%s316 + $0x40] sm:$0xff] %v2580
        %2613 = vst [vmem:[%s316 + $0x48] sm:$0xff] %v2581
        %2614 = vst [vmem:[%s316 + $0x50] sm:$0xff] %v2582
        %2615 = vst [vmem:[%s316 + $0x58] sm:$0xff] %v2583
        %2616 = vst [vmem:[%s316 + $0x60] sm:$0xff] %v2584
        %2617 = vst [vmem:[%s316 + $0x68] sm:$0xff] %v2585
        %2618 = vst [vmem:[%s316 + $0x70] sm:$0xff] %v2586
        %2619 = vst [vmem:[%s316 + $0x78] sm:$0xff] %v2587
        %2620 = vst [vmem:[%s316 + $0x80] sm:$0xff] %v2588
        %2621 = vst [vmem:[%s316 + $0x88] sm:$0xff] %v2589
        %2622 = vst [vmem:[%s316 + $0x90] sm:$0xff] %v2590
        %2623 = vst [vmem:[%s316 + $0x98] sm:$0xff] %v2591
        %2624 = vst [vmem:[%s316 + $0xa0] sm:$0xff] %v2592
        %2625 = vst [vmem:[%s316 + $0xa8] sm:$0xff] %v2593
        %2626 = vst [vmem:[%s316 + $0xb0] sm:$0xff] %v2594
        %2627 = vst [vmem:[%s316 + $0xb8] sm:$0xff] %v2595
        %2628 = vst [vmem:[%s316 + $0xc0] sm:$0xff] %v2596
        %2629 = vst [vmem:[%s316 + $0xc8] sm:$0xff] %v2597
        %2630 = vst [vmem:[%s316 + $0xd0] sm:$0xff] %v2598
        %2631 = vst [vmem:[%s316 + $0xd8] sm:$0xff] %v2599
        %2632 = vst [vmem:[%s316 + $0xe0] sm:$0xff] %v2600
        %2633 = vst [vmem:[%s316 + $0xe8] sm:$0xff] %v2601
        %2634 = vst [vmem:[%s316 + $0xf0] sm:$0xff] %v2602
        %2635 = vst [vmem:[%s316 + $0xf8] sm:$0xff] %v2603
        %v2636 = vld [vmem:[%s316] sm:$0xff]
        %v2637 = vld [vmem:[%s316 + $0x8] sm:$0xff]
        %v2638 = vld [vmem:[%s316 + $0x10] sm:$0xff]
        %v2639 = vld [vmem:[%s316 + $0x18] sm:$0xff]
        %v2640 = vld [vmem:[%s316 + $0x20] sm:$0xff]
        %v2641 = vld [vmem:[%s316 + $0x28] sm:$0xff]
        %v2642 = vld [vmem:[%s316 + $0x30] sm:$0xff]
        %v2643 = vld [vmem:[%s316 + $0x38] sm:$0xff]
        %v2644 = vld [vmem:[%s316 + $0x40] sm:$0xff]
        %v2645 = vld [vmem:[%s316 + $0x48] sm:$0xff]
        %v2646 = vld [vmem:[%s316 + $0x50] sm:$0xff]
        %v2647 = vld [vmem:[%s316 + $0x58] sm:$0xff]
        %v2648 = vld [vmem:[%s316 + $0x60] sm:$0xff]
        %v2649 = vld [vmem:[%s316 + $0x68] sm:$0xff]
        %v2650 = vld [vmem:[%s316 + $0x70] sm:$0xff]
        %v2651 = vld [vmem:[%s316 + $0x78] sm:$0xff]
        %v2652 = vld [vmem:[%s316 + $0x80] sm:$0xff]
        %v2653 = vld [vmem:[%s316 + $0x88] sm:$0xff]
        %v2654 = vld [vmem:[%s316 + $0x90] sm:$0xff]
        %v2655 = vld [vmem:[%s316 + $0x98] sm:$0xff]
        %v2656 = vld [vmem:[%s316 + $0xa0] sm:$0xff]
        %v2657 = vld [vmem:[%s316 + $0xa8] sm:$0xff]
        %v2658 = vld [vmem:[%s316 + $0xb0] sm:$0xff]
        %v2659 = vld [vmem:[%s316 + $0xb8] sm:$0xff]
        %v2660 = vld [vmem:[%s316 + $0xc0] sm:$0xff]
        %v2661 = vld [vmem:[%s316 + $0xc8] sm:$0xff]
        %v2662 = vld [vmem:[%s316 + $0xd0] sm:$0xff]
        %v2663 = vld [vmem:[%s316 + $0xd8] sm:$0xff]
        %v2664 = vld [vmem:[%s316 + $0xe0] sm:$0xff]
        %v2665 = vld [vmem:[%s316 + $0xe8] sm:$0xff]
        %v2666 = vld [vmem:[%s316 + $0xf0] sm:$0xff]
        %v2667 = vld [vmem:[%s316 + $0xf8] sm:$0xff]
        %v2668 = vld [vmem:[#allocation5] sm:$0xff]
        %v2669 = vld [vmem:[#allocation5 + $0x8] sm:$0xff]
        %v2670 = vld [vmem:[#allocation5 + $0x10] sm:$0xff]
        %v2671 = vld [vmem:[#allocation5 + $0x18] sm:$0xff]
        %v2672 = vld [vmem:[#allocation5 + $0x20] sm:$0xff]
        %v2673 = vld [vmem:[#allocation5 + $0x28] sm:$0xff]
        %v2674 = vld [vmem:[#allocation5 + $0x30] sm:$0xff]
        %v2675 = vld [vmem:[#allocation5 + $0x38] sm:$0xff]
        %v2676 = vld [vmem:[#allocation5 + $0x40] sm:$0xff]
        %v2677 = vld [vmem:[#allocation5 + $0x48] sm:$0xff]
        %v2678 = vld [vmem:[#allocation5 + $0x50] sm:$0xff]
        %v2679 = vld [vmem:[#allocation5 + $0x58] sm:$0xff]
        %v2680 = vld [vmem:[#allocation5 + $0x60] sm:$0xff]
        %v2681 = vld [vmem:[#allocation5 + $0x68] sm:$0xff]
        %v2682 = vld [vmem:[#allocation5 + $0x70] sm:$0xff]
        %v2683 = vld [vmem:[#allocation5 + $0x78] sm:$0xff]
        %v2684 = vpack.c.bf16 %v2669, %v2668
        %v2685 = vpack.c.bf16 %v2671, %v2670
        %v2686 = vpack.c.bf16 %v2673, %v2672
        %v2687 = vpack.c.bf16 %v2675, %v2674
        %v2688 = vpack.c.bf16 %v2677, %v2676
        %v2689 = vpack.c.bf16 %v2679, %v2678
        %v2690 = vpack.c.bf16 %v2681, %v2680
        %v2691 = vpack.c.bf16 %v2683, %v2682
        %v2692 = vld [vmem:[%s2 + $0x20] sm:$0xff]
        %v2693 = vld [vmem:[%s2 + $0x28] sm:$0xff]
        %v2694 = vld [vmem:[%s2 + $0x30] sm:$0xff]
        %v2695 = vld [vmem:[%s2 + $0x38] sm:$0xff]
        %v2696 = vld [vmem:[%s2 + $0x40] sm:$0xff]
        %v2702 = vunpack.c.l.b16 %v2692
        %v2703 = vunpack.c.h.b16 %v2692
        %v2704 = vunpack.c.l.b16 %v2693
        %v2705 = vunpack.c.h.b16 %v2693
        %v2706 = vunpack.c.l.b16 %v2694
        %v2707 = vunpack.c.h.b16 %v2694
        %v2708 = vunpack.c.l.b16 %v2695
        %v2709 = vunpack.c.h.b16 %v2695
        %v2710 = vunpack.c.l.b16 %v2696
        %v2711 = vunpack.c.h.b16 %v2696
        %v2712 = vpack.c.b16 %v2704, %v2702
        %v2713 = vpack.c.b16 %v2705, %v2703
        %v2714 = vpack.c.b16 %v2708, %v2706
        %v2715 = vpack.c.b16 %v2709, %v2707
        %v2716 = vpack.c.b16 %v2710, %v2710
        %v2717 = vpack.c.b16 %v2711, %v2711
        %v2723 = vsel %vm1808, %v2684, 0
        %v2726 = vsel %vm1808, %v2685, 0
        %v2729 = vsel %vm1808, %v2686, 0
        %v2732 = vsel %vm1808, %v2687, 0
        %v2735 = vsel %vm1808, %v2688, 0
        %v2738 = vsel %vm1808, %v2689, 0
        %v2741 = vsel %vm1808, %v2690, 0
        %v2744 = vsel %vm1808, %v2691, 0
        %v2747 = vsel %vm1914, %v2716, 0
        %v2750 = vsel %vm1914, %v2717, 0
        %2752 = vmatprep.subr.bf16.mxu0 %v2713
        %2753 = vmatpush1.bf16.msra.mxu0 %v2712
        %2754 = vmatprep.subr.bf16.mxu0 %v2715
        %2755 = vmatpush1.bf16.msra.mxu0 %v2714
        %2756 = vmatprep.subr.bf16.mxu0 %v2750
        %2757 = vmatpush1.bf16.msra.mxu0 %v2747
        %2758 = vmatprep.subr.bf16.mxu0 0
        %2759 = vmatpush1.bf16.msra.mxu0 0
        %2760 = vmatprep.subr.bf16.mxu0 0
        %2761 = vmatpush1.bf16.msra.mxu0 0
        %2762 = vmatprep.subr.bf16.mxu0 0
        %2763 = vmatpush1.bf16.msra.mxu0 0
        %2764 = vmatprep.subr.bf16.mxu0 0
        %2765 = vmatpush1.bf16.msra.mxu0 0
        %2766 = vmatprep.subr.bf16.mxu0 0
        %2767 = vmatpush1.bf16.msra.mxu0 0
        %2768 = vmatprep.subr.bf16.mxu0 0
        %2769 = vmatpush1.bf16.msra.mxu0 0
        %2770 = vmatprep.subr.bf16.mxu0 0
        %2771 = vmatpush1.bf16.msra.mxu0 0
        %2772 = vmatprep.subr.bf16.mxu0 0
        %2773 = vmatpush1.bf16.msra.mxu0 0
        %2774 = vmatprep.subr.bf16.mxu0 0
        %2775 = vmatpush1.bf16.msra.mxu0 0
        %2776 = vmatprep.subr.bf16.mxu0 0
        %2777 = vmatpush1.bf16.msra.mxu0 0
        %2778 = vmatprep.subr.bf16.mxu0 0
        %2779 = vmatpush1.bf16.msra.mxu0 0
        %2780 = vmatprep.subr.bf16.mxu0 0
        %2781 = vmatpush1.bf16.msra.mxu0 0
        %2782 = vmatprep.subr.bf16.mxu0 0
        %2783 = vmatpush1.bf16.msra.mxu0 0
        %2784 = vmatprep.mubr.bf16.mxu0 0
        %2785 = vmatmul.mubr.bf16.gmra.mrb[0].mxu0 %v2723
        %v2786 = vpop.f32.mrb[0].mxu0
        %v2787 = vadd.f32 0.0, %v2786
        %v2788 = vpop.f32.mrb[0].mxu0
        %v2789 = vadd.f32 0.0, %v2788
        %v2790 = vpop.f32.mrb[0].mxu0
        %v2791 = vadd.f32 0.0, %v2790
        %v2792 = vpop.f32.mrb[0].mxu0
        %v2793 = vadd.f32 0.0, %v2792
        %2794 = vmatprep.mubr.bf16.mxu0 0
        %2795 = vmatmul.mubr.bf16.gmra.mrb[0].mxu0 %v2726
        %v2796 = vpop.f32.mrb[0].mxu0
        %v2797 = vadd.f32 0.0, %v2796
        %v2798 = vpop.f32.mrb[0].mxu0
        %v2799 = vadd.f32 0.0, %v2798
        %v2800 = vpop.f32.mrb[0].mxu0
        %v2801 = vadd.f32 0.0, %v2800
        %v2802 = vpop.f32.mrb[0].mxu0
        %v2803 = vadd.f32 0.0, %v2802
        %2804 = vmatprep.mubr.bf16.mxu0 0
        %2805 = vmatmul.mubr.bf16.gmra.mrb[0].mxu0 %v2729
        %v2806 = vpop.f32.mrb[0].mxu0
        %v2807 = vadd.f32 0.0, %v2806
        %v2808 = vpop.f32.mrb[0].mxu0
        %v2809 = vadd.f32 0.0, %v2808
        %v2810 = vpop.f32.mrb[0].mxu0
        %v2811 = vadd.f32 0.0, %v2810
        %v2812 = vpop.f32.mrb[0].mxu0
        %v2813 = vadd.f32 0.0, %v2812
        %2814 = vmatprep.mubr.bf16.mxu0 0
        %2815 = vmatmul.mubr.bf16.gmra.mrb[0].mxu0 %v2732
        %v2816 = vpop.f32.mrb[0].mxu0
        %v2817 = vadd.f32 0.0, %v2816
        %v2818 = vpop.f32.mrb[0].mxu0
        %v2819 = vadd.f32 0.0, %v2818
        %v2820 = vpop.f32.mrb[0].mxu0
        %v2821 = vadd.f32 0.0, %v2820
        %v2822 = vpop.f32.mrb[0].mxu0
        %v2823 = vadd.f32 0.0, %v2822
        %2824 = vmatprep.mubr.bf16.mxu0 0
        %2825 = vmatmul.mubr.bf16.gmra.mrb[0].mxu0 %v2735
        %v2826 = vpop.f32.mrb[0].mxu0
        %v2827 = vadd.f32 0.0, %v2826
        %v2828 = vpop.f32.mrb[0].mxu0
        %v2829 = vadd.f32 0.0, %v2828
        %v2830 = vpop.f32.mrb[0].mxu0
        %v2831 = vadd.f32 0.0, %v2830
        %v2832 = vpop.f32.mrb[0].mxu0
        %v2833 = vadd.f32 0.0, %v2832
        %2834 = vmatprep.mubr.bf16.mxu0 0
        %2835 = vmatmul.mubr.bf16.gmra.mrb[0].mxu0 %v2738
        %v2836 = vpop.f32.mrb[0].mxu0
        %v2837 = vadd.f32 0.0, %v2836
        %v2838 = vpop.f32.mrb[0].mxu0
        %v2839 = vadd.f32 0.0, %v2838
        %v2840 = vpop.f32.mrb[0].mxu0
        %v2841 = vadd.f32 0.0, %v2840
        %v2842 = vpop.f32.mrb[0].mxu0
        %v2843 = vadd.f32 0.0, %v2842
        %2844 = vmatprep.mubr.bf16.mxu0 0
        %2845 = vmatmul.mubr.bf16.gmra.mrb[0].mxu0 %v2741
        %v2846 = vpop.f32.mrb[0].mxu0
        %v2847 = vadd.f32 0.0, %v2846
        %v2848 = vpop.f32.mrb[0].mxu0
        %v2849 = vadd.f32 0.0, %v2848
        %v2850 = vpop.f32.mrb[0].mxu0
        %v2851 = vadd.f32 0.0, %v2850
        %v2852 = vpop.f32.mrb[0].mxu0
        %v2853 = vadd.f32 0.0, %v2852
        %2854 = vmatprep.mubr.bf16.mxu0 0
        %2855 = vmatmul.mubr.bf16.gmra.mrb[0].mxu0 %v2744
        %v2856 = vpop.f32.mrb[0].mxu0
        %v2857 = vadd.f32 0.0, %v2856
        %v2858 = vpop.f32.mrb[0].mxu0
        %v2859 = vadd.f32 0.0, %v2858
        %v2860 = vpop.f32.mrb[0].mxu0
        %v2861 = vadd.f32 0.0, %v2860
        %v2862 = vpop.f32.mrb[0].mxu0
        %v2863 = vadd.f32 0.0, %v2862
        %2864 = vdwg.mxu0
        %v2865 = vadd.f32 %v2636, %v2787
        %v2866 = vadd.f32 %v2637, %v2789
        %v2867 = vadd.f32 %v2638, %v2791
        %v2868 = vadd.f32 %v2639, %v2793
        %v2869 = vadd.f32 %v2640, %v2797
        %v2870 = vadd.f32 %v2641, %v2799
        %v2871 = vadd.f32 %v2642, %v2801
        %v2872 = vadd.f32 %v2643, %v2803
        %v2873 = vadd.f32 %v2644, %v2807
        %v2874 = vadd.f32 %v2645, %v2809
        %v2875 = vadd.f32 %v2646, %v2811
        %v2876 = vadd.f32 %v2647, %v2813
        %v2877 = vadd.f32 %v2648, %v2817
        %v2878 = vadd.f32 %v2649, %v2819
        %v2879 = vadd.f32 %v2650, %v2821
        %v2880 = vadd.f32 %v2651, %v2823
        %v2881 = vadd.f32 %v2652, %v2827
        %v2882 = vadd.f32 %v2653, %v2829
        %v2883 = vadd.f32 %v2654, %v2831
        %v2884 = vadd.f32 %v2655, %v2833
        %v2885 = vadd.f32 %v2656, %v2837
        %v2886 = vadd.f32 %v2657, %v2839
        %v2887 = vadd.f32 %v2658, %v2841
        %v2888 = vadd.f32 %v2659, %v2843
        %v2889 = vadd.f32 %v2660, %v2847
        %v2890 = vadd.f32 %v2661, %v2849
        %v2891 = vadd.f32 %v2662, %v2851
        %v2892 = vadd.f32 %v2663, %v2853
        %v2893 = vadd.f32 %v2664, %v2857
        %v2894 = vadd.f32 %v2665, %v2859
        %v2895 = vadd.f32 %v2666, %v2861
        %v2896 = vadd.f32 %v2667, %v2863
        %2897 = vst [vmem:[%s316] sm:$0xff] %v2865
        %2898 = vst [vmem:[%s316 + $0x8] sm:$0xff] %v2866
        %2899 = vst [vmem:[%s316 + $0x10] sm:$0xff] %v2867
        %2900 = vst [vmem:[%s316 + $0x18] sm:$0xff] %v2868
        %2901 = vst [vmem:[%s316 + $0x20] sm:$0xff] %v2869
        %2902 = vst [vmem:[%s316 + $0x28] sm:$0xff] %v2870
        %2903 = vst [vmem:[%s316 + $0x30] sm:$0xff] %v2871
        %2904 = vst [vmem:[%s316 + $0x38] sm:$0xff] %v2872
        %2905 = vst [vmem:[%s316 + $0x40] sm:$0xff] %v2873
        %2906 = vst [vmem:[%s316 + $0x48] sm:$0xff] %v2874
        %2907 = vst [vmem:[%s316 + $0x50] sm:$0xff] %v2875
        %2908 = vst [vmem:[%s316 + $0x58] sm:$0xff] %v2876
        %2909 = vst [vmem:[%s316 + $0x60] sm:$0xff] %v2877
        %2910 = vst [vmem:[%s316 + $0x68] sm:$0xff] %v2878
        %2911 = vst [vmem:[%s316 + $0x70] sm:$0xff] %v2879
        %2912 = vst [vmem:[%s316 + $0x78] sm:$0xff] %v2880
        %2913 = vst [vmem:[%s316 + $0x80] sm:$0xff] %v2881
        %2914 = vst [vmem:[%s316 + $0x88] sm:$0xff] %v2882
        %2915 = vst [vmem:[%s316 + $0x90] sm:$0xff] %v2883
        %2916 = vst [vmem:[%s316 + $0x98] sm:$0xff] %v2884
        %2917 = vst [vmem:[%s316 + $0xa0] sm:$0xff] %v2885
        %2918 = vst [vmem:[%s316 + $0xa8] sm:$0xff] %v2886
        %2919 = vst [vmem:[%s316 + $0xb0] sm:$0xff] %v2887
        %2920 = vst [vmem:[%s316 + $0xb8] sm:$0xff] %v2888
        %2921 = vst [vmem:[%s316 + $0xc0] sm:$0xff] %v2889
        %2922 = vst [vmem:[%s316 + $0xc8] sm:$0xff] %v2890
        %2923 = vst [vmem:[%s316 + $0xd0] sm:$0xff] %v2891
        %2924 = vst [vmem:[%s316 + $0xd8] sm:$0xff] %v2892
        %2925 = vst [vmem:[%s316 + $0xe0] sm:$0xff] %v2893
        %2926 = vst [vmem:[%s316 + $0xe8] sm:$0xff] %v2894
        %2927 = vst [vmem:[%s316 + $0xf0] sm:$0xff] %v2895
        %2928 = vst [vmem:[%s316 + $0xf8] sm:$0xff] %v2896
      $region60: #{_psp_forward.1} parent=43 // pred_fallthru
        _
      %p2929 = scmp.lt.s32.totalorder %s21, 1
      %s2930 = scalar_select %p2929, %s21, 1
      %s2931 = smul.addr %s2930, 32
      %s2932 = smul.addr %s2931, 8
      %s2933 = scalar_lea.vmem %s6, %s2932
      // Predicated region
      $region61: #{_psp_forward.1} parent=43 // pred_check
        %p2934 = pneg %p190
      $region62: #{_psp_forward.1} parent=43 // pred_check_branch
        %2936 = sbr.rel (%p2934) target = $region64
      $region63: #{_psp_forward.1} parent=43 // pred_region
        _
      $region64: #{_psp_forward.1} parent=43 // pred_fallthru
        _
    $region44: #{_psp_forward.1} parent=5 // pred_fallthru
      _
    %p2937 = scmp.le.s32.totalorder 2, %s12
    // Predicated region
    $region65: #{_psp_forward.1} parent=5 // pred_check
      %p2938 = pneg %p2937
    $region66: #{_psp_forward.1} parent=5 // pred_check_branch
      %2940 = sbr.rel (%p2938) target = $region68
    $region67: #{_psp_forward.1} parent=5 // pred_region
      %s2941 = ssub.s32 %s12, 2
      // Predicated region
      $region69: #{_psp_forward.1} parent=67 // pred_check
        %p2942 = pneg %p196
      $region70: #{_psp_forward.1} parent=67 // pred_check_branch
        %2944 = sbr.rel (%p2942) target = $region72
      $region71: #{_psp_forward.1} parent=67 // pred_region
        %p2945 = scmp.lt.s32.totalorder %s23, 1
        %s2946 = scalar_select %p2945, %s23, 1
        %s2947 = smul.addr %s2946, 32
        %s2948 = smul.addr %s2947, 8
        %s2949 = scalar_lea.vmem %s6, %s2948
      $region72: #{_psp_forward.1} parent=67 // pred_fallthru
        _
    $region68: #{_psp_forward.1} parent=5 // pred_fallthru
      _
  $region6: #{_psp_forward.1} parent=0 // loop_footer
    %s16 = sadd.s32 1, %s12
  $region7: #{_psp_forward.1} parent=0 // loop_footer_branch
    %11 = sbr.rel target = $region3
  $region8: #{_psp_forward.1} parent=0 // loop_exit
    _

</llo_original>
